<compile_context>
chip_gen: v6e
topology: v6e:2x2x1
jax: 0.10.0
libtpu: 0.0.40
codegen_flags: <defaults>
</compile_context>

<pallas_src>
import jax
import jax.numpy as jnp
from jax.experimental import pallas as pl
from jax.experimental.pallas import tpu as pltpu

# ---- scaled-down DistilBERT config (original: H=768, 12 heads, 6 layers) ----
VOCAB = 100
VOCAB_PAD = 128          # lane/MXU-aligned vocab (padded with zero rows)
SEQ = 8
HIDDEN = 64
N_HEADS = 4
HEAD_DIM = HIDDEN // N_HEADS
FFN = 128
N_LAYERS = 2
N_CLASSES = 3
LN_EPS = 1e-12
MASK_NEG = 1e9           # additive-mask magnitude; safe in f32 scores


def _ln(x, g, b):
    mu = jnp.mean(x, axis=-1, keepdims=True)
    var = jnp.mean((x - mu) ** 2, axis=-1, keepdims=True)
    return (x - mu) * jax.lax.rsqrt(var + LN_EPS) * g + b


# ------------------------------ fused kernel --------------------------------
def fused_forward_kernel(ids_ref, mask_ref, word_emb_ref, pos_emb_ref, misc_ref,
                         pre_w_ref, cls_w_ref, wqkv_ref, wo_ref, w_up_ref,
                         w_dn_ref, lvec_ref, o_ref):
    H, S, NH, HD = HIDDEN, SEQ, N_HEADS, HEAD_DIM

    def mxu(a, w_bf16):  # activation cast to bf16 at the MXU; weights already bf16
        return jnp.dot(a.astype(jnp.bfloat16), w_bf16,
                       preferred_element_type=jnp.float32)

    # ---- embeddings: exact gather as one-hot matmul (f32 table, K=128) ----
    ids = ids_ref[0]                                             # (S, 1) int32
    iota = jax.lax.broadcasted_iota(jnp.int32, (S, VOCAB_PAD), 1)
    onehot = (iota == ids).astype(jnp.float32)                   # (S, 128)
    x = jnp.dot(onehot, word_emb_ref[...],
                preferred_element_type=jnp.float32)              # (S, H)
    x = x + pos_emb_ref[...]                                     # positional add

    misc = misc_ref[...]                                         # (4, H) f32
    x = _ln(x, misc[0:1, :], misc[1:2, :])                       # embedding LayerNorm
    # TODO(synk): embedding / residual / classifier dropouts are identity (eval mode).

    # additive attention-mask bias, hoisted: (1, S) broadcasts over (NH, S, S)
    bias = (mask_ref[0] - 1.0) * MASK_NEG

    for l in range(N_LAYERS):                                    # static unrolled layers
        lv = lvec_ref[l]                                         # (8, 3H) packed vectors, f32
        bqkv = lv[0:1, :]
        bo = lv[1:2, :H]
        ln1_g, ln1_b = lv[2:3, :H], lv[3:4, :H]
        b_up = lv[4:5, :FFN]
        b_dn = lv[5:6, :H]
        ln2_g, ln2_b = lv[6:7, :H], lv[7:8, :H]

        # fused Q|K|V projection (1/sqrt(d) folded into Wq/bq at pack time)
        qkv = mxu(x, wqkv_ref[l]) + bqkv                         # (S, 3H)

        def split(c0, _qkv=qkv):                                 # (S,H) slab -> (NH, S, HD)
            return jnp.swapaxes(_qkv[:, c0:c0 + H].reshape(S, NH, HD), 0, 1)

        q, k, v = split(0), split(H), split(2 * H)               # (NH, S, HD)

        # head-batched attention (leading batch dim = heads)
        s = jnp.einsum('bqd,bkd->bqk', q.astype(jnp.bfloat16), k.astype(jnp.bfloat16),
                       preferred_element_type=jnp.float32)       # (NH, S, S)
        s = s + bias
        s_max = jnp.max(s, axis=-1, keepdims=True)
        p = jnp.exp(s - s_max)
        p = p * pl.reciprocal(jnp.sum(p, axis=-1, keepdims=True), approx=True)
        ctx = jnp.einsum('bqk,bkd->bqd', p.astype(jnp.bfloat16), v.astype(jnp.bfloat16),
                         preferred_element_type=jnp.float32)     # (NH, S, HD)

        # single output projection: head-sum folded into the K dim of one matmul
        ctx2 = jnp.swapaxes(ctx, 0, 1).reshape(S, H)             # (S, H)
        attn = mxu(ctx2, wo_ref[l]) + bo                         # (S, H)

        h1 = _ln(x + attn, ln1_g, ln1_b)

        ff = mxu(h1, w_up_ref[l]) + b_up                         # (S, FFN)
        # TODO(synk): tanh-approx GELU used; HF DistilBERT uses exact erf GELU.
        ff = jax.nn.gelu(ff, approximate=True)
        ff = mxu(ff, w_dn_ref[l]) + b_dn
        x = _ln(h1 + ff, ln2_g, ln2_b)

    # ---- CLS pooling + classification head ----
    cls = x[0:1, :]                                              # (1, H) CLS token
    hcls = jnp.maximum(mxu(cls, pre_w_ref[...]) + misc[2:3, :], 0.0)   # pre_classifier + ReLU
    # TODO(synk): Dropout(p=0.3) is identity in eval mode (no RNG applied).
    logits = mxu(hcls, cls_w_ref[...]) + misc[3:4, :N_CLASSES]   # (1, 3)
    o_ref[...] = logits.reshape(1, 1, N_CLASSES).astype(o_ref.dtype)


# ------------------------------- parameters ---------------------------------
def init_params(key):
    kit = iter(jax.random.split(key, 64))

    def w(shape, scale=0.02):
        return (scale * jax.random.normal(next(kit), shape)).astype(jnp.float32)

    params = {
        "word_emb": w((VOCAB, HIDDEN)),
        "pos_emb": w((SEQ, HIDDEN)),
        "emb_ln_g": jnp.ones((1, HIDDEN), jnp.float32),
        "emb_ln_b": jnp.zeros((1, HIDDEN), jnp.float32),
        "pre_w": w((HIDDEN, HIDDEN)),                 # pre_classifier Linear(H,H)
        "pre_b": jnp.zeros((1, HIDDEN), jnp.float32),
        "cls_w": w((HIDDEN, N_CLASSES)),              # classifier Linear(H,3)
        "cls_b": jnp.zeros((1, N_CLASSES), jnp.float32),
        "layers": [],
    }
    for _ in range(N_LAYERS):
        params["layers"].append({
            "wq": w((HIDDEN, HIDDEN)), "bq": jnp.zeros((1, HIDDEN), jnp.float32),
            "wk": w((HIDDEN, HIDDEN)), "bk": jnp.zeros((1, HIDDEN), jnp.float32),
            "wv": w((HIDDEN, HIDDEN)), "bv": jnp.zeros((1, HIDDEN), jnp.float32),
            "wo": w((HIDDEN, HIDDEN)), "bo": jnp.zeros((1, HIDDEN), jnp.float32),
            "ln1_g": jnp.ones((1, HIDDEN), jnp.float32),
            "ln1_b": jnp.zeros((1, HIDDEN), jnp.float32),
            "w_up": w((HIDDEN, FFN)), "b_up": jnp.zeros((1, FFN), jnp.float32),
            "w_dn": w((FFN, HIDDEN)), "b_dn": jnp.zeros((1, HIDDEN), jnp.float32),
            "ln2_g": jnp.ones((1, HIDDEN), jnp.float32),
            "ln2_b": jnp.zeros((1, HIDDEN), jnp.float32),
        })
    return params


def pack_params(params):
    """Pack / stack weights for the fused kernel (static, one-time transform)."""
    scale = 1.0 / (HEAD_DIM ** 0.5)
    W3 = 3 * HIDDEN

    def pad_row(v):
        return jnp.pad(v, ((0, 0), (0, W3 - v.shape[1])))

    wqkv, wo, wup, wdn, lvec = [], [], [], [], []
    for lp in params["layers"]:
        # fold softmax scale into Wq / bq
        wqkv.append(jnp.concatenate([lp["wq"] * scale, lp["wk"], lp["wv"]], axis=1))
        wo.append(lp["wo"])
        wup.append(lp["w_up"])
        wdn.append(lp["w_dn"])
        rows = [
            jnp.concatenate([lp["bq"] * scale, lp["bk"], lp["bv"]], axis=1),  # bqkv
            pad_row(lp["bo"]), pad_row(lp["ln1_g"]), pad_row(lp["ln1_b"]),
            pad_row(lp["b_up"]), pad_row(lp["b_dn"]),
            pad_row(lp["ln2_g"]), pad_row(lp["ln2_b"]),
        ]
        lvec.append(jnp.concatenate(rows, axis=0))               # (8, 3H)

    misc = jnp.concatenate([
        params["emb_ln_g"], params["emb_ln_b"], params["pre_b"],
        jnp.pad(params["cls_b"], ((0, 0), (0, HIDDEN - N_CLASSES)))], axis=0)  # (4, H)

    word_emb_pad = jnp.pad(params["word_emb"],
                           ((0, VOCAB_PAD - VOCAB), (0, 0)))     # (128, H), zero pad rows

    return {
        "word_emb": word_emb_pad,                                # f32 (exact gather)
        "pos_emb": params["pos_emb"],                            # f32 (elementwise add)
        "misc": misc,                                            # f32
        "pre_w": params["pre_w"].astype(jnp.bfloat16),
        "cls_w": params["cls_w"].astype(jnp.bfloat16),
        "wqkv": jnp.stack(wqkv).astype(jnp.bfloat16),            # (L, H, 3H)
        "wo": jnp.stack(wo).astype(jnp.bfloat16),                # (L, H, H)
        "w_up": jnp.stack(wup).astype(jnp.bfloat16),             # (L, H, FFN)
        "w_dn": jnp.stack(wdn).astype(jnp.bfloat16),             # (L, FFN, H)
        "lvec": jnp.stack(lvec),                                 # (L, 8, 3H) f32
    }


# ------------------------------ full forward --------------------------------
def distilbert_class_forward(packed, input_ids, attention_mask):
    B, S = input_ids.shape
    ids3 = input_ids.reshape(B, S, 1).astype(jnp.int32)          # (B, S, 1)
    mask3 = attention_mask.reshape(B, 1, S).astype(jnp.float32)  # (B, 1, S)

    def bcast(shape):                                            # broadcast weight spec
        nd = len(shape)
        return pl.BlockSpec(shape, lambda i, _nd=nd: (0,) * _nd)

    args = (ids3, mask3, packed["word_emb"], packed["pos_emb"], packed["misc"],
            packed["pre_w"], packed["cls_w"], packed["wqkv"], packed["wo"],
            packed["w_up"], packed["w_dn"], packed["lvec"])

    in_specs = [pl.BlockSpec((1, S, 1), lambda i: (i, 0, 0)),    # per-example ids
                pl.BlockSpec((1, 1, S), lambda i: (i, 0, 0))]    # per-example mask
    in_specs += [bcast(a.shape) for a in args[2:]]

    out = pl.pallas_call(
        fused_forward_kernel,
        out_shape=jax.ShapeDtypeStruct((B, 1, N_CLASSES), jnp.float32),
        grid=(B,),                                               # one example / grid step
        in_specs=in_specs,
        out_specs=pl.BlockSpec((1, 1, N_CLASSES), lambda i: (i, 0, 0)),
        compiler_params=pltpu.CompilerParams(
            dimension_semantics=("parallel",)),                  # megacore on v7x
    )(*args)
    return out[:, 0, :]                                          # (B, N_CLASSES)


if __name__ == "__main__":
    key = jax.random.PRNGKey(0)
    pkey, ikey = jax.random.split(key)
    params = init_params(pkey)
    packed = pack_params(params)

    B = 2
    input_ids = jax.random.randint(ikey, (B, SEQ), 0, VOCAB, dtype=jnp.int32)
    attention_mask = jnp.ones((B, SEQ), dtype=jnp.int32).at[1, SEQ - 2:].set(0)

    fwd = jax.jit(distilbert_class_forward)
    logits = fwd(packed, input_ids, attention_mask)
    jax.block_until_ready(logits)
    assert logits.shape == (B, N_CLASSES)
    assert bool(jnp.all(jnp.isfinite(logits)))
    print("KERNEL_OK")
</pallas_src>

<mosaic_0001>
module attributes {stable_mosaic.version = 11 : i64} {
  func.func @fused_forward_kernel(%arg0: i32, %arg1: memref<1x8x1xi32, #tpu.memory_space<vmem>>, %arg2: memref<1x1x8xf32, #tpu.memory_space<vmem>>, %arg3: memref<128x64xf32, #tpu.memory_space<vmem>>, %arg4: memref<8x64xf32, #tpu.memory_space<vmem>>, %arg5: memref<4x64xf32, #tpu.memory_space<vmem>>, %arg6: memref<64x64xbf16, #tpu.memory_space<vmem>>, %arg7: memref<64x3xbf16, #tpu.memory_space<vmem>>, %arg8: memref<2x64x192xbf16, #tpu.memory_space<vmem>>, %arg9: memref<2x64x64xbf16, #tpu.memory_space<vmem>>, %arg10: memref<2x64x128xbf16, #tpu.memory_space<vmem>>, %arg11: memref<2x128x64xbf16, #tpu.memory_space<vmem>>, %arg12: memref<2x8x192xf32, #tpu.memory_space<vmem>>, %arg13: memref<1x1x3xf32, #tpu.memory_space<vmem>>) attributes {dimension_semantics = [#tpu.dimension_semantics<parallel>], iteration_bounds = array<i64: 2>, scalar_prefetch = 0 : i64, scratch_operands = 0 : i64, tpu.core_type = #tpu.core_type<tc>, window_params = [{transform_indices = @transform_0, window_bounds = array<i64: 1, 8, 1>}, {transform_indices = @transform_1, window_bounds = array<i64: 1, 1, 8>}, {pipeline_mode = #tpu.pipeline_mode<synchronous>, transform_indices = @transform_2, window_bounds = array<i64: 128, 64>}, {pipeline_mode = #tpu.pipeline_mode<synchronous>, transform_indices = @transform_3, window_bounds = array<i64: 8, 64>}, {pipeline_mode = #tpu.pipeline_mode<synchronous>, transform_indices = @transform_4, window_bounds = array<i64: 4, 64>}, {pipeline_mode = #tpu.pipeline_mode<synchronous>, transform_indices = @transform_5, window_bounds = array<i64: 64, 64>}, {pipeline_mode = #tpu.pipeline_mode<synchronous>, transform_indices = @transform_6, window_bounds = array<i64: 64, 3>}, {pipeline_mode = #tpu.pipeline_mode<synchronous>, transform_indices = @transform_7, window_bounds = array<i64: 2, 64, 192>}, {pipeline_mode = #tpu.pipeline_mode<synchronous>, transform_indices = @transform_8, window_bounds = array<i64: 2, 64, 64>}, {pipeline_mode = #tpu.pipeline_mode<synchronous>, transform_indices = @transform_9, window_bounds = array<i64: 2, 64, 128>}, {pipeline_mode = #tpu.pipeline_mode<synchronous>, transform_indices = @transform_10, window_bounds = array<i64: 2, 128, 64>}, {pipeline_mode = #tpu.pipeline_mode<synchronous>, transform_indices = @transform_11, window_bounds = array<i64: 2, 8, 192>}, {transform_indices = @transform_12, window_bounds = array<i64: 1, 1, 3>}]} {
    %c0 = arith.constant 0 : index
    %c0_0 = arith.constant 0 : index
    %c0_1 = arith.constant 0 : index
    %0 = vector.load %arg1[%c0, %c0_0, %c0_1] : memref<1x8x1xi32, #tpu.memory_space<vmem>>, vector<1x8x1xi32>
    %1 = vector.shape_cast %0 : vector<1x8x1xi32> to vector<8x1xi32>
    %2 = tpu.iota {dimensions = array<i32: 1>} : vector<8x128xi32>
    %3 = vector.broadcast %1 : vector<8x1xi32> to vector<8x128xi32>
    %4 = arith.cmpi eq, %2, %3 : vector<8x128xi32>
    %5 = arith.extui %4 : vector<8x128xi1> to vector<8x128xi32>
    %6 = arith.sitofp %5 : vector<8x128xi32> to vector<8x128xf32>
    %c0_2 = arith.constant 0 : index
    %c0_3 = arith.constant 0 : index
    %7 = vector.load %arg3[%c0_2, %c0_3] : memref<128x64xf32, #tpu.memory_space<vmem>>, vector<128x64xf32>
    %cst = arith.constant dense<0.000000e+00> : vector<8x64xf32>
    %8 = tpu.matmul %6, %7, %cst {dimension_numbers = #tpu.dot_dimension_numbers<[1], [0], [0], [1], [0, 0, 1, 1], [], []>} : vector<8x128xf32>, vector<128x64xf32>, vector<8x64xf32> -> vector<8x64xf32>
    %c0_4 = arith.constant 0 : index
    %c0_5 = arith.constant 0 : index
    %9 = vector.load %arg4[%c0_4, %c0_5] : memref<8x64xf32, #tpu.memory_space<vmem>>, vector<8x64xf32>
    %10 = arith.addf %8, %9 : vector<8x64xf32>
    %c0_6 = arith.constant 0 : index
    %c0_7 = arith.constant 0 : index
    %11 = vector.load %arg5[%c0_6, %c0_7] : memref<4x64xf32, #tpu.memory_space<vmem>>, vector<4x64xf32>
    %12 = vector.extract_strided_slice %11 {offsets = [0, 0], sizes = [1, 64], strides = [1, 1]} : vector<4x64xf32> to vector<1x64xf32>
    %13 = vector.extract_strided_slice %11 {offsets = [1, 0], sizes = [1, 64], strides = [1, 1]} : vector<4x64xf32> to vector<1x64xf32>
    %cst_8 = arith.constant dense<0.000000e+00> : vector<8xf32>
    %14 = vector.multi_reduction <add>, %10, %cst_8 [1] : vector<8x64xf32> to vector<8xf32>
    %15 = vector.shape_cast %14 : vector<8xf32> to vector<8x1xf32>
    %cst_9 = arith.constant 6.400000e+01 : f32
    %16 = vector.broadcast %cst_9 : f32 to vector<8x1xf32>
    %17 = arith.divf %15, %16 : vector<8x1xf32>
    %18 = vector.broadcast %17 : vector<8x1xf32> to vector<8x64xf32>
    %19 = arith.subf %10, %18 : vector<8x64xf32>
    %20 = arith.mulf %19, %19 : vector<8x64xf32>
    %cst_10 = arith.constant dense<0.000000e+00> : vector<8xf32>
    %21 = vector.multi_reduction <add>, %20, %cst_10 [1] : vector<8x64xf32> to vector<8xf32>
    %22 = vector.shape_cast %21 : vector<8xf32> to vector<8x1xf32>
    %cst_11 = arith.constant 6.400000e+01 : f32
    %23 = vector.broadcast %cst_11 : f32 to vector<8x1xf32>
    %24 = arith.divf %22, %23 : vector<8x1xf32>
    %25 = vector.broadcast %17 : vector<8x1xf32> to vector<8x64xf32>
    %26 = arith.subf %10, %25 : vector<8x64xf32>
    %cst_12 = arith.constant 9.99999996E-13 : f32
    %27 = vector.broadcast %cst_12 : f32 to vector<8x1xf32>
    %28 = arith.addf %24, %27 : vector<8x1xf32>
    %29 = math.rsqrt %28 : vector<8x1xf32>
    %30 = vector.broadcast %29 : vector<8x1xf32> to vector<8x64xf32>
    %31 = arith.mulf %26, %30 : vector<8x64xf32>
    %32 = vector.broadcast %12 : vector<1x64xf32> to vector<8x64xf32>
    %33 = arith.mulf %31, %32 : vector<8x64xf32>
    %34 = vector.broadcast %13 : vector<1x64xf32> to vector<8x64xf32>
    %35 = arith.addf %33, %34 : vector<8x64xf32>
    %c0_13 = arith.constant 0 : index
    %c0_14 = arith.constant 0 : index
    %c0_15 = arith.constant 0 : index
    %36 = vector.load %arg2[%c0_13, %c0_14, %c0_15] : memref<1x1x8xf32, #tpu.memory_space<vmem>>, vector<1x1x8xf32>
    %37 = vector.shape_cast %36 : vector<1x1x8xf32> to vector<1x8xf32>
    %cst_16 = arith.constant 1.000000e+00 : f32
    %38 = vector.broadcast %cst_16 : f32 to vector<1x8xf32>
    %39 = arith.subf %37, %38 : vector<1x8xf32>
    %cst_17 = arith.constant 1.000000e+09 : f32
    %40 = vector.broadcast %cst_17 : f32 to vector<1x8xf32>
    %41 = arith.mulf %39, %40 : vector<1x8xf32>
    %c0_18 = arith.constant 0 : index
    %c0_19 = arith.constant 0 : index
    %c0_20 = arith.constant 0 : index
    %42 = vector.load %arg12[%c0_18, %c0_19, %c0_20] : memref<2x8x192xf32, #tpu.memory_space<vmem>>, vector<1x8x192xf32>
    %43 = vector.shape_cast %42 : vector<1x8x192xf32> to vector<8x192xf32>
    %44 = vector.extract_strided_slice %43 {offsets = [0, 0], sizes = [1, 192], strides = [1, 1]} : vector<8x192xf32> to vector<1x192xf32>
    %45 = vector.extract_strided_slice %43 {offsets = [1, 0], sizes = [1, 64], strides = [1, 1]} : vector<8x192xf32> to vector<1x64xf32>
    %46 = vector.extract_strided_slice %43 {offsets = [2, 0], sizes = [1, 64], strides = [1, 1]} : vector<8x192xf32> to vector<1x64xf32>
    %47 = vector.extract_strided_slice %43 {offsets = [3, 0], sizes = [1, 64], strides = [1, 1]} : vector<8x192xf32> to vector<1x64xf32>
    %48 = vector.extract_strided_slice %43 {offsets = [4, 0], sizes = [1, 128], strides = [1, 1]} : vector<8x192xf32> to vector<1x128xf32>
    %49 = vector.extract_strided_slice %43 {offsets = [5, 0], sizes = [1, 64], strides = [1, 1]} : vector<8x192xf32> to vector<1x64xf32>
    %50 = vector.extract_strided_slice %43 {offsets = [6, 0], sizes = [1, 64], strides = [1, 1]} : vector<8x192xf32> to vector<1x64xf32>
    %51 = vector.extract_strided_slice %43 {offsets = [7, 0], sizes = [1, 64], strides = [1, 1]} : vector<8x192xf32> to vector<1x64xf32>
    %c0_21 = arith.constant 0 : index
    %c0_22 = arith.constant 0 : index
    %c0_23 = arith.constant 0 : index
    %52 = vector.load %arg8[%c0_21, %c0_22, %c0_23] : memref<2x64x192xbf16, #tpu.memory_space<vmem>>, vector<1x64x192xbf16>
    %53 = vector.shape_cast %52 : vector<1x64x192xbf16> to vector<64x192xbf16>
    %54 = arith.truncf %35 : vector<8x64xf32> to vector<8x64xbf16>
    %cst_24 = arith.constant dense<0.000000e+00> : vector<8x192xf32>
    %55 = tpu.matmul %54, %53, %cst_24 {dimension_numbers = #tpu.dot_dimension_numbers<[1], [0], [0], [1], [0, 0, 1, 1], [], []>} : vector<8x64xbf16>, vector<64x192xbf16>, vector<8x192xf32> -> vector<8x192xf32>
    %56 = vector.broadcast %44 : vector<1x192xf32> to vector<8x192xf32>
    %57 = arith.addf %55, %56 : vector<8x192xf32>
    %58 = vector.extract_strided_slice %57 {offsets = [0, 0], sizes = [8, 64], strides = [1, 1]} : vector<8x192xf32> to vector<8x64xf32>
    %59 = vector.shape_cast %58 : vector<8x64xf32> to vector<8x4x16xf32>
    %60 = tpu.transpose %59, [1, 0, 2] : vector<8x4x16xf32> -> vector<4x8x16xf32>
    %61 = vector.extract_strided_slice %57 {offsets = [0, 64], sizes = [8, 64], strides = [1, 1]} : vector<8x192xf32> to vector<8x64xf32>
    %62 = vector.shape_cast %61 : vector<8x64xf32> to vector<8x4x16xf32>
    %63 = tpu.transpose %62, [1, 0, 2] : vector<8x4x16xf32> -> vector<4x8x16xf32>
    %64 = vector.extract_strided_slice %57 {offsets = [0, 128], sizes = [8, 64], strides = [1, 1]} : vector<8x192xf32> to vector<8x64xf32>
    %65 = vector.shape_cast %64 : vector<8x64xf32> to vector<8x4x16xf32>
    %66 = tpu.transpose %65, [1, 0, 2] : vector<8x4x16xf32> -> vector<4x8x16xf32>
    %67 = arith.truncf %60 : vector<4x8x16xf32> to vector<4x8x16xbf16>
    %68 = arith.truncf %63 : vector<4x8x16xf32> to vector<4x8x16xbf16>
    "tpu.trace_start"() <{level = 10 : i32, message = "bqd,bkd->bqk"}> : () -> ()
    %cst_25 = arith.constant dense<0.000000e+00> : vector<4x8x8xf32>
    %69 = tpu.matmul %67, %68, %cst_25 {dimension_numbers = #tpu.dot_dimension_numbers<[2], [2], [1], [1], [0, 0, 0, 1, 1, 1], [0], [0]>} : vector<4x8x16xbf16>, vector<4x8x16xbf16>, vector<4x8x8xf32> -> vector<4x8x8xf32>
    "tpu.trace_stop"() : () -> ()
    %70 = vector.shape_cast %41 : vector<1x8xf32> to vector<1x1x8xf32>
    %71 = vector.broadcast %70 : vector<1x1x8xf32> to vector<4x8x8xf32>
    %72 = arith.addf %69, %71 : vector<4x8x8xf32>
    %cst_26 = arith.constant dense<0xFF800000> : vector<4x8xf32>
    %73 = vector.multi_reduction <maximumf>, %72, %cst_26 [2] : vector<4x8x8xf32> to vector<4x8xf32>
    %74 = vector.shape_cast %73 : vector<4x8xf32> to vector<4x8x1xf32>
    %75 = vector.broadcast %74 : vector<4x8x1xf32> to vector<4x8x8xf32>
    %76 = arith.subf %72, %75 : vector<4x8x8xf32>
    %77 = math.exp %76 : vector<4x8x8xf32>
    %cst_27 = arith.constant dense<0.000000e+00> : vector<4x8xf32>
    %78 = vector.multi_reduction <add>, %77, %cst_27 [2] : vector<4x8x8xf32> to vector<4x8xf32>
    %79 = vector.shape_cast %78 : vector<4x8xf32> to vector<4x8x1xf32>
    %80 = tpu.reciprocal %79 {approx = true} : vector<4x8x1xf32> -> vector<4x8x1xf32>
    %81 = vector.broadcast %80 : vector<4x8x1xf32> to vector<4x8x8xf32>
    %82 = arith.mulf %77, %81 : vector<4x8x8xf32>
    %83 = arith.truncf %82 : vector<4x8x8xf32> to vector<4x8x8xbf16>
    %84 = arith.truncf %66 : vector<4x8x16xf32> to vector<4x8x16xbf16>
    "tpu.trace_start"() <{level = 10 : i32, message = "bqk,bkd->bqd"}> : () -> ()
    %cst_28 = arith.constant dense<0.000000e+00> : vector<4x8x16xf32>
    %85 = tpu.matmul %83, %84, %cst_28 {dimension_numbers = #tpu.dot_dimension_numbers<[2], [1], [1], [2], [0, 0, 0, 1, 1, 2], [0], [0]>} : vector<4x8x8xbf16>, vector<4x8x16xbf16>, vector<4x8x16xf32> -> vector<4x8x16xf32>
    "tpu.trace_stop"() : () -> ()
    %86 = tpu.transpose %85, [1, 0, 2] : vector<4x8x16xf32> -> vector<8x4x16xf32>
    %87 = vector.shape_cast %86 : vector<8x4x16xf32> to vector<8x64xf32>
    %c0_29 = arith.constant 0 : index
    %c0_30 = arith.constant 0 : index
    %c0_31 = arith.constant 0 : index
    %88 = vector.load %arg9[%c0_29, %c0_30, %c0_31] : memref<2x64x64xbf16, #tpu.memory_space<vmem>>, vector<1x64x64xbf16>
    %89 = vector.shape_cast %88 : vector<1x64x64xbf16> to vector<64x64xbf16>
    %90 = arith.truncf %87 : vector<8x64xf32> to vector<8x64xbf16>
    %cst_32 = arith.constant dense<0.000000e+00> : vector<8x64xf32>
    %91 = tpu.matmul %90, %89, %cst_32 {dimension_numbers = #tpu.dot_dimension_numbers<[1], [0], [0], [1], [0, 0, 1, 1], [], []>} : vector<8x64xbf16>, vector<64x64xbf16>, vector<8x64xf32> -> vector<8x64xf32>
    %92 = vector.broadcast %45 : vector<1x64xf32> to vector<8x64xf32>
    %93 = arith.addf %91, %92 : vector<8x64xf32>
    %94 = arith.addf %35, %93 : vector<8x64xf32>
    %cst_33 = arith.constant dense<0.000000e+00> : vector<8xf32>
    %95 = vector.multi_reduction <add>, %94, %cst_33 [1] : vector<8x64xf32> to vector<8xf32>
    %96 = vector.shape_cast %95 : vector<8xf32> to vector<8x1xf32>
    %cst_34 = arith.constant 6.400000e+01 : f32
    %97 = vector.broadcast %cst_34 : f32 to vector<8x1xf32>
    %98 = arith.divf %96, %97 : vector<8x1xf32>
    %99 = vector.broadcast %98 : vector<8x1xf32> to vector<8x64xf32>
    %100 = arith.subf %94, %99 : vector<8x64xf32>
    %101 = arith.mulf %100, %100 : vector<8x64xf32>
    %cst_35 = arith.constant dense<0.000000e+00> : vector<8xf32>
    %102 = vector.multi_reduction <add>, %101, %cst_35 [1] : vector<8x64xf32> to vector<8xf32>
    %103 = vector.shape_cast %102 : vector<8xf32> to vector<8x1xf32>
    %cst_36 = arith.constant 6.400000e+01 : f32
    %104 = vector.broadcast %cst_36 : f32 to vector<8x1xf32>
    %105 = arith.divf %103, %104 : vector<8x1xf32>
    %106 = vector.broadcast %98 : vector<8x1xf32> to vector<8x64xf32>
    %107 = arith.subf %94, %106 : vector<8x64xf32>
    %cst_37 = arith.constant 9.99999996E-13 : f32
    %108 = vector.broadcast %cst_37 : f32 to vector<8x1xf32>
    %109 = arith.addf %105, %108 : vector<8x1xf32>
    %110 = math.rsqrt %109 : vector<8x1xf32>
    %111 = vector.broadcast %110 : vector<8x1xf32> to vector<8x64xf32>
    %112 = arith.mulf %107, %111 : vector<8x64xf32>
    %113 = vector.broadcast %46 : vector<1x64xf32> to vector<8x64xf32>
    %114 = arith.mulf %112, %113 : vector<8x64xf32>
    %115 = vector.broadcast %47 : vector<1x64xf32> to vector<8x64xf32>
    %116 = arith.addf %114, %115 : vector<8x64xf32>
    %c0_38 = arith.constant 0 : index
    %c0_39 = arith.constant 0 : index
    %c0_40 = arith.constant 0 : index
    %117 = vector.load %arg10[%c0_38, %c0_39, %c0_40] : memref<2x64x128xbf16, #tpu.memory_space<vmem>>, vector<1x64x128xbf16>
    %118 = vector.shape_cast %117 : vector<1x64x128xbf16> to vector<64x128xbf16>
    %119 = arith.truncf %116 : vector<8x64xf32> to vector<8x64xbf16>
    %cst_41 = arith.constant dense<0.000000e+00> : vector<8x128xf32>
    %120 = tpu.matmul %119, %118, %cst_41 {dimension_numbers = #tpu.dot_dimension_numbers<[1], [0], [0], [1], [0, 0, 1, 1], [], []>} : vector<8x64xbf16>, vector<64x128xbf16>, vector<8x128xf32> -> vector<8x128xf32>
    %121 = vector.broadcast %48 : vector<1x128xf32> to vector<8x128xf32>
    %122 = arith.addf %120, %121 : vector<8x128xf32>
    %123 = arith.mulf %122, %122 : vector<8x128xf32>
    %124 = arith.mulf %122, %123 : vector<8x128xf32>
    %cst_42 = arith.constant 4.471500e-02 : f32
    %125 = vector.broadcast %cst_42 : f32 to vector<8x128xf32>
    %126 = arith.mulf %125, %124 : vector<8x128xf32>
    %127 = arith.addf %122, %126 : vector<8x128xf32>
    %cst_43 = arith.constant 0.797884583 : f32
    %128 = vector.broadcast %cst_43 : f32 to vector<8x128xf32>
    %129 = arith.mulf %128, %127 : vector<8x128xf32>
    %130 = math.tanh %129 : vector<8x128xf32>
    %cst_44 = arith.constant 1.000000e+00 : f32
    %131 = vector.broadcast %cst_44 : f32 to vector<8x128xf32>
    %132 = arith.addf %131, %130 : vector<8x128xf32>
    %cst_45 = arith.constant 5.000000e-01 : f32
    %133 = vector.broadcast %cst_45 : f32 to vector<8x128xf32>
    %134 = arith.mulf %133, %132 : vector<8x128xf32>
    %135 = arith.mulf %122, %134 : vector<8x128xf32>
    %c0_46 = arith.constant 0 : index
    %c0_47 = arith.constant 0 : index
    %c0_48 = arith.constant 0 : index
    %136 = vector.load %arg11[%c0_46, %c0_47, %c0_48] : memref<2x128x64xbf16, #tpu.memory_space<vmem>>, vector<1x128x64xbf16>
    %137 = vector.shape_cast %136 : vector<1x128x64xbf16> to vector<128x64xbf16>
    %138 = arith.truncf %135 : vector<8x128xf32> to vector<8x128xbf16>
    %cst_49 = arith.constant dense<0.000000e+00> : vector<8x64xf32>
    %139 = tpu.matmul %138, %137, %cst_49 {dimension_numbers = #tpu.dot_dimension_numbers<[1], [0], [0], [1], [0, 0, 1, 1], [], []>} : vector<8x128xbf16>, vector<128x64xbf16>, vector<8x64xf32> -> vector<8x64xf32>
    %140 = vector.broadcast %49 : vector<1x64xf32> to vector<8x64xf32>
    %141 = arith.addf %139, %140 : vector<8x64xf32>
    %142 = arith.addf %116, %141 : vector<8x64xf32>
    %cst_50 = arith.constant dense<0.000000e+00> : vector<8xf32>
    %143 = vector.multi_reduction <add>, %142, %cst_50 [1] : vector<8x64xf32> to vector<8xf32>
    %144 = vector.shape_cast %143 : vector<8xf32> to vector<8x1xf32>
    %cst_51 = arith.constant 6.400000e+01 : f32
    %145 = vector.broadcast %cst_51 : f32 to vector<8x1xf32>
    %146 = arith.divf %144, %145 : vector<8x1xf32>
    %147 = vector.broadcast %146 : vector<8x1xf32> to vector<8x64xf32>
    %148 = arith.subf %142, %147 : vector<8x64xf32>
    %149 = arith.mulf %148, %148 : vector<8x64xf32>
    %cst_52 = arith.constant dense<0.000000e+00> : vector<8xf32>
    %150 = vector.multi_reduction <add>, %149, %cst_52 [1] : vector<8x64xf32> to vector<8xf32>
    %151 = vector.shape_cast %150 : vector<8xf32> to vector<8x1xf32>
    %cst_53 = arith.constant 6.400000e+01 : f32
    %152 = vector.broadcast %cst_53 : f32 to vector<8x1xf32>
    %153 = arith.divf %151, %152 : vector<8x1xf32>
    %154 = vector.broadcast %146 : vector<8x1xf32> to vector<8x64xf32>
    %155 = arith.subf %142, %154 : vector<8x64xf32>
    %cst_54 = arith.constant 9.99999996E-13 : f32
    %156 = vector.broadcast %cst_54 : f32 to vector<8x1xf32>
    %157 = arith.addf %153, %156 : vector<8x1xf32>
    %158 = math.rsqrt %157 : vector<8x1xf32>
    %159 = vector.broadcast %158 : vector<8x1xf32> to vector<8x64xf32>
    %160 = arith.mulf %155, %159 : vector<8x64xf32>
    %161 = vector.broadcast %50 : vector<1x64xf32> to vector<8x64xf32>
    %162 = arith.mulf %160, %161 : vector<8x64xf32>
    %163 = vector.broadcast %51 : vector<1x64xf32> to vector<8x64xf32>
    %164 = arith.addf %162, %163 : vector<8x64xf32>
    %c1 = arith.constant 1 : index
    %c0_55 = arith.constant 0 : index
    %c0_56 = arith.constant 0 : index
    %165 = vector.load %arg12[%c1, %c0_55, %c0_56] : memref<2x8x192xf32, #tpu.memory_space<vmem>>, vector<1x8x192xf32>
    %166 = vector.shape_cast %165 : vector<1x8x192xf32> to vector<8x192xf32>
    %167 = vector.extract_strided_slice %166 {offsets = [0, 0], sizes = [1, 192], strides = [1, 1]} : vector<8x192xf32> to vector<1x192xf32>
    %168 = vector.extract_strided_slice %166 {offsets = [1, 0], sizes = [1, 64], strides = [1, 1]} : vector<8x192xf32> to vector<1x64xf32>
    %169 = vector.extract_strided_slice %166 {offsets = [2, 0], sizes = [1, 64], strides = [1, 1]} : vector<8x192xf32> to vector<1x64xf32>
    %170 = vector.extract_strided_slice %166 {offsets = [3, 0], sizes = [1, 64], strides = [1, 1]} : vector<8x192xf32> to vector<1x64xf32>
    %171 = vector.extract_strided_slice %166 {offsets = [4, 0], sizes = [1, 128], strides = [1, 1]} : vector<8x192xf32> to vector<1x128xf32>
    %172 = vector.extract_strided_slice %166 {offsets = [5, 0], sizes = [1, 64], strides = [1, 1]} : vector<8x192xf32> to vector<1x64xf32>
    %173 = vector.extract_strided_slice %166 {offsets = [6, 0], sizes = [1, 64], strides = [1, 1]} : vector<8x192xf32> to vector<1x64xf32>
    %174 = vector.extract_strided_slice %166 {offsets = [7, 0], sizes = [1, 64], strides = [1, 1]} : vector<8x192xf32> to vector<1x64xf32>
    %c1_57 = arith.constant 1 : index
    %c0_58 = arith.constant 0 : index
    %c0_59 = arith.constant 0 : index
    %175 = vector.load %arg8[%c1_57, %c0_58, %c0_59] : memref<2x64x192xbf16, #tpu.memory_space<vmem>>, vector<1x64x192xbf16>
    %176 = vector.shape_cast %175 : vector<1x64x192xbf16> to vector<64x192xbf16>
    %177 = arith.truncf %164 : vector<8x64xf32> to vector<8x64xbf16>
    %cst_60 = arith.constant dense<0.000000e+00> : vector<8x192xf32>
    %178 = tpu.matmul %177, %176, %cst_60 {dimension_numbers = #tpu.dot_dimension_numbers<[1], [0], [0], [1], [0, 0, 1, 1], [], []>} : vector<8x64xbf16>, vector<64x192xbf16>, vector<8x192xf32> -> vector<8x192xf32>
    %179 = vector.broadcast %167 : vector<1x192xf32> to vector<8x192xf32>
    %180 = arith.addf %178, %179 : vector<8x192xf32>
    %181 = vector.extract_strided_slice %180 {offsets = [0, 0], sizes = [8, 64], strides = [1, 1]} : vector<8x192xf32> to vector<8x64xf32>
    %182 = vector.shape_cast %181 : vector<8x64xf32> to vector<8x4x16xf32>
    %183 = tpu.transpose %182, [1, 0, 2] : vector<8x4x16xf32> -> vector<4x8x16xf32>
    %184 = vector.extract_strided_slice %180 {offsets = [0, 64], sizes = [8, 64], strides = [1, 1]} : vector<8x192xf32> to vector<8x64xf32>
    %185 = vector.shape_cast %184 : vector<8x64xf32> to vector<8x4x16xf32>
    %186 = tpu.transpose %185, [1, 0, 2] : vector<8x4x16xf32> -> vector<4x8x16xf32>
    %187 = vector.extract_strided_slice %180 {offsets = [0, 128], sizes = [8, 64], strides = [1, 1]} : vector<8x192xf32> to vector<8x64xf32>
    %188 = vector.shape_cast %187 : vector<8x64xf32> to vector<8x4x16xf32>
    %189 = tpu.transpose %188, [1, 0, 2] : vector<8x4x16xf32> -> vector<4x8x16xf32>
    %190 = arith.truncf %183 : vector<4x8x16xf32> to vector<4x8x16xbf16>
    %191 = arith.truncf %186 : vector<4x8x16xf32> to vector<4x8x16xbf16>
    "tpu.trace_start"() <{level = 10 : i32, message = "bqd,bkd->bqk"}> : () -> ()
    %cst_61 = arith.constant dense<0.000000e+00> : vector<4x8x8xf32>
    %192 = tpu.matmul %190, %191, %cst_61 {dimension_numbers = #tpu.dot_dimension_numbers<[2], [2], [1], [1], [0, 0, 0, 1, 1, 1], [0], [0]>} : vector<4x8x16xbf16>, vector<4x8x16xbf16>, vector<4x8x8xf32> -> vector<4x8x8xf32>
    "tpu.trace_stop"() : () -> ()
    %193 = vector.shape_cast %41 : vector<1x8xf32> to vector<1x1x8xf32>
    %194 = vector.broadcast %193 : vector<1x1x8xf32> to vector<4x8x8xf32>
    %195 = arith.addf %192, %194 : vector<4x8x8xf32>
    %cst_62 = arith.constant dense<0xFF800000> : vector<4x8xf32>
    %196 = vector.multi_reduction <maximumf>, %195, %cst_62 [2] : vector<4x8x8xf32> to vector<4x8xf32>
    %197 = vector.shape_cast %196 : vector<4x8xf32> to vector<4x8x1xf32>
    %198 = vector.broadcast %197 : vector<4x8x1xf32> to vector<4x8x8xf32>
    %199 = arith.subf %195, %198 : vector<4x8x8xf32>
    %200 = math.exp %199 : vector<4x8x8xf32>
    %cst_63 = arith.constant dense<0.000000e+00> : vector<4x8xf32>
    %201 = vector.multi_reduction <add>, %200, %cst_63 [2] : vector<4x8x8xf32> to vector<4x8xf32>
    %202 = vector.shape_cast %201 : vector<4x8xf32> to vector<4x8x1xf32>
    %203 = tpu.reciprocal %202 {approx = true} : vector<4x8x1xf32> -> vector<4x8x1xf32>
    %204 = vector.broadcast %203 : vector<4x8x1xf32> to vector<4x8x8xf32>
    %205 = arith.mulf %200, %204 : vector<4x8x8xf32>
    %206 = arith.truncf %205 : vector<4x8x8xf32> to vector<4x8x8xbf16>
    %207 = arith.truncf %189 : vector<4x8x16xf32> to vector<4x8x16xbf16>
    "tpu.trace_start"() <{level = 10 : i32, message = "bqk,bkd->bqd"}> : () -> ()
    %cst_64 = arith.constant dense<0.000000e+00> : vector<4x8x16xf32>
    %208 = tpu.matmul %206, %207, %cst_64 {dimension_numbers = #tpu.dot_dimension_numbers<[2], [1], [1], [2], [0, 0, 0, 1, 1, 2], [0], [0]>} : vector<4x8x8xbf16>, vector<4x8x16xbf16>, vector<4x8x16xf32> -> vector<4x8x16xf32>
    "tpu.trace_stop"() : () -> ()
    %209 = tpu.transpose %208, [1, 0, 2] : vector<4x8x16xf32> -> vector<8x4x16xf32>
    %210 = vector.shape_cast %209 : vector<8x4x16xf32> to vector<8x64xf32>
    %c1_65 = arith.constant 1 : index
    %c0_66 = arith.constant 0 : index
    %c0_67 = arith.constant 0 : index
    %211 = vector.load %arg9[%c1_65, %c0_66, %c0_67] : memref<2x64x64xbf16, #tpu.memory_space<vmem>>, vector<1x64x64xbf16>
    %212 = vector.shape_cast %211 : vector<1x64x64xbf16> to vector<64x64xbf16>
    %213 = arith.truncf %210 : vector<8x64xf32> to vector<8x64xbf16>
    %cst_68 = arith.constant dense<0.000000e+00> : vector<8x64xf32>
    %214 = tpu.matmul %213, %212, %cst_68 {dimension_numbers = #tpu.dot_dimension_numbers<[1], [0], [0], [1], [0, 0, 1, 1], [], []>} : vector<8x64xbf16>, vector<64x64xbf16>, vector<8x64xf32> -> vector<8x64xf32>
    %215 = vector.broadcast %168 : vector<1x64xf32> to vector<8x64xf32>
    %216 = arith.addf %214, %215 : vector<8x64xf32>
    %217 = arith.addf %164, %216 : vector<8x64xf32>
    %cst_69 = arith.constant dense<0.000000e+00> : vector<8xf32>
    %218 = vector.multi_reduction <add>, %217, %cst_69 [1] : vector<8x64xf32> to vector<8xf32>
    %219 = vector.shape_cast %218 : vector<8xf32> to vector<8x1xf32>
    %cst_70 = arith.constant 6.400000e+01 : f32
    %220 = vector.broadcast %cst_70 : f32 to vector<8x1xf32>
    %221 = arith.divf %219, %220 : vector<8x1xf32>
    %222 = vector.broadcast %221 : vector<8x1xf32> to vector<8x64xf32>
    %223 = arith.subf %217, %222 : vector<8x64xf32>
    %224 = arith.mulf %223, %223 : vector<8x64xf32>
    %cst_71 = arith.constant dense<0.000000e+00> : vector<8xf32>
    %225 = vector.multi_reduction <add>, %224, %cst_71 [1] : vector<8x64xf32> to vector<8xf32>
    %226 = vector.shape_cast %225 : vector<8xf32> to vector<8x1xf32>
    %cst_72 = arith.constant 6.400000e+01 : f32
    %227 = vector.broadcast %cst_72 : f32 to vector<8x1xf32>
    %228 = arith.divf %226, %227 : vector<8x1xf32>
    %229 = vector.broadcast %221 : vector<8x1xf32> to vector<8x64xf32>
    %230 = arith.subf %217, %229 : vector<8x64xf32>
    %cst_73 = arith.constant 9.99999996E-13 : f32
    %231 = vector.broadcast %cst_73 : f32 to vector<8x1xf32>
    %232 = arith.addf %228, %231 : vector<8x1xf32>
    %233 = math.rsqrt %232 : vector<8x1xf32>
    %234 = vector.broadcast %233 : vector<8x1xf32> to vector<8x64xf32>
    %235 = arith.mulf %230, %234 : vector<8x64xf32>
    %236 = vector.broadcast %169 : vector<1x64xf32> to vector<8x64xf32>
    %237 = arith.mulf %235, %236 : vector<8x64xf32>
    %238 = vector.broadcast %170 : vector<1x64xf32> to vector<8x64xf32>
    %239 = arith.addf %237, %238 : vector<8x64xf32>
    %c1_74 = arith.constant 1 : index
    %c0_75 = arith.constant 0 : index
    %c0_76 = arith.constant 0 : index
    %240 = vector.load %arg10[%c1_74, %c0_75, %c0_76] : memref<2x64x128xbf16, #tpu.memory_space<vmem>>, vector<1x64x128xbf16>
    %241 = vector.shape_cast %240 : vector<1x64x128xbf16> to vector<64x128xbf16>
    %242 = arith.truncf %239 : vector<8x64xf32> to vector<8x64xbf16>
    %cst_77 = arith.constant dense<0.000000e+00> : vector<8x128xf32>
    %243 = tpu.matmul %242, %241, %cst_77 {dimension_numbers = #tpu.dot_dimension_numbers<[1], [0], [0], [1], [0, 0, 1, 1], [], []>} : vector<8x64xbf16>, vector<64x128xbf16>, vector<8x128xf32> -> vector<8x128xf32>
    %244 = vector.broadcast %171 : vector<1x128xf32> to vector<8x128xf32>
    %245 = arith.addf %243, %244 : vector<8x128xf32>
    %246 = arith.mulf %245, %245 : vector<8x128xf32>
    %247 = arith.mulf %245, %246 : vector<8x128xf32>
    %cst_78 = arith.constant 4.471500e-02 : f32
    %248 = vector.broadcast %cst_78 : f32 to vector<8x128xf32>
    %249 = arith.mulf %248, %247 : vector<8x128xf32>
    %250 = arith.addf %245, %249 : vector<8x128xf32>
    %cst_79 = arith.constant 0.797884583 : f32
    %251 = vector.broadcast %cst_79 : f32 to vector<8x128xf32>
    %252 = arith.mulf %251, %250 : vector<8x128xf32>
    %253 = math.tanh %252 : vector<8x128xf32>
    %cst_80 = arith.constant 1.000000e+00 : f32
    %254 = vector.broadcast %cst_80 : f32 to vector<8x128xf32>
    %255 = arith.addf %254, %253 : vector<8x128xf32>
    %cst_81 = arith.constant 5.000000e-01 : f32
    %256 = vector.broadcast %cst_81 : f32 to vector<8x128xf32>
    %257 = arith.mulf %256, %255 : vector<8x128xf32>
    %258 = arith.mulf %245, %257 : vector<8x128xf32>
    %c1_82 = arith.constant 1 : index
    %c0_83 = arith.constant 0 : index
    %c0_84 = arith.constant 0 : index
    %259 = vector.load %arg11[%c1_82, %c0_83, %c0_84] : memref<2x128x64xbf16, #tpu.memory_space<vmem>>, vector<1x128x64xbf16>
    %260 = vector.shape_cast %259 : vector<1x128x64xbf16> to vector<128x64xbf16>
    %261 = arith.truncf %258 : vector<8x128xf32> to vector<8x128xbf16>
    %cst_85 = arith.constant dense<0.000000e+00> : vector<8x64xf32>
    %262 = tpu.matmul %261, %260, %cst_85 {dimension_numbers = #tpu.dot_dimension_numbers<[1], [0], [0], [1], [0, 0, 1, 1], [], []>} : vector<8x128xbf16>, vector<128x64xbf16>, vector<8x64xf32> -> vector<8x64xf32>
    %263 = vector.broadcast %172 : vector<1x64xf32> to vector<8x64xf32>
    %264 = arith.addf %262, %263 : vector<8x64xf32>
    %265 = arith.addf %239, %264 : vector<8x64xf32>
    %cst_86 = arith.constant dense<0.000000e+00> : vector<8xf32>
    %266 = vector.multi_reduction <add>, %265, %cst_86 [1] : vector<8x64xf32> to vector<8xf32>
    %267 = vector.shape_cast %266 : vector<8xf32> to vector<8x1xf32>
    %cst_87 = arith.constant 6.400000e+01 : f32
    %268 = vector.broadcast %cst_87 : f32 to vector<8x1xf32>
    %269 = arith.divf %267, %268 : vector<8x1xf32>
    %270 = vector.broadcast %269 : vector<8x1xf32> to vector<8x64xf32>
    %271 = arith.subf %265, %270 : vector<8x64xf32>
    %272 = arith.mulf %271, %271 : vector<8x64xf32>
    %cst_88 = arith.constant dense<0.000000e+00> : vector<8xf32>
    %273 = vector.multi_reduction <add>, %272, %cst_88 [1] : vector<8x64xf32> to vector<8xf32>
    %274 = vector.shape_cast %273 : vector<8xf32> to vector<8x1xf32>
    %cst_89 = arith.constant 6.400000e+01 : f32
    %275 = vector.broadcast %cst_89 : f32 to vector<8x1xf32>
    %276 = arith.divf %274, %275 : vector<8x1xf32>
    %277 = vector.broadcast %269 : vector<8x1xf32> to vector<8x64xf32>
    %278 = arith.subf %265, %277 : vector<8x64xf32>
    %cst_90 = arith.constant 9.99999996E-13 : f32
    %279 = vector.broadcast %cst_90 : f32 to vector<8x1xf32>
    %280 = arith.addf %276, %279 : vector<8x1xf32>
    %281 = math.rsqrt %280 : vector<8x1xf32>
    %282 = vector.broadcast %281 : vector<8x1xf32> to vector<8x64xf32>
    %283 = arith.mulf %278, %282 : vector<8x64xf32>
    %284 = vector.broadcast %173 : vector<1x64xf32> to vector<8x64xf32>
    %285 = arith.mulf %283, %284 : vector<8x64xf32>
    %286 = vector.broadcast %174 : vector<1x64xf32> to vector<8x64xf32>
    %287 = arith.addf %285, %286 : vector<8x64xf32>
    %288 = vector.extract_strided_slice %287 {offsets = [0, 0], sizes = [1, 64], strides = [1, 1]} : vector<8x64xf32> to vector<1x64xf32>
    %c0_91 = arith.constant 0 : index
    %c0_92 = arith.constant 0 : index
    %289 = vector.load %arg6[%c0_91, %c0_92] : memref<64x64xbf16, #tpu.memory_space<vmem>>, vector<64x64xbf16>
    %290 = arith.truncf %288 : vector<1x64xf32> to vector<1x64xbf16>
    %cst_93 = arith.constant dense<0.000000e+00> : vector<1x64xf32>
    %291 = tpu.matmul %290, %289, %cst_93 {dimension_numbers = #tpu.dot_dimension_numbers<[1], [0], [0], [1], [0, 0, 1, 1], [], []>} : vector<1x64xbf16>, vector<64x64xbf16>, vector<1x64xf32> -> vector<1x64xf32>
    %292 = vector.extract_strided_slice %11 {offsets = [2, 0], sizes = [1, 64], strides = [1, 1]} : vector<4x64xf32> to vector<1x64xf32>
    %293 = arith.addf %291, %292 : vector<1x64xf32>
    %cst_94 = arith.constant 0.000000e+00 : f32
    %294 = vector.broadcast %cst_94 : f32 to vector<1x64xf32>
    %295 = arith.maximumf %293, %294 : vector<1x64xf32>
    %c0_95 = arith.constant 0 : index
    %c0_96 = arith.constant 0 : index
    %296 = vector.load %arg7[%c0_95, %c0_96] : memref<64x3xbf16, #tpu.memory_space<vmem>>, vector<64x3xbf16>
    %297 = arith.truncf %295 : vector<1x64xf32> to vector<1x64xbf16>
    %cst_97 = arith.constant dense<0.000000e+00> : vector<1x3xf32>
    %298 = tpu.matmul %297, %296, %cst_97 {dimension_numbers = #tpu.dot_dimension_numbers<[1], [0], [0], [1], [0, 0, 1, 1], [], []>} : vector<1x64xbf16>, vector<64x3xbf16>, vector<1x3xf32> -> vector<1x3xf32>
    %299 = vector.extract_strided_slice %11 {offsets = [3, 0], sizes = [1, 3], strides = [1, 1]} : vector<4x64xf32> to vector<1x3xf32>
    %300 = arith.addf %298, %299 : vector<1x3xf32>
    %301 = vector.shape_cast %300 : vector<1x3xf32> to vector<1x1x3xf32>
    %c0_98 = arith.constant 0 : index
    %c0_99 = arith.constant 0 : index
    %c0_100 = arith.constant 0 : index
    %302 = vector.load %arg13[%c0_98, %c0_99, %c0_100] : memref<1x1x3xf32, #tpu.memory_space<vmem>>, vector<1x1x3xf32>
    tpu.vector_store %arg13[%c0_98, %c0_99, %c0_100], %301 {strides = array<i32>} : memref<1x1x3xf32, #tpu.memory_space<vmem>>, vector<1x1x3xf32>,
    return
  }
  func.func @transform_0(%arg0: i32) -> (i32, i32, i32) {
    %c0_i32 = arith.constant 0 : i32
    %c0_i32_0 = arith.constant 0 : i32
    %c0_i32_1 = arith.constant 0 : i32
    return %arg0, %c0_i32, %c0_i32_0 : i32, i32, i32
  }
  func.func @transform_1(%arg0: i32) -> (i32, i32, i32) {
    %c0_i32 = arith.constant 0 : i32
    %c0_i32_0 = arith.constant 0 : i32
    %c0_i32_1 = arith.constant 0 : i32
    return %arg0, %c0_i32, %c0_i32_0 : i32, i32, i32
  }
  func.func @transform_2(%arg0: i32) -> (i32, i32) {
    %c0_i32 = arith.constant 0 : i32
    %c0_i32_0 = arith.constant 0 : i32
    %c0_i32_1 = arith.constant 0 : i32
    return %c0_i32, %c0_i32_0 : i32, i32
  }
  func.func @transform_3(%arg0: i32) -> (i32, i32) {
    %c0_i32 = arith.constant 0 : i32
    %c0_i32_0 = arith.constant 0 : i32
    %c0_i32_1 = arith.constant 0 : i32
    return %c0_i32, %c0_i32_0 : i32, i32
  }
  func.func @transform_4(%arg0: i32) -> (i32, i32) {
    %c0_i32 = arith.constant 0 : i32
    %c0_i32_0 = arith.constant 0 : i32
    %c0_i32_1 = arith.constant 0 : i32
    return %c0_i32, %c0_i32_0 : i32, i32
  }
  func.func @transform_5(%arg0: i32) -> (i32, i32) {
    %c0_i32 = arith.constant 0 : i32
    %c0_i32_0 = arith.constant 0 : i32
    %c0_i32_1 = arith.constant 0 : i32
    return %c0_i32, %c0_i32_0 : i32, i32
  }
  func.func @transform_6(%arg0: i32) -> (i32, i32) {
    %c0_i32 = arith.constant 0 : i32
    %c0_i32_0 = arith.constant 0 : i32
    %c0_i32_1 = arith.constant 0 : i32
    return %c0_i32, %c0_i32_0 : i32, i32
  }
  func.func @transform_7(%arg0: i32) -> (i32, i32, i32) {
    %c0_i32 = arith.constant 0 : i32
    %c0_i32_0 = arith.constant 0 : i32
    %c0_i32_1 = arith.constant 0 : i32
    %c0_i32_2 = arith.constant 0 : i32
    return %c0_i32, %c0_i32_0, %c0_i32_1 : i32, i32, i32
  }
  func.func @transform_8(%arg0: i32) -> (i32, i32, i32) {
    %c0_i32 = arith.constant 0 : i32
    %c0_i32_0 = arith.constant 0 : i32
    %c0_i32_1 = arith.constant 0 : i32
    %c0_i32_2 = arith.constant 0 : i32
    return %c0_i32, %c0_i32_0, %c0_i32_1 : i32, i32, i32
  }
  func.func @transform_9(%arg0: i32) -> (i32, i32, i32) {
    %c0_i32 = arith.constant 0 : i32
    %c0_i32_0 = arith.constant 0 : i32
    %c0_i32_1 = arith.constant 0 : i32
    %c0_i32_2 = arith.constant 0 : i32
    return %c0_i32, %c0_i32_0, %c0_i32_1 : i32, i32, i32
  }
  func.func @transform_10(%arg0: i32) -> (i32, i32, i32) {
    %c0_i32 = arith.constant 0 : i32
    %c0_i32_0 = arith.constant 0 : i32
    %c0_i32_1 = arith.constant 0 : i32
    %c0_i32_2 = arith.constant 0 : i32
    return %c0_i32, %c0_i32_0, %c0_i32_1 : i32, i32, i32
  }
  func.func @transform_11(%arg0: i32) -> (i32, i32, i32) {
    %c0_i32 = arith.constant 0 : i32
    %c0_i32_0 = arith.constant 0 : i32
    %c0_i32_1 = arith.constant 0 : i32
    %c0_i32_2 = arith.constant 0 : i32
    return %c0_i32, %c0_i32_0, %c0_i32_1 : i32, i32, i32
  }
  func.func @transform_12(%arg0: i32) -> (i32, i32, i32) {
    %c0_i32 = arith.constant 0 : i32
    %c0_i32_0 = arith.constant 0 : i32
    %c0_i32_1 = arith.constant 0 : i32
    return %arg0, %c0_i32, %c0_i32_0 : i32, i32, i32
  }
}

</mosaic_0001>

<llo_original>
// kernel: distilbert_class_forward.1
$region0: #{distilbert_class_forward.1}
  #allocation0 [shape = 'u32[]', space=smem, size = 0x4, offset = 0x4, fixed_abs, tag = 'smem constant byte address 0x4 - core index']
  #allocation1 [shape = 'u32[144,128]{1,0:T(1,128)}', space=vmem, size = 0x12000, scoped, tag = 'internal scratch']
  %s0 = inlined_call_operand.vmem [shape: s32[2,8,1], index: 0, kind: input, shape index: {}]
  %s1 = inlined_call_operand.vmem [shape: f32[2,1,8], index: 1, kind: input, shape index: {}]
  %s2 = inlined_call_operand.vmem [shape: f32[128,64], index: 2, kind: input, shape index: {}]
  %s3 = inlined_call_operand.hbm [shape: f32[8,64], index: 3, kind: input, shape index: {}]
  %s4 = inlined_call_operand.vmem [shape: f32[4,64], index: 4, kind: input, shape index: {}]
  %s5 = inlined_call_operand.vmem [shape: bf16[64,64], index: 5, kind: input, shape index: {}]
  %s6 = inlined_call_operand.vmem [shape: bf16[64,3], index: 6, kind: input, shape index: {}]
  %s7 = inlined_call_operand.vmem [shape: bf16[2,64,192], index: 7, kind: input, shape index: {}]
  %s8 = inlined_call_operand.vmem [shape: bf16[2,64,64], index: 8, kind: input, shape index: {}]
  %s9 = inlined_call_operand.vmem [shape: bf16[2,64,128], index: 9, kind: input, shape index: {}]
  %s10 = inlined_call_operand.vmem [shape: bf16[2,128,64], index: 10, kind: input, shape index: {}]
  %s11 = inlined_call_operand.vmem [shape: f32[2,8,192], index: 11, kind: input, shape index: {}]
  %s12 = inlined_call_operand.hbm [shape: f32[2,1,3], index: 12, kind: output, shape index: {}]
  %s13 = sld [smem:[#allocation0]]
  $region85: #{distilbert_class_forward.1} parent=0
    _
  %s15 = ssub.s32 1, %s13
  %s16 = scalar_select 0, %s15, %s13
  $region1: #{distilbert_class_forward.1} parent=0
    #allocation2 [shape = 'u8[4096]{0}', space=vmem, size = 0x1000, scoped, tag = 'input window, operand 3, single buffered']
    #allocation3 [shape = 's32[2]{0}', space=sflag, size = 0x8, scoped, tag = 'scoped memory for distilbert_class_forward.1']
    #allocation4 [shape = 's32[2]{0}', space=sflag, size = 0x8, scoped, tag = 'scoped memory for distilbert_class_forward.1']
    #allocation5 [shape = 'u8[1024]{0}', space=vmem, size = 0x400, scoped, tag = 'output window, operand 0']
    %17 = vsyncpa [#allocation3], 0
    %18 = vsyncpa [#allocation4], 0
    %s19 = scalar_lea.sflag [#allocation4], 1
    %20 = vsyncpa %s19, 0
    loop: start=0, step=1, limit=4
    $region2: #{distilbert_class_forward.1} parent=1 // loop_pre_header
      _
    $region3: #{distilbert_class_forward.1} parent=1 // loop_header
      %s22 = sphi 0, %s26
      %p23 = scmp.ge.s32.totalorder %s22, 4
      %s32 = sphi 0, %s34
      %s35 = sphi 0, %s32
      %s36 = sphi 0, %s35
      %s52 = sphi 0, %s36
      %s58 = sphi 0, %s60
      %s61 = sphi 0, %s58
      %s62 = sphi 0, %s61
      %s78 = sphi 0, %s62
      %s82 = sphi 0, %s82
      %s84 = sphi 0, %s82
      %s85 = sphi 0, %s84
      %s99 = sphi 0, %s85
      %s103 = sphi 0, %s103
      %s105 = sphi 0, %s103
      %s106 = sphi 0, %s105
      %s120 = sphi 0, %s106
      %s124 = sphi 0, %s124
      %s126 = sphi 0, %s124
      %s127 = sphi 0, %s126
      %s141 = sphi 0, %s127
      %s145 = sphi 0, %s145
      %s147 = sphi 0, %s145
      %s148 = sphi 0, %s147
      %s162 = sphi 0, %s148
      %s166 = sphi 0, %s166
      %s168 = sphi 0, %s166
      %s169 = sphi 0, %s168
      %s183 = sphi 0, %s169
      %s187 = sphi 0, %s187
      %s189 = sphi 0, %s187
      %s190 = sphi 0, %s189
      %s204 = sphi 0, %s190
      %s208 = sphi 0, %s208
      %s210 = sphi 0, %s208
      %s211 = sphi 0, %s210
      %s225 = sphi 0, %s211
      %s229 = sphi 0, %s229
      %s231 = sphi 0, %s229
      %s232 = sphi 0, %s231
      %s246 = sphi 0, %s232
      %s250 = sphi 0, %s250
      %s252 = sphi 0, %s250
      %s253 = sphi 0, %s252
      %s267 = sphi 0, %s253
      %s271 = sphi 0, %s271
      %s273 = sphi 0, %s271
      %s274 = sphi 0, %s273
      %s288 = sphi 0, %s274
      %s294 = sphi 0, %s296
      %s297 = sphi 0, %s294
      %s298 = sphi 0, %s297
      %s314 = sphi 0, %s298
    $region4: #{distilbert_class_forward.1} parent=1 // loop_header_branch
      %25 = sbr.rel (%p23) target = $region8
    $region5: #{distilbert_class_forward.1} parent=1 // loop_body
      %s27 = ssub.s32 %s22, 1
      %s28 = ssub.s32 %s22, 2
      %s29 = sadd.s32 %s22, 1
      %s30 = ssub.s32 %s22, %s29
      %p31 = scmp.eq.s32.totalorder %s30, 0
      %s33 = sadd.s32 %s32, 1
      %s34 = scalar_select %p31, %s32, %s33
      %p37 = pneg %p31
      %p38 = scmp.eq.s32.totalorder %s22, 1
      %p39 = por %p37, %p38
      %p40 = scmp.ne.s32.totalorder %s32, %s35
      %p41 = scmp.eq.s32.totalorder %s22, 0
      %p42 = por %p40, %p41
      %p43 = scmp.ne.s32.totalorder %s32, %s35
      %p44 = scmp.eq.s32.totalorder %s27, 1
      %p45 = por %p43, %p44
      %p46 = scmp.ne.s32.totalorder %s35, %s36
      %p47 = scmp.eq.s32.totalorder %s27, 0
      %p48 = por %p46, %p47
      %p49 = scmp.ne.s32.totalorder %s35, %s36
      %p50 = scmp.eq.s32.totalorder %s28, 1
      %p51 = por %p49, %p50
      %p53 = scmp.ne.s32.totalorder %s36, %s52
      %p54 = scmp.eq.s32.totalorder %s28, 0
      %p55 = por %p53, %p54
      %s56 = ssub.s32 %s22, %s29
      %p57 = scmp.eq.s32.totalorder %s56, 0
      %s59 = sadd.s32 %s58, 1
      %s60 = scalar_select %p57, %s58, %s59
      %p63 = pneg %p57
      %p64 = scmp.eq.s32.totalorder %s22, 1
      %p65 = por %p63, %p64
      %p66 = scmp.ne.s32.totalorder %s58, %s61
      %p67 = scmp.eq.s32.totalorder %s22, 0
      %p68 = por %p66, %p67
      %p69 = scmp.ne.s32.totalorder %s58, %s61
      %p70 = scmp.eq.s32.totalorder %s27, 1
      %p71 = por %p69, %p70
      %p72 = scmp.ne.s32.totalorder %s61, %s62
      %p73 = scmp.eq.s32.totalorder %s27, 0
      %p74 = por %p72, %p73
      %p75 = scmp.ne.s32.totalorder %s61, %s62
      %p76 = scmp.eq.s32.totalorder %s28, 1
      %p77 = por %p75, %p76
      %p79 = scmp.ne.s32.totalorder %s62, %s78
      %p80 = scmp.eq.s32.totalorder %s28, 0
      %p81 = por %p79, %p80
      %s83 = sadd.s32 %s82, 1
      %p86 = scmp.eq.s32.totalorder %s22, 1
      %p87 = scmp.ne.s32.totalorder %s82, %s84
      %p88 = scmp.eq.s32.totalorder %s22, 0
      %p89 = por %p87, %p88
      %p90 = scmp.ne.s32.totalorder %s82, %s84
      %p91 = scmp.eq.s32.totalorder %s27, 1
      %p92 = por %p90, %p91
      %p93 = scmp.ne.s32.totalorder %s84, %s85
      %p94 = scmp.eq.s32.totalorder %s27, 0
      %p95 = por %p93, %p94
      %p96 = scmp.ne.s32.totalorder %s84, %s85
      %p97 = scmp.eq.s32.totalorder %s28, 1
      %p98 = por %p96, %p97
      %p100 = scmp.ne.s32.totalorder %s85, %s99
      %p101 = scmp.eq.s32.totalorder %s28, 0
      %p102 = por %p100, %p101
      %s104 = sadd.s32 %s103, 1
      %p107 = scmp.eq.s32.totalorder %s22, 1
      %p108 = scmp.ne.s32.totalorder %s103, %s105
      %p109 = scmp.eq.s32.totalorder %s22, 0
      %p110 = por %p108, %p109
      %p111 = scmp.ne.s32.totalorder %s103, %s105
      %p112 = scmp.eq.s32.totalorder %s27, 1
      %p113 = por %p111, %p112
      %p114 = scmp.ne.s32.totalorder %s105, %s106
      %p115 = scmp.eq.s32.totalorder %s27, 0
      %p116 = por %p114, %p115
      %p117 = scmp.ne.s32.totalorder %s105, %s106
      %p118 = scmp.eq.s32.totalorder %s28, 1
      %p119 = por %p117, %p118
      %p121 = scmp.ne.s32.totalorder %s106, %s120
      %p122 = scmp.eq.s32.totalorder %s28, 0
      %p123 = por %p121, %p122
      %s125 = sadd.s32 %s124, 1
      %p128 = scmp.eq.s32.totalorder %s22, 1
      %p129 = scmp.ne.s32.totalorder %s124, %s126
      %p130 = scmp.eq.s32.totalorder %s22, 0
      %p131 = por %p129, %p130
      %p132 = scmp.ne.s32.totalorder %s124, %s126
      %p133 = scmp.eq.s32.totalorder %s27, 1
      %p134 = por %p132, %p133
      %p135 = scmp.ne.s32.totalorder %s126, %s127
      %p136 = scmp.eq.s32.totalorder %s27, 0
      %p137 = por %p135, %p136
      %p138 = scmp.ne.s32.totalorder %s126, %s127
      %p139 = scmp.eq.s32.totalorder %s28, 1
      %p140 = por %p138, %p139
      %p142 = scmp.ne.s32.totalorder %s127, %s141
      %p143 = scmp.eq.s32.totalorder %s28, 0
      %p144 = por %p142, %p143
      %s146 = sadd.s32 %s145, 1
      %p149 = scmp.eq.s32.totalorder %s22, 1
      %p150 = scmp.ne.s32.totalorder %s145, %s147
      %p151 = scmp.eq.s32.totalorder %s22, 0
      %p152 = por %p150, %p151
      %p153 = scmp.ne.s32.totalorder %s145, %s147
      %p154 = scmp.eq.s32.totalorder %s27, 1
      %p155 = por %p153, %p154
      %p156 = scmp.ne.s32.totalorder %s147, %s148
      %p157 = scmp.eq.s32.totalorder %s27, 0
      %p158 = por %p156, %p157
      %p159 = scmp.ne.s32.totalorder %s147, %s148
      %p160 = scmp.eq.s32.totalorder %s28, 1
      %p161 = por %p159, %p160
      %p163 = scmp.ne.s32.totalorder %s148, %s162
      %p164 = scmp.eq.s32.totalorder %s28, 0
      %p165 = por %p163, %p164
      %s167 = sadd.s32 %s166, 1
      %p170 = scmp.eq.s32.totalorder %s22, 1
      %p171 = scmp.ne.s32.totalorder %s166, %s168
      %p172 = scmp.eq.s32.totalorder %s22, 0
      %p173 = por %p171, %p172
      %p174 = scmp.ne.s32.totalorder %s166, %s168
      %p175 = scmp.eq.s32.totalorder %s27, 1
      %p176 = por %p174, %p175
      %p177 = scmp.ne.s32.totalorder %s168, %s169
      %p178 = scmp.eq.s32.totalorder %s27, 0
      %p179 = por %p177, %p178
      %p180 = scmp.ne.s32.totalorder %s168, %s169
      %p181 = scmp.eq.s32.totalorder %s28, 1
      %p182 = por %p180, %p181
      %p184 = scmp.ne.s32.totalorder %s169, %s183
      %p185 = scmp.eq.s32.totalorder %s28, 0
      %p186 = por %p184, %p185
      %s188 = sadd.s32 %s187, 1
      %p191 = scmp.eq.s32.totalorder %s22, 1
      %p192 = scmp.ne.s32.totalorder %s187, %s189
      %p193 = scmp.eq.s32.totalorder %s22, 0
      %p194 = por %p192, %p193
      %p195 = scmp.ne.s32.totalorder %s187, %s189
      %p196 = scmp.eq.s32.totalorder %s27, 1
      %p197 = por %p195, %p196
      %p198 = scmp.ne.s32.totalorder %s189, %s190
      %p199 = scmp.eq.s32.totalorder %s27, 0
      %p200 = por %p198, %p199
      %p201 = scmp.ne.s32.totalorder %s189, %s190
      %p202 = scmp.eq.s32.totalorder %s28, 1
      %p203 = por %p201, %p202
      %p205 = scmp.ne.s32.totalorder %s190, %s204
      %p206 = scmp.eq.s32.totalorder %s28, 0
      %p207 = por %p205, %p206
      %s209 = sadd.s32 %s208, 1
      %p212 = scmp.eq.s32.totalorder %s22, 1
      %p213 = scmp.ne.s32.totalorder %s208, %s210
      %p214 = scmp.eq.s32.totalorder %s22, 0
      %p215 = por %p213, %p214
      %p216 = scmp.ne.s32.totalorder %s208, %s210
      %p217 = scmp.eq.s32.totalorder %s27, 1
      %p218 = por %p216, %p217
      %p219 = scmp.ne.s32.totalorder %s210, %s211
      %p220 = scmp.eq.s32.totalorder %s27, 0
      %p221 = por %p219, %p220
      %p222 = scmp.ne.s32.totalorder %s210, %s211
      %p223 = scmp.eq.s32.totalorder %s28, 1
      %p224 = por %p222, %p223
      %p226 = scmp.ne.s32.totalorder %s211, %s225
      %p227 = scmp.eq.s32.totalorder %s28, 0
      %p228 = por %p226, %p227
      %s230 = sadd.s32 %s229, 1
      %p233 = scmp.eq.s32.totalorder %s22, 1
      %p234 = scmp.ne.s32.totalorder %s229, %s231
      %p235 = scmp.eq.s32.totalorder %s22, 0
      %p236 = por %p234, %p235
      %p237 = scmp.ne.s32.totalorder %s229, %s231
      %p238 = scmp.eq.s32.totalorder %s27, 1
      %p239 = por %p237, %p238
      %p240 = scmp.ne.s32.totalorder %s231, %s232
      %p241 = scmp.eq.s32.totalorder %s27, 0
      %p242 = por %p240, %p241
      %p243 = scmp.ne.s32.totalorder %s231, %s232
      %p244 = scmp.eq.s32.totalorder %s28, 1
      %p245 = por %p243, %p244
      %p247 = scmp.ne.s32.totalorder %s232, %s246
      %p248 = scmp.eq.s32.totalorder %s28, 0
      %p249 = por %p247, %p248
      %s251 = sadd.s32 %s250, 1
      %p254 = scmp.eq.s32.totalorder %s22, 1
      %p255 = scmp.ne.s32.totalorder %s250, %s252
      %p256 = scmp.eq.s32.totalorder %s22, 0
      %p257 = por %p255, %p256
      %p258 = scmp.ne.s32.totalorder %s250, %s252
      %p259 = scmp.eq.s32.totalorder %s27, 1
      %p260 = por %p258, %p259
      %p261 = scmp.ne.s32.totalorder %s252, %s253
      %p262 = scmp.eq.s32.totalorder %s27, 0
      %p263 = por %p261, %p262
      %p264 = scmp.ne.s32.totalorder %s252, %s253
      %p265 = scmp.eq.s32.totalorder %s28, 1
      %p266 = por %p264, %p265
      %p268 = scmp.ne.s32.totalorder %s253, %s267
      %p269 = scmp.eq.s32.totalorder %s28, 0
      %p270 = por %p268, %p269
      %s272 = sadd.s32 %s271, 1
      %p275 = scmp.eq.s32.totalorder %s22, 1
      %p276 = scmp.ne.s32.totalorder %s271, %s273
      %p277 = scmp.eq.s32.totalorder %s22, 0
      %p278 = por %p276, %p277
      %p279 = scmp.ne.s32.totalorder %s271, %s273
      %p280 = scmp.eq.s32.totalorder %s27, 1
      %p281 = por %p279, %p280
      %p282 = scmp.ne.s32.totalorder %s273, %s274
      %p283 = scmp.eq.s32.totalorder %s27, 0
      %p284 = por %p282, %p283
      %p285 = scmp.ne.s32.totalorder %s273, %s274
      %p286 = scmp.eq.s32.totalorder %s28, 1
      %p287 = por %p285, %p286
      %p289 = scmp.ne.s32.totalorder %s274, %s288
      %p290 = scmp.eq.s32.totalorder %s28, 0
      %p291 = por %p289, %p290
      %s292 = ssub.s32 %s22, %s29
      %p293 = scmp.eq.s32.totalorder %s292, 0
      %s295 = sadd.s32 %s294, 1
      %s296 = scalar_select %p293, %s294, %s295
      %p299 = pneg %p293
      %p300 = scmp.eq.s32.totalorder %s22, 1
      %p301 = por %p299, %p300
      %p302 = scmp.ne.s32.totalorder %s294, %s297
      %p303 = scmp.eq.s32.totalorder %s22, 0
      %p304 = por %p302, %p303
      %p305 = scmp.ne.s32.totalorder %s294, %s297
      %p306 = scmp.eq.s32.totalorder %s27, 1
      %p307 = por %p305, %p306
      %p308 = scmp.ne.s32.totalorder %s297, %s298
      %p309 = scmp.eq.s32.totalorder %s27, 0
      %p310 = por %p308, %p309
      %p311 = scmp.ne.s32.totalorder %s297, %s298
      %p312 = scmp.eq.s32.totalorder %s28, 1
      %p313 = por %p311, %p312
      %p315 = scmp.ne.s32.totalorder %s298, %s314
      %p316 = scmp.eq.s32.totalorder %s28, 0
      %p317 = por %p315, %p316
      %p318 = scmp.le.s32.totalorder 1, %s22
      %p319 = scmp.lt.s32.totalorder %s22, 3
      %p320 = pnand %p318, %p319
      %p321 = pneg %p320
      // Predicated region
      $region9: #{distilbert_class_forward.1} parent=5 // pred_check
        _
      $region10: #{distilbert_class_forward.1} parent=5 // pred_check_branch
        %323 = sbr.rel (%p320) target = $region12
      $region11: #{distilbert_class_forward.1} parent=5 // pred_region
        %s324 = ssub.s32 %s22, 1
        // Predicated region
        $region13: #{distilbert_class_forward.1} parent=11 // pred_check
          %p325 = pneg %p95
        $region14: #{distilbert_class_forward.1} parent=11 // pred_check_branch
          %327 = sbr.rel (%p325) target = $region16
        $region15: #{distilbert_class_forward.1} parent=11 // pred_region
          _
        $region16: #{distilbert_class_forward.1} parent=11 // pred_fallthru
          _
        // Predicated region
        $region17: #{distilbert_class_forward.1} parent=11 // pred_check
          %p328 = pneg %p116
        $region18: #{distilbert_class_forward.1} parent=11 // pred_check_branch
          %330 = sbr.rel (%p328) target = $region20
        $region19: #{distilbert_class_forward.1} parent=11 // pred_region
          %s332 = ssub.s32 128, 128
          %333 = vsyncadd [#allocation3], %s332
          %s335 = sshll.u32 [#allocation2], 4
          %s336 = int_to_ptr.vmem [resolvable:$true] %s335
          %338 = dma.hbm_to_vmem [thread:$0]  %s3, 128, %s336, [#allocation3]
        $region20: #{distilbert_class_forward.1} parent=11 // pred_fallthru
          _
        // Predicated region
        $region21: #{distilbert_class_forward.1} parent=11 // pred_check
          %p339 = pneg %p137
        $region22: #{distilbert_class_forward.1} parent=11 // pred_check_branch
          %341 = sbr.rel (%p339) target = $region24
        $region23: #{distilbert_class_forward.1} parent=11 // pred_region
          _
        $region24: #{distilbert_class_forward.1} parent=11 // pred_fallthru
          _
        // Predicated region
        $region25: #{distilbert_class_forward.1} parent=11 // pred_check
          %p342 = pneg %p158
        $region26: #{distilbert_class_forward.1} parent=11 // pred_check_branch
          %344 = sbr.rel (%p342) target = $region28
        $region27: #{distilbert_class_forward.1} parent=11 // pred_region
          _
        $region28: #{distilbert_class_forward.1} parent=11 // pred_fallthru
          _
        // Predicated region
        $region29: #{distilbert_class_forward.1} parent=11 // pred_check
          %p345 = pneg %p179
        $region30: #{distilbert_class_forward.1} parent=11 // pred_check_branch
          %347 = sbr.rel (%p345) target = $region32
        $region31: #{distilbert_class_forward.1} parent=11 // pred_region
          _
        $region32: #{distilbert_class_forward.1} parent=11 // pred_fallthru
          _
        // Predicated region
        $region33: #{distilbert_class_forward.1} parent=11 // pred_check
          %p348 = pneg %p200
        $region34: #{distilbert_class_forward.1} parent=11 // pred_check_branch
          %350 = sbr.rel (%p348) target = $region36
        $region35: #{distilbert_class_forward.1} parent=11 // pred_region
          _
        $region36: #{distilbert_class_forward.1} parent=11 // pred_fallthru
          _
        // Predicated region
        $region37: #{distilbert_class_forward.1} parent=11 // pred_check
          %p351 = pneg %p221
        $region38: #{distilbert_class_forward.1} parent=11 // pred_check_branch
          %353 = sbr.rel (%p351) target = $region40
        $region39: #{distilbert_class_forward.1} parent=11 // pred_region
          _
        $region40: #{distilbert_class_forward.1} parent=11 // pred_fallthru
          _
        // Predicated region
        $region41: #{distilbert_class_forward.1} parent=11 // pred_check
          %p354 = pneg %p242
        $region42: #{distilbert_class_forward.1} parent=11 // pred_check_branch
          %356 = sbr.rel (%p354) target = $region44
        $region43: #{distilbert_class_forward.1} parent=11 // pred_region
          _
        $region44: #{distilbert_class_forward.1} parent=11 // pred_fallthru
          _
        // Predicated region
        $region45: #{distilbert_class_forward.1} parent=11 // pred_check
          %p357 = pneg %p263
        $region46: #{distilbert_class_forward.1} parent=11 // pred_check_branch
          %359 = sbr.rel (%p357) target = $region48
        $region47: #{distilbert_class_forward.1} parent=11 // pred_region
          _
        $region48: #{distilbert_class_forward.1} parent=11 // pred_fallthru
          _
        // Predicated region
        $region49: #{distilbert_class_forward.1} parent=11 // pred_check
          %p360 = pneg %p284
        $region50: #{distilbert_class_forward.1} parent=11 // pred_check_branch
          %362 = sbr.rel (%p360) target = $region52
        $region51: #{distilbert_class_forward.1} parent=11 // pred_region
          _
        $region52: #{distilbert_class_forward.1} parent=11 // pred_fallthru
          _
      $region12: #{distilbert_class_forward.1} parent=5 // pred_fallthru
        _
      %p363 = scmp.lt.s32.totalorder %s22, 2
      // Predicated region
      $region53: #{distilbert_class_forward.1} parent=5 // pred_check
        %p364 = pneg %p363
      $region54: #{distilbert_class_forward.1} parent=5 // pred_check_branch
        %366 = sbr.rel (%p364) target = $region56
      $region55: #{distilbert_class_forward.1} parent=5 // pred_region
        // Predicated region
        $region57: #{distilbert_class_forward.1} parent=55 // pred_check
          %p367 = pneg %p42
        $region58: #{distilbert_class_forward.1} parent=55 // pred_check_branch
          %369 = sbr.rel (%p367) target = $region60
        $region59: #{distilbert_class_forward.1} parent=55 // pred_region
          %p370 = scmp.lt.s32.totalorder %s22, 1
          %s371 = scalar_select %p370, %s22, 1
          %s372 = smul.addr %s371, 8
          %s373 = scalar_lea.vmem %s0, %s372
        $region60: #{distilbert_class_forward.1} parent=55 // pred_fallthru
          _
        // Predicated region
        $region61: #{distilbert_class_forward.1} parent=55 // pred_check
          %p374 = pneg %p68
        $region62: #{distilbert_class_forward.1} parent=55 // pred_check_branch
          %376 = sbr.rel (%p374) target = $region64
        $region63: #{distilbert_class_forward.1} parent=55 // pred_region
          %p377 = scmp.lt.s32.totalorder %s22, 1
          %s378 = scalar_select %p377, %s22, 1
          %s379 = scalar_lea.vmem %s1, %s378
        $region64: #{distilbert_class_forward.1} parent=55 // pred_fallthru
          _
      $region56: #{distilbert_class_forward.1} parent=5 // pred_fallthru
        _
      %p380 = scmp.le.s32.totalorder 1, %s22
      %p381 = scmp.lt.s32.totalorder %s22, 3
      %p382 = pnand %p380, %p381
      %p383 = pneg %p382
      // Predicated region
      $region65: #{distilbert_class_forward.1} parent=5 // pred_check
        _
      $region66: #{distilbert_class_forward.1} parent=5 // pred_check_branch
        %385 = sbr.rel (%p382) target = $region68
      $region67: #{distilbert_class_forward.1} parent=5 // pred_region
        %s386 = ssub.s32 %s22, 1
        // Predicated region
        $region69: #{distilbert_class_forward.1} parent=67 // pred_check
          %p387 = pneg %p116
        $region70: #{distilbert_class_forward.1} parent=67 // pred_check_branch
          %389 = sbr.rel (%p387) target = $region72
        $region71: #{distilbert_class_forward.1} parent=67 // pred_region
          %390 = dma.done [#allocation3], 128
        $region72: #{distilbert_class_forward.1} parent=67 // pred_fallthru
          _
        %p391 = scmp.lt.s32.totalorder %s27, 1
        %s392 = scalar_select %p391, %s27, 1
        %s393 = smul.addr %s392, 8
        %s394 = scalar_lea.vmem %s0, %s393
        %p395 = pneg %p48
        %p396 = pneg %p45
        %p397 = scmp.lt.s32.totalorder %s27, 1
        %s398 = scalar_select %p397, %s27, 1
        %s399 = scalar_lea.vmem %s1, %s398
        %p400 = pneg %p74
        %p401 = pneg %p71
        %p402 = pneg %p95
        %p403 = pneg %p92
        %p404 = pneg %p116
        %p405 = pneg %p113
        %p406 = pneg %p137
        %p407 = pneg %p134
        %p408 = pneg %p158
        %p409 = pneg %p155
        %p410 = pneg %p179
        %p411 = pneg %p176
        %p412 = pneg %p200
        %p413 = pneg %p197
        %p414 = pneg %p221
        %p415 = pneg %p218
        %p416 = pneg %p242
        %p417 = pneg %p239
        %p418 = pneg %p263
        %p419 = pneg %p260
        %p420 = pneg %p284
        %p421 = pneg %p281
        %p422 = pneg %p310
        %p423 = pneg %p307
        %s424 = sand.u32 %s297, 1
        %s425 = scalar_lea.sflag [#allocation4], %s424
        %s426 = sand.u32 %s297, 1
        %s427 = scalar_lea.vmem [#allocation5], %s426
        %p428 = scmp.lt.s32.totalorder %s27, 1
        %s429 = scalar_select %p428, %s27, 1
        %s430 = smul.addr %s429, 8
        %s431 = scalar_lea.vmem %s0, %s430
        %p432 = scmp.lt.s32.totalorder %s27, 1
        %s433 = scalar_select %p432, %s27, 1
        %s434 = scalar_lea.vmem %s1, %s433
        %v436 = vld [vmem:[%s431] sm:$0xff]
        %v437 = vlaneseq
        %v438 = vand.u32 %v437, 127
        %439 = vset.pattern.permute.xlu0 0
        %440 = vperm.xlu0 %439, %v436
        %v441 = vpop.permute.xlu0 %440
        %vm442 = vcmp.eq.s32.totalorder %v438, %v441
        %v443 = vsel %vm442, 1, 0
        %v444 = vcvt.s32.f32 %v443
        %v445 = vld [vmem:[%s2] sm:$0xff]
        %v446 = vld [vmem:[%s2 + $0x8] sm:$0xff]
        %v447 = vld [vmem:[%s2 + $0x10] sm:$0xff]
        %v448 = vld [vmem:[%s2 + $0x18] sm:$0xff]
        %v449 = vld [vmem:[%s2 + $0x20] sm:$0xff]
        %v450 = vld [vmem:[%s2 + $0x28] sm:$0xff]
        %v451 = vld [vmem:[%s2 + $0x30] sm:$0xff]
        %v452 = vld [vmem:[%s2 + $0x38] sm:$0xff]
        %v453 = vld [vmem:[%s2 + $0x40] sm:$0xff]
        %v454 = vld [vmem:[%s2 + $0x48] sm:$0xff]
        %v455 = vld [vmem:[%s2 + $0x50] sm:$0xff]
        %v456 = vld [vmem:[%s2 + $0x58] sm:$0xff]
        %v457 = vld [vmem:[%s2 + $0x60] sm:$0xff]
        %v458 = vld [vmem:[%s2 + $0x68] sm:$0xff]
        %v459 = vld [vmem:[%s2 + $0x70] sm:$0xff]
        %v460 = vld [vmem:[%s2 + $0x78] sm:$0xff]
        %v461 = vld [vmem:[#allocation2] sm:$0xff]
        %462 = vmatprep.subr.mxu0 0.0
        %463 = vmatpush1.msra.mxu0 %v460
        %464 = vmatprep.subr.mxu0 0.0
        %465 = vmatpush1.msra.mxu0 %v459
        %466 = vmatprep.subr.mxu0 0.0
        %467 = vmatpush1.msra.mxu0 %v458
        %468 = vmatprep.subr.mxu0 0.0
        %469 = vmatpush1.msra.mxu0 %v457
        %470 = vmatprep.subr.mxu0 0.0
        %471 = vmatpush1.msra.mxu0 %v456
        %472 = vmatprep.subr.mxu0 0.0
        %473 = vmatpush1.msra.mxu0 %v455
        %474 = vmatprep.subr.mxu0 0.0
        %475 = vmatpush1.msra.mxu0 %v454
        %476 = vmatprep.subr.mxu0 0.0
        %477 = vmatpush1.msra.mxu0 %v453
        %478 = vmatprep.subr.mxu0 0.0
        %479 = vmatpush1.msra.mxu0 %v452
        %480 = vmatprep.subr.mxu0 0.0
        %481 = vmatpush1.msra.mxu0 %v451
        %482 = vmatprep.subr.mxu0 0.0
        %483 = vmatpush1.msra.mxu0 %v450
        %484 = vmatprep.subr.mxu0 0.0
        %485 = vmatpush1.msra.mxu0 %v449
        %486 = vmatprep.subr.mxu0 0.0
        %487 = vmatpush1.msra.mxu0 %v448
        %488 = vmatprep.subr.mxu0 0.0
        %489 = vmatpush1.msra.mxu0 %v447
        %490 = vmatprep.subr.mxu0 0.0
        %491 = vmatpush1.msra.mxu0 %v446
        %492 = vmatprep.subr.mxu0 0.0
        %493 = vmatpush1.msra.mxu0 %v445
        %494 = vmatprep.subr.mxu0 0.0
        %495 = vmatpush2.msra.mxu0 0.0
        %496 = vmatprep.subr.mxu0 0.0
        %497 = vmatpush2.msra.mxu0 0.0
        %498 = vmatprep.subr.mxu0 0.0
        %499 = vmatpush2.msra.mxu0 0.0
        %500 = vmatprep.subr.mxu0 0.0
        %501 = vmatpush2.msra.mxu0 0.0
        %502 = vmatprep.subr.mxu0 0.0
        %503 = vmatpush2.msra.mxu0 0.0
        %504 = vmatprep.subr.mxu0 0.0
        %505 = vmatpush2.msra.mxu0 0.0
        %506 = vmatprep.subr.mxu0 0.0
        %507 = vmatpush2.msra.mxu0 0.0
        %508 = vmatprep.subr.mxu0 0.0
        %509 = vmatpush2.msra.mxu0 0.0
        %510 = vmatprep.subr.mxu0 0.0
        %511 = vmatpush2.msra.mxu0 0.0
        %512 = vmatprep.subr.mxu0 0.0
        %513 = vmatpush2.msra.mxu0 0.0
        %514 = vmatprep.subr.mxu0 0.0
        %515 = vmatpush2.msra.mxu0 0.0
        %516 = vmatprep.subr.mxu0 0.0
        %517 = vmatpush2.msra.mxu0 0.0
        %518 = vmatprep.subr.mxu0 0.0
        %519 = vmatpush2.msra.mxu0 0.0
        %520 = vmatprep.subr.mxu0 0.0
        %521 = vmatpush2.msra.mxu0 0.0
        %522 = vmatprep.subr.mxu0 0.0
        %523 = vmatpush2.msra.mxu0 0.0
        %524 = vmatprep.subr.mxu0 0.0
        %525 = vmatpush2.msra.mxu0 0.0
        %526 = vmatprep.mubr.f32.mxu0 0.0
        %527 = vmatmul.mubr.f32.gmra.mxu0 %v444
        %v528 = vpop.f32.mrf.mxu0
        %v529 = vadd.f32 %v461, %v528
        %v530 = vpop.f32.mrf.mxu0
        %531 = vdwg.mxu0
        %v532 = vld [vmem:[%s4] sm:$0xf]
        %vm533 = vcmask 523264
        %v534 = vsel %vm533, %v529, 0.0
        %535 = vadd.xlane.f32.xlu0 %v534
        %v536 = vpop.xlane.xlu0 %535
        %v537 = vrcp.pop 64.0
        %v538 = vmul.f32 %v536, %v537
        %v539 = vsub.f32 %v529, %v538
        %v540 = vmul.f32 %v539, %v539
        %v541 = vsel %vm533, %v540, 0.0
        %542 = vadd.xlane.f32.xlu0 %v541
        %v543 = vpop.xlane.xlu0 %542
        %v544 = vmul.f32 %v543, %v537
        %v545 = vadd.f32 %v544, 1e-12
        %v546 = vrsqrt.pop %v545
        %v547 = vmul.f32 %v539, %v546
        %v548 = vlaneseq
        %v549 = vshrl.u32 %v548, 7
        %v550 = vsub.s32 0, %v549
        %v551 = vrot.slane %v532, %v550
        %v552 = vmul.f32 %v547, %v551
        %v553 = vlaneseq
        %v554 = vshrl.u32 %v553, 7
        %v555 = vsub.s32 1, %v554
        %v556 = vrot.slane %v532, %v555
        %v557 = vadd.f32 %v552, %v556
        %v558 = vld [vmem:[%s434] sm:$0x1]
        %v559 = vsub.f32 %v558, 1.0
        %v560 = vmul.f32 %v559, 1e+09
        %v561 = vld [vmem:[%s11] sm:$0xff]
        %v562 = vld [vmem:[%s11 + $0x8] sm:$0xff]
        %v563 = vld [vmem:[%s7] sm:$0xff]
        %v564 = vld [vmem:[%s7 + $0x8] sm:$0xff]
        %v565 = vld [vmem:[%s7 + $0x10] sm:$0xff]
        %v566 = vld [vmem:[%s7 + $0x18] sm:$0xff]
        %v567 = vld [vmem:[%s7 + $0x20] sm:$0xff]
        %v568 = vld [vmem:[%s7 + $0x28] sm:$0xff]
        %v569 = vld [vmem:[%s7 + $0x30] sm:$0xff]
        %v570 = vld [vmem:[%s7 + $0x38] sm:$0xff]
        %v571 = vpack.c.bf16 %v557, %v557
        %v572 = vlaneseq
        %v573 = vshrl.u32 %v572, 7
        %v574 = vsub.s32 0, %v573
        %v575 = vrot.slane %v561, %v574
        %v576 = vlaneseq
        %v577 = vshrl.u32 %v576, 7
        %v578 = vsub.s32 0, %v577
        %v579 = vrot.slane %v562, %v578
        %v588 = vunpack.c.l.b16 %v563
        %v589 = vunpack.c.h.b16 %v563
        %v590 = vunpack.c.l.b16 %v564
        %v591 = vunpack.c.h.b16 %v564
        %v592 = vunpack.c.l.b16 %v565
        %v593 = vunpack.c.h.b16 %v565
        %v594 = vunpack.c.l.b16 %v566
        %v595 = vunpack.c.h.b16 %v566
        %v596 = vunpack.c.l.b16 %v567
        %v597 = vunpack.c.h.b16 %v567
        %v598 = vunpack.c.l.b16 %v568
        %v599 = vunpack.c.h.b16 %v568
        %v600 = vunpack.c.l.b16 %v569
        %v601 = vunpack.c.h.b16 %v569
        %v602 = vunpack.c.l.b16 %v570
        %v603 = vunpack.c.h.b16 %v570
        %v604 = vpack.c.b16 %v590, %v588
        %v605 = vpack.c.b16 %v591, %v589
        %v606 = vpack.c.b16 %v594, %v592
        %v607 = vpack.c.b16 %v595, %v593
        %v608 = vpack.c.b16 %v598, %v596
        %v609 = vpack.c.b16 %v599, %v597
        %v610 = vpack.c.b16 %v602, %v600
        %v611 = vpack.c.b16 %v603, %v601
        %v621 = vsel %vm533, %v571, 0
        %623 = vmatprep.subr.bf16.mxu0 0
        %624 = vmatpush1.bf16.msra.mxu0 0
        %625 = vmatprep.subr.bf16.mxu0 0
        %626 = vmatpush1.bf16.msra.mxu0 0
        %627 = vmatprep.subr.bf16.mxu0 0
        %628 = vmatpush1.bf16.msra.mxu0 0
        %629 = vmatprep.subr.bf16.mxu0 0
        %630 = vmatpush1.bf16.msra.mxu0 0
        %631 = vmatprep.subr.bf16.mxu0 %v611
        %632 = vmatpush1.bf16.msra.mxu0 %v610
        %633 = vmatprep.subr.bf16.mxu0 %v609
        %634 = vmatpush1.bf16.msra.mxu0 %v608
        %635 = vmatprep.subr.bf16.mxu0 %v607
        %636 = vmatpush1.bf16.msra.mxu0 %v606
        %637 = vmatprep.subr.bf16.mxu0 %v605
        %638 = vmatpush1.bf16.msra.mxu0 %v604
        %639 = vmatprep.subr.bf16.mxu0 0
        %640 = vmatpush2.bf16.msra.mxu0 0
        %641 = vmatprep.subr.bf16.mxu0 0
        %642 = vmatpush2.bf16.msra.mxu0 0
        %643 = vmatprep.subr.bf16.mxu0 0
        %644 = vmatpush2.bf16.msra.mxu0 0
        %645 = vmatprep.subr.bf16.mxu0 0
        %646 = vmatpush2.bf16.msra.mxu0 0
        %647 = vmatprep.subr.bf16.mxu0 0
        %648 = vmatpush2.bf16.msra.mxu0 0
        %649 = vmatprep.subr.bf16.mxu0 0
        %650 = vmatpush2.bf16.msra.mxu0 0
        %651 = vmatprep.subr.bf16.mxu0 0
        %652 = vmatpush2.bf16.msra.mxu0 0
        %653 = vmatprep.subr.bf16.mxu0 0
        %654 = vmatpush2.bf16.msra.mxu0 0
        %655 = vmatprep.mubr.bf16.mxu0 0
        %656 = vmatmul.mubr.bf16.gmra.mxu0 %v621
        %v657 = vpop.f32.mrf.mxu0
        %v658 = vadd.f32 %v575, %v657
        %v659 = vpop.f32.mrf.mxu0
        %v660 = vadd.f32 %v579, %v659
        %v661 = vpop.f32.mrf.mxu0
        %v662 = vpop.f32.mrf.mxu0
        %663 = vdwg.mxu0
        %665 = vrot.lane.b32.xlu0 %v658, 112
        %v666 = vpop.permute.xlu0 %665
        %668 = vrot.lane.b32.xlu0 %v658, 96
        %v669 = vpop.permute.xlu0 %668
        %671 = vrot.lane.b32.xlu0 %v658, 80
        %v672 = vpop.permute.xlu0 %671
        %v674 = vcombine.low %v658, %v669
        %v675 = vcombine.high %v658, %v669
        %v677 = vunpack.c.l.s4 1983009808
        %v678 = vunpack.c.0.s8 %v677
        %v679 = vlaneseq
        %v680 = vshrl.u32 %v679, 7
        %v681 = vsub.s32 %v678, %v680
        %v682 = vrot.slane %v674, %v681
        %v684 = vunpack.c.l.s4 1983009808
        %v685 = vunpack.c.0.s8 %v684
        %v686 = vlaneseq
        %v687 = vshrl.u32 %v686, 7
        %v688 = vsub.s32 %v685, %v687
        %v689 = vrot.slane %v675, %v688
        %v690 = vcombine.low %v666, %v672
        %v691 = vcombine.high %v666, %v672
        %v693 = vunpack.c.l.s4 1983009808
        %v694 = vunpack.c.0.s8 %v693
        %v695 = vlaneseq
        %v696 = vshrl.u32 %v695, 7
        %v697 = vsub.s32 %v694, %v696
        %v698 = vrot.slane %v690, %v697
        %v700 = vunpack.c.l.s4 1983009808
        %v701 = vunpack.c.0.s8 %v700
        %v702 = vlaneseq
        %v703 = vshrl.u32 %v702, 7
        %v704 = vsub.s32 %v701, %v703
        %v705 = vrot.slane %v691, %v704
        %v706 = vcombine.low %v682, %v698
        %v707 = vcombine.high %v682, %v698
        %v709 = vunpack.c.l.s4 1934713408
        %v710 = vunpack.c.0.s8 %v709
        %v711 = vlaneseq
        %v712 = vshrl.u32 %v711, 7
        %v713 = vsub.s32 %v710, %v712
        %v714 = vrot.slane %v706, %v713
        %v716 = vunpack.c.l.s4 1934713408
        %v717 = vunpack.c.0.s8 %v716
        %v718 = vlaneseq
        %v719 = vshrl.u32 %v718, 7
        %v720 = vsub.s32 %v717, %v719
        %v721 = vrot.slane %v707, %v720
        %v722 = vcombine.low %v689, %v705
        %v723 = vcombine.high %v689, %v705
        %v725 = vunpack.c.l.s4 1934713408
        %v726 = vunpack.c.0.s8 %v725
        %v727 = vlaneseq
        %v728 = vshrl.u32 %v727, 7
        %v729 = vsub.s32 %v726, %v728
        %v730 = vrot.slane %v722, %v729
        %v732 = vunpack.c.l.s4 1934713408
        %v733 = vunpack.c.0.s8 %v732
        %v734 = vlaneseq
        %v735 = vshrl.u32 %v734, 7
        %v736 = vsub.s32 %v733, %v735
        %v737 = vrot.slane %v723, %v736
        %v738 = vcombine.high %v714, 0.0
        %v739 = vcombine.high %v721, 0.0
        %v740 = vcombine.high %v730, 0.0
        %v741 = vcombine.high %v737, 0.0
        %v742 = vcombine.low %v714, %v721
        %v744 = vunpack.c.l.s4 1983009808
        %v745 = vunpack.c.0.s8 %v744
        %v746 = vlaneseq
        %v747 = vshrl.u32 %v746, 7
        %v748 = vsub.s32 %v745, %v747
        %v749 = vrot.slane %v742, %v748
        %v750 = vcombine.low %v738, %v739
        %v752 = vunpack.c.l.s4 1983009808
        %v753 = vunpack.c.0.s8 %v752
        %v754 = vlaneseq
        %v755 = vshrl.u32 %v754, 7
        %v756 = vsub.s32 %v753, %v755
        %v757 = vrot.slane %v750, %v756
        %v758 = vcombine.low %v730, %v737
        %v760 = vunpack.c.l.s4 1983009808
        %v761 = vunpack.c.0.s8 %v760
        %v762 = vlaneseq
        %v763 = vshrl.u32 %v762, 7
        %v764 = vsub.s32 %v761, %v763
        %v765 = vrot.slane %v758, %v764
        %v766 = vcombine.low %v740, %v741
        %v768 = vunpack.c.l.s4 1983009808
        %v769 = vunpack.c.0.s8 %v768
        %v770 = vlaneseq
        %v771 = vshrl.u32 %v770, 7
        %v772 = vsub.s32 %v769, %v771
        %v773 = vrot.slane %v766, %v772
        %v774 = vcombine.low %v749, %v757
        %v775 = vcombine.high %v749, %v757
        %v777 = vunpack.c.l.s4 1934713408
        %v778 = vunpack.c.0.s8 %v777
        %v779 = vlaneseq
        %v780 = vshrl.u32 %v779, 7
        %v781 = vsub.s32 %v778, %v780
        %v782 = vrot.slane %v774, %v781
        %v784 = vunpack.c.l.s4 1934713408
        %v785 = vunpack.c.0.s8 %v784
        %v786 = vlaneseq
        %v787 = vshrl.u32 %v786, 7
        %v788 = vsub.s32 %v785, %v787
        %v789 = vrot.slane %v775, %v788
        %v790 = vcombine.low %v765, %v773
        %v791 = vcombine.high %v765, %v773
        %v793 = vunpack.c.l.s4 1934713408
        %v794 = vunpack.c.0.s8 %v793
        %v795 = vlaneseq
        %v796 = vshrl.u32 %v795, 7
        %v797 = vsub.s32 %v794, %v796
        %v798 = vrot.slane %v790, %v797
        %v800 = vunpack.c.l.s4 1934713408
        %v801 = vunpack.c.0.s8 %v800
        %v802 = vlaneseq
        %v803 = vshrl.u32 %v802, 7
        %v804 = vsub.s32 %v801, %v803
        %v805 = vrot.slane %v791, %v804
        %v806 = vcombine.low %v782, %v798
        %v807 = vcombine.high %v782, %v798
        %v808 = vcombine.low %v789, %v805
        %v809 = vcombine.high %v789, %v805
        %810 = vrot.lane.b32.xlu0 %v658, 64
        %v811 = vpop.permute.xlu0 %810
        %812 = vrot.lane.b32.xlu0 %v666, 64
        %v813 = vpop.permute.xlu0 %812
        %814 = vrot.lane.b32.xlu0 %v669, 64
        %v815 = vpop.permute.xlu0 %814
        %816 = vrot.lane.b32.xlu0 %v672, 64
        %v817 = vpop.permute.xlu0 %816
        %v822 = vcombine.low %v811, %v815
        %v823 = vcombine.high %v811, %v815
        %v825 = vunpack.c.l.s4 1983009808
        %v826 = vunpack.c.0.s8 %v825
        %v827 = vlaneseq
        %v828 = vshrl.u32 %v827, 7
        %v829 = vsub.s32 %v826, %v828
        %v830 = vrot.slane %v822, %v829
        %v832 = vunpack.c.l.s4 1983009808
        %v833 = vunpack.c.0.s8 %v832
        %v834 = vlaneseq
        %v835 = vshrl.u32 %v834, 7
        %v836 = vsub.s32 %v833, %v835
        %v837 = vrot.slane %v823, %v836
        %v838 = vcombine.low %v813, %v817
        %v839 = vcombine.high %v813, %v817
        %v841 = vunpack.c.l.s4 1983009808
        %v842 = vunpack.c.0.s8 %v841
        %v843 = vlaneseq
        %v844 = vshrl.u32 %v843, 7
        %v845 = vsub.s32 %v842, %v844
        %v846 = vrot.slane %v838, %v845
        %v848 = vunpack.c.l.s4 1983009808
        %v849 = vunpack.c.0.s8 %v848
        %v850 = vlaneseq
        %v851 = vshrl.u32 %v850, 7
        %v852 = vsub.s32 %v849, %v851
        %v853 = vrot.slane %v839, %v852
        %v854 = vcombine.low %v830, %v846
        %v855 = vcombine.high %v830, %v846
        %v857 = vunpack.c.l.s4 1934713408
        %v858 = vunpack.c.0.s8 %v857
        %v859 = vlaneseq
        %v860 = vshrl.u32 %v859, 7
        %v861 = vsub.s32 %v858, %v860
        %v862 = vrot.slane %v854, %v861
        %v864 = vunpack.c.l.s4 1934713408
        %v865 = vunpack.c.0.s8 %v864
        %v866 = vlaneseq
        %v867 = vshrl.u32 %v866, 7
        %v868 = vsub.s32 %v865, %v867
        %v869 = vrot.slane %v855, %v868
        %v870 = vcombine.low %v837, %v853
        %v871 = vcombine.high %v837, %v853
        %v873 = vunpack.c.l.s4 1934713408
        %v874 = vunpack.c.0.s8 %v873
        %v875 = vlaneseq
        %v876 = vshrl.u32 %v875, 7
        %v877 = vsub.s32 %v874, %v876
        %v878 = vrot.slane %v870, %v877
        %v880 = vunpack.c.l.s4 1934713408
        %v881 = vunpack.c.0.s8 %v880
        %v882 = vlaneseq
        %v883 = vshrl.u32 %v882, 7
        %v884 = vsub.s32 %v881, %v883
        %v885 = vrot.slane %v871, %v884
        %v886 = vcombine.high %v862, 0.0
        %v887 = vcombine.high %v869, 0.0
        %v888 = vcombine.high %v878, 0.0
        %v889 = vcombine.high %v885, 0.0
        %v890 = vcombine.low %v862, %v869
        %v892 = vunpack.c.l.s4 1983009808
        %v893 = vunpack.c.0.s8 %v892
        %v894 = vlaneseq
        %v895 = vshrl.u32 %v894, 7
        %v896 = vsub.s32 %v893, %v895
        %v897 = vrot.slane %v890, %v896
        %v898 = vcombine.low %v886, %v887
        %v900 = vunpack.c.l.s4 1983009808
        %v901 = vunpack.c.0.s8 %v900
        %v902 = vlaneseq
        %v903 = vshrl.u32 %v902, 7
        %v904 = vsub.s32 %v901, %v903
        %v905 = vrot.slane %v898, %v904
        %v906 = vcombine.low %v878, %v885
        %v908 = vunpack.c.l.s4 1983009808
        %v909 = vunpack.c.0.s8 %v908
        %v910 = vlaneseq
        %v911 = vshrl.u32 %v910, 7
        %v912 = vsub.s32 %v909, %v911
        %v913 = vrot.slane %v906, %v912
        %v914 = vcombine.low %v888, %v889
        %v916 = vunpack.c.l.s4 1983009808
        %v917 = vunpack.c.0.s8 %v916
        %v918 = vlaneseq
        %v919 = vshrl.u32 %v918, 7
        %v920 = vsub.s32 %v917, %v919
        %v921 = vrot.slane %v914, %v920
        %v922 = vcombine.low %v897, %v905
        %v923 = vcombine.high %v897, %v905
        %v925 = vunpack.c.l.s4 1934713408
        %v926 = vunpack.c.0.s8 %v925
        %v927 = vlaneseq
        %v928 = vshrl.u32 %v927, 7
        %v929 = vsub.s32 %v926, %v928
        %v930 = vrot.slane %v922, %v929
        %v932 = vunpack.c.l.s4 1934713408
        %v933 = vunpack.c.0.s8 %v932
        %v934 = vlaneseq
        %v935 = vshrl.u32 %v934, 7
        %v936 = vsub.s32 %v933, %v935
        %v937 = vrot.slane %v923, %v936
        %v938 = vcombine.low %v913, %v921
        %v939 = vcombine.high %v913, %v921
        %v941 = vunpack.c.l.s4 1934713408
        %v942 = vunpack.c.0.s8 %v941
        %v943 = vlaneseq
        %v944 = vshrl.u32 %v943, 7
        %v945 = vsub.s32 %v942, %v944
        %v946 = vrot.slane %v938, %v945
        %v948 = vunpack.c.l.s4 1934713408
        %v949 = vunpack.c.0.s8 %v948
        %v950 = vlaneseq
        %v951 = vshrl.u32 %v950, 7
        %v952 = vsub.s32 %v949, %v951
        %v953 = vrot.slane %v939, %v952
        %v954 = vcombine.low %v930, %v946
        %v955 = vcombine.high %v930, %v946
        %v956 = vcombine.low %v937, %v953
        %v957 = vcombine.high %v937, %v953
        %959 = vrot.lane.b32.xlu0 %v660, 112
        %v960 = vpop.permute.xlu0 %959
        %962 = vrot.lane.b32.xlu0 %v660, 96
        %v963 = vpop.permute.xlu0 %962
        %965 = vrot.lane.b32.xlu0 %v660, 80
        %v966 = vpop.permute.xlu0 %965
        %v968 = vcombine.low %v660, %v963
        %v969 = vcombine.high %v660, %v963
        %v971 = vunpack.c.l.s4 1983009808
        %v972 = vunpack.c.0.s8 %v971
        %v973 = vlaneseq
        %v974 = vshrl.u32 %v973, 7
        %v975 = vsub.s32 %v972, %v974
        %v976 = vrot.slane %v968, %v975
        %v978 = vunpack.c.l.s4 1983009808
        %v979 = vunpack.c.0.s8 %v978
        %v980 = vlaneseq
        %v981 = vshrl.u32 %v980, 7
        %v982 = vsub.s32 %v979, %v981
        %v983 = vrot.slane %v969, %v982
        %v984 = vcombine.low %v960, %v966
        %v985 = vcombine.high %v960, %v966
        %v987 = vunpack.c.l.s4 1983009808
        %v988 = vunpack.c.0.s8 %v987
        %v989 = vlaneseq
        %v990 = vshrl.u32 %v989, 7
        %v991 = vsub.s32 %v988, %v990
        %v992 = vrot.slane %v984, %v991
        %v994 = vunpack.c.l.s4 1983009808
        %v995 = vunpack.c.0.s8 %v994
        %v996 = vlaneseq
        %v997 = vshrl.u32 %v996, 7
        %v998 = vsub.s32 %v995, %v997
        %v999 = vrot.slane %v985, %v998
        %v1000 = vcombine.low %v976, %v992
        %v1001 = vcombine.high %v976, %v992
        %v1003 = vunpack.c.l.s4 1934713408
        %v1004 = vunpack.c.0.s8 %v1003
        %v1005 = vlaneseq
        %v1006 = vshrl.u32 %v1005, 7
        %v1007 = vsub.s32 %v1004, %v1006
        %v1008 = vrot.slane %v1000, %v1007
        %v1010 = vunpack.c.l.s4 1934713408
        %v1011 = vunpack.c.0.s8 %v1010
        %v1012 = vlaneseq
        %v1013 = vshrl.u32 %v1012, 7
        %v1014 = vsub.s32 %v1011, %v1013
        %v1015 = vrot.slane %v1001, %v1014
        %v1016 = vcombine.low %v983, %v999
        %v1017 = vcombine.high %v983, %v999
        %v1019 = vunpack.c.l.s4 1934713408
        %v1020 = vunpack.c.0.s8 %v1019
        %v1021 = vlaneseq
        %v1022 = vshrl.u32 %v1021, 7
        %v1023 = vsub.s32 %v1020, %v1022
        %v1024 = vrot.slane %v1016, %v1023
        %v1026 = vunpack.c.l.s4 1934713408
        %v1027 = vunpack.c.0.s8 %v1026
        %v1028 = vlaneseq
        %v1029 = vshrl.u32 %v1028, 7
        %v1030 = vsub.s32 %v1027, %v1029
        %v1031 = vrot.slane %v1017, %v1030
        %v1032 = vcombine.high %v1008, 0.0
        %v1033 = vcombine.high %v1015, 0.0
        %v1034 = vcombine.high %v1024, 0.0
        %v1035 = vcombine.high %v1031, 0.0
        %v1036 = vcombine.low %v1008, %v1015
        %v1038 = vunpack.c.l.s4 1983009808
        %v1039 = vunpack.c.0.s8 %v1038
        %v1040 = vlaneseq
        %v1041 = vshrl.u32 %v1040, 7
        %v1042 = vsub.s32 %v1039, %v1041
        %v1043 = vrot.slane %v1036, %v1042
        %v1044 = vcombine.low %v1032, %v1033
        %v1046 = vunpack.c.l.s4 1983009808
        %v1047 = vunpack.c.0.s8 %v1046
        %v1048 = vlaneseq
        %v1049 = vshrl.u32 %v1048, 7
        %v1050 = vsub.s32 %v1047, %v1049
        %v1051 = vrot.slane %v1044, %v1050
        %v1052 = vcombine.low %v1024, %v1031
        %v1054 = vunpack.c.l.s4 1983009808
        %v1055 = vunpack.c.0.s8 %v1054
        %v1056 = vlaneseq
        %v1057 = vshrl.u32 %v1056, 7
        %v1058 = vsub.s32 %v1055, %v1057
        %v1059 = vrot.slane %v1052, %v1058
        %v1060 = vcombine.low %v1034, %v1035
        %v1062 = vunpack.c.l.s4 1983009808
        %v1063 = vunpack.c.0.s8 %v1062
        %v1064 = vlaneseq
        %v1065 = vshrl.u32 %v1064, 7
        %v1066 = vsub.s32 %v1063, %v1065
        %v1067 = vrot.slane %v1060, %v1066
        %v1068 = vcombine.low %v1043, %v1051
        %v1069 = vcombine.high %v1043, %v1051
        %v1071 = vunpack.c.l.s4 1934713408
        %v1072 = vunpack.c.0.s8 %v1071
        %v1073 = vlaneseq
        %v1074 = vshrl.u32 %v1073, 7
        %v1075 = vsub.s32 %v1072, %v1074
        %v1076 = vrot.slane %v1068, %v1075
        %v1078 = vunpack.c.l.s4 1934713408
        %v1079 = vunpack.c.0.s8 %v1078
        %v1080 = vlaneseq
        %v1081 = vshrl.u32 %v1080, 7
        %v1082 = vsub.s32 %v1079, %v1081
        %v1083 = vrot.slane %v1069, %v1082
        %v1084 = vcombine.low %v1059, %v1067
        %v1085 = vcombine.high %v1059, %v1067
        %v1087 = vunpack.c.l.s4 1934713408
        %v1088 = vunpack.c.0.s8 %v1087
        %v1089 = vlaneseq
        %v1090 = vshrl.u32 %v1089, 7
        %v1091 = vsub.s32 %v1088, %v1090
        %v1092 = vrot.slane %v1084, %v1091
        %v1094 = vunpack.c.l.s4 1934713408
        %v1095 = vunpack.c.0.s8 %v1094
        %v1096 = vlaneseq
        %v1097 = vshrl.u32 %v1096, 7
        %v1098 = vsub.s32 %v1095, %v1097
        %v1099 = vrot.slane %v1085, %v1098
        %v1100 = vcombine.low %v1076, %v1092
        %v1101 = vcombine.high %v1076, %v1092
        %v1102 = vcombine.low %v1083, %v1099
        %v1103 = vcombine.high %v1083, %v1099
        %v1104 = vpack.c.bf16 %v806, %v806
        %v1105 = vpack.c.bf16 %v807, %v807
        %v1106 = vpack.c.bf16 %v808, %v808
        %v1107 = vpack.c.bf16 %v809, %v809
        %v1108 = vpack.c.bf16 %v954, %v954
        %v1109 = vpack.c.bf16 %v955, %v955
        %v1110 = vpack.c.bf16 %v956, %v956
        %v1111 = vpack.c.bf16 %v957, %v957
        %v1113 = vlaneseq
        %v1114 = vshrl.u32 %v1113, 7
        %v1115 = vsub.s32 0, %v1114
        %v1116 = vrot.slane %v560, %v1115
        %vm1118 = vcmask 130048
        %v1120 = vsel %vm1118, %v1104, 0
        %v1123 = vsel %vm1118, %v1108, 0
        %1125 = vmatprep.subr.bf16.mxu0 0
        %1126 = vmatpush1.bf16.xpose.msra.mxu0 0
        %1127 = vmatprep.subr.bf16.mxu0 0
        %1128 = vmatpush1.bf16.xpose.msra.mxu0 0
        %1129 = vmatprep.subr.bf16.mxu0 0
        %1130 = vmatpush1.bf16.xpose.msra.mxu0 0
        %1131 = vmatprep.subr.bf16.mxu0 0
        %1132 = vmatpush1.bf16.xpose.msra.mxu0 0
        %1133 = vmatprep.subr.bf16.mxu0 0
        %1134 = vmatpush1.bf16.xpose.msra.mxu0 0
        %1135 = vmatprep.subr.bf16.mxu0 0
        %1136 = vmatpush1.bf16.xpose.msra.mxu0 0
        %1137 = vmatprep.subr.bf16.mxu0 0
        %1138 = vmatpush1.bf16.xpose.msra.mxu0 0
        %1139 = vmatprep.subr.bf16.mxu0 0
        %1140 = vmatpush1.bf16.xpose.msra.mxu0 %v1123
        %1141 = vmatprep.subr.bf16.mxu0 0
        %1142 = vmatpush2.bf16.xpose.msra.mxu0 0
        %1143 = vmatprep.subr.bf16.mxu0 0
        %1144 = vmatpush2.bf16.xpose.msra.mxu0 0
        %1145 = vmatprep.subr.bf16.mxu0 0
        %1146 = vmatpush2.bf16.xpose.msra.mxu0 0
        %1147 = vmatprep.subr.bf16.mxu0 0
        %1148 = vmatpush2.bf16.xpose.msra.mxu0 0
        %1149 = vmatprep.subr.bf16.mxu0 0
        %1150 = vmatpush2.bf16.xpose.msra.mxu0 0
        %1151 = vmatprep.subr.bf16.mxu0 0
        %1152 = vmatpush2.bf16.xpose.msra.mxu0 0
        %1153 = vmatprep.subr.bf16.mxu0 0
        %1154 = vmatpush2.bf16.xpose.msra.mxu0 0
        %1155 = vmatprep.subr.bf16.mxu0 0
        %1156 = vmatpush2.bf16.xpose.msra.mxu0 0
        %1157 = vmatprep.mubr.bf16.mxu0 0
        %1158 = vmatmul.mubr.bf16.gmra.mxu0 %v1120
        %v1159 = vpop.f32.mrf.mxu0
        %v1160 = vadd.f32 %v1116, %v1159
        %v1161 = vpop.f32.mrf.mxu0
        %v1162 = vpop.f32.mrf.mxu0
        %v1163 = vpop.f32.mrf.mxu0
        %1164 = vdwg.mxu0
        %v1166 = vsel %vm1118, %v1105, 0
        %v1169 = vsel %vm1118, %v1109, 0
        %1171 = vmatprep.subr.bf16.mxu0 0
        %1172 = vmatpush1.bf16.xpose.msra.mxu0 0
        %1173 = vmatprep.subr.bf16.mxu0 0
        %1174 = vmatpush1.bf16.xpose.msra.mxu0 0
        %1175 = vmatprep.subr.bf16.mxu0 0
        %1176 = vmatpush1.bf16.xpose.msra.mxu0 0
        %1177 = vmatprep.subr.bf16.mxu0 0
        %1178 = vmatpush1.bf16.xpose.msra.mxu0 0
        %1179 = vmatprep.subr.bf16.mxu0 0
        %1180 = vmatpush1.bf16.xpose.msra.mxu0 0
        %1181 = vmatprep.subr.bf16.mxu0 0
        %1182 = vmatpush1.bf16.xpose.msra.mxu0 0
        %1183 = vmatprep.subr.bf16.mxu0 0
        %1184 = vmatpush1.bf16.xpose.msra.mxu0 0
        %1185 = vmatprep.subr.bf16.mxu0 0
        %1186 = vmatpush1.bf16.xpose.msra.mxu0 %v1169
        %1187 = vmatprep.subr.bf16.mxu0 0
        %1188 = vmatpush2.bf16.xpose.msra.mxu0 0
        %1189 = vmatprep.subr.bf16.mxu0 0
        %1190 = vmatpush2.bf16.xpose.msra.mxu0 0
        %1191 = vmatprep.subr.bf16.mxu0 0
        %1192 = vmatpush2.bf16.xpose.msra.mxu0 0
        %1193 = vmatprep.subr.bf16.mxu0 0
        %1194 = vmatpush2.bf16.xpose.msra.mxu0 0
        %1195 = vmatprep.subr.bf16.mxu0 0
        %1196 = vmatpush2.bf16.xpose.msra.mxu0 0
        %1197 = vmatprep.subr.bf16.mxu0 0
        %1198 = vmatpush2.bf16.xpose.msra.mxu0 0
        %1199 = vmatprep.subr.bf16.mxu0 0
        %1200 = vmatpush2.bf16.xpose.msra.mxu0 0
        %1201 = vmatprep.subr.bf16.mxu0 0
        %1202 = vmatpush2.bf16.xpose.msra.mxu0 0
        %1203 = vmatprep.mubr.bf16.mxu0 0
        %1204 = vmatmul.mubr.bf16.gmra.mxu0 %v1166
        %v1205 = vpop.f32.mrf.mxu0
        %v1206 = vadd.f32 %v1116, %v1205
        %v1207 = vpop.f32.mrf.mxu0
        %v1208 = vpop.f32.mrf.mxu0
        %v1209 = vpop.f32.mrf.mxu0
        %1210 = vdwg.mxu0
        %v1212 = vsel %vm1118, %v1106, 0
        %v1215 = vsel %vm1118, %v1110, 0
        %1217 = vmatprep.subr.bf16.mxu0 0
        %1218 = vmatpush1.bf16.xpose.msra.mxu0 0
        %1219 = vmatprep.subr.bf16.mxu0 0
        %1220 = vmatpush1.bf16.xpose.msra.mxu0 0
        %1221 = vmatprep.subr.bf16.mxu0 0
        %1222 = vmatpush1.bf16.xpose.msra.mxu0 0
        %1223 = vmatprep.subr.bf16.mxu0 0
        %1224 = vmatpush1.bf16.xpose.msra.mxu0 0
        %1225 = vmatprep.subr.bf16.mxu0 0
        %1226 = vmatpush1.bf16.xpose.msra.mxu0 0
        %1227 = vmatprep.subr.bf16.mxu0 0
        %1228 = vmatpush1.bf16.xpose.msra.mxu0 0
        %1229 = vmatprep.subr.bf16.mxu0 0
        %1230 = vmatpush1.bf16.xpose.msra.mxu0 0
        %1231 = vmatprep.subr.bf16.mxu0 0
        %1232 = vmatpush1.bf16.xpose.msra.mxu0 %v1215
        %1233 = vmatprep.subr.bf16.mxu0 0
        %1234 = vmatpush2.bf16.xpose.msra.mxu0 0
        %1235 = vmatprep.subr.bf16.mxu0 0
        %1236 = vmatpush2.bf16.xpose.msra.mxu0 0
        %1237 = vmatprep.subr.bf16.mxu0 0
        %1238 = vmatpush2.bf16.xpose.msra.mxu0 0
        %1239 = vmatprep.subr.bf16.mxu0 0
        %1240 = vmatpush2.bf16.xpose.msra.mxu0 0
        %1241 = vmatprep.subr.bf16.mxu0 0
        %1242 = vmatpush2.bf16.xpose.msra.mxu0 0
        %1243 = vmatprep.subr.bf16.mxu0 0
        %1244 = vmatpush2.bf16.xpose.msra.mxu0 0
        %1245 = vmatprep.subr.bf16.mxu0 0
        %1246 = vmatpush2.bf16.xpose.msra.mxu0 0
        %1247 = vmatprep.subr.bf16.mxu0 0
        %1248 = vmatpush2.bf16.xpose.msra.mxu0 0
        %1249 = vmatprep.mubr.bf16.mxu0 0
        %1250 = vmatmul.mubr.bf16.gmra.mxu0 %v1212
        %v1251 = vpop.f32.mrf.mxu0
        %v1252 = vadd.f32 %v1116, %v1251
        %v1253 = vpop.f32.mrf.mxu0
        %v1254 = vpop.f32.mrf.mxu0
        %v1255 = vpop.f32.mrf.mxu0
        %1256 = vdwg.mxu0
        %v1258 = vsel %vm1118, %v1107, 0
        %v1261 = vsel %vm1118, %v1111, 0
        %1263 = vmatprep.subr.bf16.mxu0 0
        %1264 = vmatpush1.bf16.xpose.msra.mxu0 0
        %1265 = vmatprep.subr.bf16.mxu0 0
        %1266 = vmatpush1.bf16.xpose.msra.mxu0 0
        %1267 = vmatprep.subr.bf16.mxu0 0
        %1268 = vmatpush1.bf16.xpose.msra.mxu0 0
        %1269 = vmatprep.subr.bf16.mxu0 0
        %1270 = vmatpush1.bf16.xpose.msra.mxu0 0
        %1271 = vmatprep.subr.bf16.mxu0 0
        %1272 = vmatpush1.bf16.xpose.msra.mxu0 0
        %1273 = vmatprep.subr.bf16.mxu0 0
        %1274 = vmatpush1.bf16.xpose.msra.mxu0 0
        %1275 = vmatprep.subr.bf16.mxu0 0
        %1276 = vmatpush1.bf16.xpose.msra.mxu0 0
        %1277 = vmatprep.subr.bf16.mxu0 0
        %1278 = vmatpush1.bf16.xpose.msra.mxu0 %v1261
        %1279 = vmatprep.subr.bf16.mxu0 0
        %1280 = vmatpush2.bf16.xpose.msra.mxu0 0
        %1281 = vmatprep.subr.bf16.mxu0 0
        %1282 = vmatpush2.bf16.xpose.msra.mxu0 0
        %1283 = vmatprep.subr.bf16.mxu0 0
        %1284 = vmatpush2.bf16.xpose.msra.mxu0 0
        %1285 = vmatprep.subr.bf16.mxu0 0
        %1286 = vmatpush2.bf16.xpose.msra.mxu0 0
        %1287 = vmatprep.subr.bf16.mxu0 0
        %1288 = vmatpush2.bf16.xpose.msra.mxu0 0
        %1289 = vmatprep.subr.bf16.mxu0 0
        %1290 = vmatpush2.bf16.xpose.msra.mxu0 0
        %1291 = vmatprep.subr.bf16.mxu0 0
        %1292 = vmatpush2.bf16.xpose.msra.mxu0 0
        %1293 = vmatprep.subr.bf16.mxu0 0
        %1294 = vmatpush2.bf16.xpose.msra.mxu0 0
        %1295 = vmatprep.mubr.bf16.mxu0 0
        %1296 = vmatmul.mubr.bf16.gmra.mxu0 %v1258
        %v1297 = vpop.f32.mrf.mxu0
        %v1298 = vadd.f32 %v1116, %v1297
        %v1299 = vpop.f32.mrf.mxu0
        %v1300 = vpop.f32.mrf.mxu0
        %v1301 = vpop.f32.mrf.mxu0
        %1302 = vdwg.mxu0
        %vm1303 = vcmask 64512
        %v1304 = vsel %vm1303, %v1160, -inf
        %1305 = vmax.xlane.f32.xlu0 %v1304
        %v1306 = vpop.xlane.xlu0 %1305
        %v1307 = vsel %vm1303, %v1206, -inf
        %1308 = vmax.xlane.f32.xlu0 %v1307
        %v1309 = vpop.xlane.xlu0 %1308
        %v1310 = vsel %vm1303, %v1252, -inf
        %1311 = vmax.xlane.f32.xlu0 %v1310
        %v1312 = vpop.xlane.xlu0 %1311
        %v1313 = vsel %vm1303, %v1298, -inf
        %1314 = vmax.xlane.f32.xlu0 %v1313
        %v1315 = vpop.xlane.xlu0 %1314
        %v1316 = vsub.f32 %v1160, %v1306
        %v1317 = vsub.f32 %v1206, %v1309
        %v1318 = vsub.f32 %v1252, %v1312
        %v1319 = vsub.f32 %v1298, %v1315
        %v1320 = vmul.f32 %v1316, 1.442695
        %v1321 = vpow.pop %v1320
        %v1322 = vmul.f32 %v1317, 1.442695
        %v1323 = vpow.pop %v1322
        %v1324 = vmul.f32 %v1318, 1.442695
        %v1325 = vpow.pop %v1324
        %v1326 = vmul.f32 %v1319, 1.442695
        %v1327 = vpow.pop %v1326
        %v1328 = vsel %vm1303, %v1321, 0.0
        %1329 = vadd.xlane.f32.xlu0 %v1328
        %v1330 = vpop.xlane.xlu0 %1329
        %v1331 = vsel %vm1303, %v1323, 0.0
        %1332 = vadd.xlane.f32.xlu0 %v1331
        %v1333 = vpop.xlane.xlu0 %1332
        %v1334 = vsel %vm1303, %v1325, 0.0
        %1335 = vadd.xlane.f32.xlu0 %v1334
        %v1336 = vpop.xlane.xlu0 %1335
        %v1337 = vsel %vm1303, %v1327, 0.0
        %1338 = vadd.xlane.f32.xlu0 %v1337
        %v1339 = vpop.xlane.xlu0 %1338
        %v1340 = vrcp.pop %v1330
        %v1341 = vrcp.pop %v1333
        %v1342 = vrcp.pop %v1336
        %v1343 = vrcp.pop %v1339
        %v1344 = vmul.f32 %v1321, %v1340
        %v1345 = vmul.f32 %v1323, %v1341
        %v1346 = vmul.f32 %v1325, %v1342
        %v1347 = vmul.f32 %v1327, %v1343
        %v1348 = vpack.c.bf16 %v1344, %v1344
        %v1349 = vpack.c.bf16 %v1345, %v1345
        %v1350 = vpack.c.bf16 %v1346, %v1346
        %v1351 = vpack.c.bf16 %v1347, %v1347
        %v1352 = vpack.c.bf16 %v1100, %v1100
        %v1353 = vpack.c.bf16 %v1101, %v1101
        %v1354 = vpack.c.bf16 %v1102, %v1102
        %v1355 = vpack.c.bf16 %v1103, %v1103
        %v1357 = vsel %vm1303, %v1348, 0
        %vm1359 = vcmask 1043456
        %v1361 = vsel %vm1359, %v1352, 0
        %1363 = vmatprep.subr.bf16.mxu0 0
        %1364 = vmatpush1.bf16.msra.mxu0 0
        %1365 = vmatprep.subr.bf16.mxu0 0
        %1366 = vmatpush1.bf16.msra.mxu0 0
        %1367 = vmatprep.subr.bf16.mxu0 0
        %1368 = vmatpush1.bf16.msra.mxu0 0
        %1369 = vmatprep.subr.bf16.mxu0 0
        %1370 = vmatpush1.bf16.msra.mxu0 0
        %1371 = vmatprep.subr.bf16.mxu0 0
        %1372 = vmatpush1.bf16.msra.mxu0 0
        %1373 = vmatprep.subr.bf16.mxu0 0
        %1374 = vmatpush1.bf16.msra.mxu0 0
        %1375 = vmatprep.subr.bf16.mxu0 0
        %1376 = vmatpush1.bf16.msra.mxu0 0
        %1377 = vmatprep.subr.bf16.mxu0 0
        %1378 = vmatpush1.bf16.msra.mxu0 %v1361
        %1379 = vmatprep.subr.bf16.mxu0 0
        %1380 = vmatpush2.bf16.msra.mxu0 0
        %1381 = vmatprep.subr.bf16.mxu0 0
        %1382 = vmatpush2.bf16.msra.mxu0 0
        %1383 = vmatprep.subr.bf16.mxu0 0
        %1384 = vmatpush2.bf16.msra.mxu0 0
        %1385 = vmatprep.subr.bf16.mxu0 0
        %1386 = vmatpush2.bf16.msra.mxu0 0
        %1387 = vmatprep.subr.bf16.mxu0 0
        %1388 = vmatpush2.bf16.msra.mxu0 0
        %1389 = vmatprep.subr.bf16.mxu0 0
        %1390 = vmatpush2.bf16.msra.mxu0 0
        %1391 = vmatprep.subr.bf16.mxu0 0
        %1392 = vmatpush2.bf16.msra.mxu0 0
        %1393 = vmatprep.subr.bf16.mxu0 0
        %1394 = vmatpush2.bf16.msra.mxu0 0
        %1395 = vmatprep.mubr.bf16.mxu0 0
        %1396 = vmatmul.mubr.bf16.gmra.mxu0 %v1357
        %v1397 = vpop.f32.mrf.mxu0
        %v1398 = vadd.f32 0.0, %v1397
        %v1399 = vpop.f32.mrf.mxu0
        %v1400 = vpop.f32.mrf.mxu0
        %v1401 = vpop.f32.mrf.mxu0
        %1402 = vdwg.mxu0
        %v1404 = vsel %vm1303, %v1349, 0
        %v1407 = vsel %vm1359, %v1353, 0
        %1409 = vmatprep.subr.bf16.mxu0 0
        %1410 = vmatpush1.bf16.msra.mxu0 0
        %1411 = vmatprep.subr.bf16.mxu0 0
        %1412 = vmatpush1.bf16.msra.mxu0 0
        %1413 = vmatprep.subr.bf16.mxu0 0
        %1414 = vmatpush1.bf16.msra.mxu0 0
        %1415 = vmatprep.subr.bf16.mxu0 0
        %1416 = vmatpush1.bf16.msra.mxu0 0
        %1417 = vmatprep.subr.bf16.mxu0 0
        %1418 = vmatpush1.bf16.msra.mxu0 0
        %1419 = vmatprep.subr.bf16.mxu0 0
        %1420 = vmatpush1.bf16.msra.mxu0 0
        %1421 = vmatprep.subr.bf16.mxu0 0
        %1422 = vmatpush1.bf16.msra.mxu0 0
        %1423 = vmatprep.subr.bf16.mxu0 0
        %1424 = vmatpush1.bf16.msra.mxu0 %v1407
        %1425 = vmatprep.subr.bf16.mxu0 0
        %1426 = vmatpush2.bf16.msra.mxu0 0
        %1427 = vmatprep.subr.bf16.mxu0 0
        %1428 = vmatpush2.bf16.msra.mxu0 0
        %1429 = vmatprep.subr.bf16.mxu0 0
        %1430 = vmatpush2.bf16.msra.mxu0 0
        %1431 = vmatprep.subr.bf16.mxu0 0
        %1432 = vmatpush2.bf16.msra.mxu0 0
        %1433 = vmatprep.subr.bf16.mxu0 0
        %1434 = vmatpush2.bf16.msra.mxu0 0
        %1435 = vmatprep.subr.bf16.mxu0 0
        %1436 = vmatpush2.bf16.msra.mxu0 0
        %1437 = vmatprep.subr.bf16.mxu0 0
        %1438 = vmatpush2.bf16.msra.mxu0 0
        %1439 = vmatprep.subr.bf16.mxu0 0
        %1440 = vmatpush2.bf16.msra.mxu0 0
        %1441 = vmatprep.mubr.bf16.mxu0 0
        %1442 = vmatmul.mubr.bf16.gmra.mxu0 %v1404
        %v1443 = vpop.f32.mrf.mxu0
        %v1444 = vadd.f32 0.0, %v1443
        %v1445 = vpop.f32.mrf.mxu0
        %v1446 = vpop.f32.mrf.mxu0
        %v1447 = vpop.f32.mrf.mxu0
        %1448 = vdwg.mxu0
        %v1450 = vsel %vm1303, %v1350, 0
        %v1453 = vsel %vm1359, %v1354, 0
        %1455 = vmatprep.subr.bf16.mxu0 0
        %1456 = vmatpush1.bf16.msra.mxu0 0
        %1457 = vmatprep.subr.bf16.mxu0 0
        %1458 = vmatpush1.bf16.msra.mxu0 0
        %1459 = vmatprep.subr.bf16.mxu0 0
        %1460 = vmatpush1.bf16.msra.mxu0 0
        %1461 = vmatprep.subr.bf16.mxu0 0
        %1462 = vmatpush1.bf16.msra.mxu0 0
        %1463 = vmatprep.subr.bf16.mxu0 0
        %1464 = vmatpush1.bf16.msra.mxu0 0
        %1465 = vmatprep.subr.bf16.mxu0 0
        %1466 = vmatpush1.bf16.msra.mxu0 0
        %1467 = vmatprep.subr.bf16.mxu0 0
        %1468 = vmatpush1.bf16.msra.mxu0 0
        %1469 = vmatprep.subr.bf16.mxu0 0
        %1470 = vmatpush1.bf16.msra.mxu0 %v1453
        %1471 = vmatprep.subr.bf16.mxu0 0
        %1472 = vmatpush2.bf16.msra.mxu0 0
        %1473 = vmatprep.subr.bf16.mxu0 0
        %1474 = vmatpush2.bf16.msra.mxu0 0
        %1475 = vmatprep.subr.bf16.mxu0 0
        %1476 = vmatpush2.bf16.msra.mxu0 0
        %1477 = vmatprep.subr.bf16.mxu0 0
        %1478 = vmatpush2.bf16.msra.mxu0 0
        %1479 = vmatprep.subr.bf16.mxu0 0
        %1480 = vmatpush2.bf16.msra.mxu0 0
        %1481 = vmatprep.subr.bf16.mxu0 0
        %1482 = vmatpush2.bf16.msra.mxu0 0
        %1483 = vmatprep.subr.bf16.mxu0 0
        %1484 = vmatpush2.bf16.msra.mxu0 0
        %1485 = vmatprep.subr.bf16.mxu0 0
        %1486 = vmatpush2.bf16.msra.mxu0 0
        %1487 = vmatprep.mubr.bf16.mxu0 0
        %1488 = vmatmul.mubr.bf16.gmra.mxu0 %v1450
        %v1489 = vpop.f32.mrf.mxu0
        %v1490 = vadd.f32 0.0, %v1489
        %v1491 = vpop.f32.mrf.mxu0
        %v1492 = vpop.f32.mrf.mxu0
        %v1493 = vpop.f32.mrf.mxu0
        %1494 = vdwg.mxu0
        %v1496 = vsel %vm1303, %v1351, 0
        %v1499 = vsel %vm1359, %v1355, 0
        %1501 = vmatprep.subr.bf16.mxu0 0
        %1502 = vmatpush1.bf16.msra.mxu0 0
        %1503 = vmatprep.subr.bf16.mxu0 0
        %1504 = vmatpush1.bf16.msra.mxu0 0
        %1505 = vmatprep.subr.bf16.mxu0 0
        %1506 = vmatpush1.bf16.msra.mxu0 0
        %1507 = vmatprep.subr.bf16.mxu0 0
        %1508 = vmatpush1.bf16.msra.mxu0 0
        %1509 = vmatprep.subr.bf16.mxu0 0
        %1510 = vmatpush1.bf16.msra.mxu0 0
        %1511 = vmatprep.subr.bf16.mxu0 0
        %1512 = vmatpush1.bf16.msra.mxu0 0
        %1513 = vmatprep.subr.bf16.mxu0 0
        %1514 = vmatpush1.bf16.msra.mxu0 0
        %1515 = vmatprep.subr.bf16.mxu0 0
        %1516 = vmatpush1.bf16.msra.mxu0 %v1499
        %1517 = vmatprep.subr.bf16.mxu0 0
        %1518 = vmatpush2.bf16.msra.mxu0 0
        %1519 = vmatprep.subr.bf16.mxu0 0
        %1520 = vmatpush2.bf16.msra.mxu0 0
        %1521 = vmatprep.subr.bf16.mxu0 0
        %1522 = vmatpush2.bf16.msra.mxu0 0
        %1523 = vmatprep.subr.bf16.mxu0 0
        %1524 = vmatpush2.bf16.msra.mxu0 0
        %1525 = vmatprep.subr.bf16.mxu0 0
        %1526 = vmatpush2.bf16.msra.mxu0 0
        %1527 = vmatprep.subr.bf16.mxu0 0
        %1528 = vmatpush2.bf16.msra.mxu0 0
        %1529 = vmatprep.subr.bf16.mxu0 0
        %1530 = vmatpush2.bf16.msra.mxu0 0
        %1531 = vmatprep.subr.bf16.mxu0 0
        %1532 = vmatpush2.bf16.msra.mxu0 0
        %1533 = vmatprep.mubr.bf16.mxu0 0
        %1534 = vmatmul.mubr.bf16.gmra.mxu0 %v1496
        %v1535 = vpop.f32.mrf.mxu0
        %v1536 = vadd.f32 0.0, %v1535
        %v1537 = vpop.f32.mrf.mxu0
        %v1538 = vpop.f32.mrf.mxu0
        %v1539 = vpop.f32.mrf.mxu0
        %1540 = vdwg.mxu0
        %v1541 = vcombine.low %v1398, %v1490
        %v1542 = vcombine.high %v1398, %v1490
        %v1544 = vunpack.c.l.s4 1983009808
        %v1545 = vunpack.c.0.s8 %v1544
        %v1546 = vlaneseq
        %v1547 = vshrl.u32 %v1546, 7
        %v1548 = vsub.s32 %v1545, %v1547
        %v1549 = vrot.slane %v1541, %v1548
        %v1551 = vunpack.c.l.s4 1983009808
        %v1552 = vunpack.c.0.s8 %v1551
        %v1553 = vlaneseq
        %v1554 = vshrl.u32 %v1553, 7
        %v1555 = vsub.s32 %v1552, %v1554
        %v1556 = vrot.slane %v1542, %v1555
        %v1557 = vcombine.low %v1444, %v1536
        %v1558 = vcombine.high %v1444, %v1536
        %v1560 = vunpack.c.l.s4 1983009808
        %v1561 = vunpack.c.0.s8 %v1560
        %v1562 = vlaneseq
        %v1563 = vshrl.u32 %v1562, 7
        %v1564 = vsub.s32 %v1561, %v1563
        %v1565 = vrot.slane %v1557, %v1564
        %v1567 = vunpack.c.l.s4 1983009808
        %v1568 = vunpack.c.0.s8 %v1567
        %v1569 = vlaneseq
        %v1570 = vshrl.u32 %v1569, 7
        %v1571 = vsub.s32 %v1568, %v1570
        %v1572 = vrot.slane %v1558, %v1571
        %v1573 = vcombine.low %v1549, %v1565
        %v1574 = vcombine.high %v1549, %v1565
        %v1576 = vunpack.c.l.s4 1934713408
        %v1577 = vunpack.c.0.s8 %v1576
        %v1578 = vlaneseq
        %v1579 = vshrl.u32 %v1578, 7
        %v1580 = vsub.s32 %v1577, %v1579
        %v1581 = vrot.slane %v1573, %v1580
        %v1583 = vunpack.c.l.s4 1934713408
        %v1584 = vunpack.c.0.s8 %v1583
        %v1585 = vlaneseq
        %v1586 = vshrl.u32 %v1585, 7
        %v1587 = vsub.s32 %v1584, %v1586
        %v1588 = vrot.slane %v1574, %v1587
        %v1589 = vcombine.low %v1556, %v1572
        %v1590 = vcombine.high %v1556, %v1572
        %v1592 = vunpack.c.l.s4 1934713408
        %v1593 = vunpack.c.0.s8 %v1592
        %v1594 = vlaneseq
        %v1595 = vshrl.u32 %v1594, 7
        %v1596 = vsub.s32 %v1593, %v1595
        %v1597 = vrot.slane %v1589, %v1596
        %v1599 = vunpack.c.l.s4 1934713408
        %v1600 = vunpack.c.0.s8 %v1599
        %v1601 = vlaneseq
        %v1602 = vshrl.u32 %v1601, 7
        %v1603 = vsub.s32 %v1600, %v1602
        %v1604 = vrot.slane %v1590, %v1603
        %v1605 = vcombine.high %v1581, 0.0
        %v1606 = vcombine.high %v1588, 0.0
        %v1607 = vcombine.high %v1597, 0.0
        %v1608 = vcombine.high %v1604, 0.0
        %v1609 = vcombine.low %v1581, %v1588
        %v1611 = vunpack.c.l.s4 1983009808
        %v1612 = vunpack.c.0.s8 %v1611
        %v1613 = vlaneseq
        %v1614 = vshrl.u32 %v1613, 7
        %v1615 = vsub.s32 %v1612, %v1614
        %v1616 = vrot.slane %v1609, %v1615
        %v1617 = vcombine.low %v1605, %v1606
        %v1619 = vunpack.c.l.s4 1983009808
        %v1620 = vunpack.c.0.s8 %v1619
        %v1621 = vlaneseq
        %v1622 = vshrl.u32 %v1621, 7
        %v1623 = vsub.s32 %v1620, %v1622
        %v1624 = vrot.slane %v1617, %v1623
        %v1625 = vcombine.low %v1597, %v1604
        %v1627 = vunpack.c.l.s4 1983009808
        %v1628 = vunpack.c.0.s8 %v1627
        %v1629 = vlaneseq
        %v1630 = vshrl.u32 %v1629, 7
        %v1631 = vsub.s32 %v1628, %v1630
        %v1632 = vrot.slane %v1625, %v1631
        %v1633 = vcombine.low %v1607, %v1608
        %v1635 = vunpack.c.l.s4 1983009808
        %v1636 = vunpack.c.0.s8 %v1635
        %v1637 = vlaneseq
        %v1638 = vshrl.u32 %v1637, 7
        %v1639 = vsub.s32 %v1636, %v1638
        %v1640 = vrot.slane %v1633, %v1639
        %v1641 = vcombine.low %v1616, %v1624
        %v1642 = vcombine.high %v1616, %v1624
        %v1644 = vunpack.c.l.s4 1934713408
        %v1645 = vunpack.c.0.s8 %v1644
        %v1646 = vlaneseq
        %v1647 = vshrl.u32 %v1646, 7
        %v1648 = vsub.s32 %v1645, %v1647
        %v1649 = vrot.slane %v1641, %v1648
        %v1651 = vunpack.c.l.s4 1934713408
        %v1652 = vunpack.c.0.s8 %v1651
        %v1653 = vlaneseq
        %v1654 = vshrl.u32 %v1653, 7
        %v1655 = vsub.s32 %v1652, %v1654
        %v1656 = vrot.slane %v1642, %v1655
        %v1657 = vcombine.low %v1632, %v1640
        %v1658 = vcombine.high %v1632, %v1640
        %v1660 = vunpack.c.l.s4 1934713408
        %v1661 = vunpack.c.0.s8 %v1660
        %v1662 = vlaneseq
        %v1663 = vshrl.u32 %v1662, 7
        %v1664 = vsub.s32 %v1661, %v1663
        %v1665 = vrot.slane %v1657, %v1664
        %v1667 = vunpack.c.l.s4 1934713408
        %v1668 = vunpack.c.0.s8 %v1667
        %v1669 = vlaneseq
        %v1670 = vshrl.u32 %v1669, 7
        %v1671 = vsub.s32 %v1668, %v1670
        %v1672 = vrot.slane %v1658, %v1671
        %v1673 = vcombine.low %v1649, %v1665
        %v1674 = vcombine.high %v1649, %v1665
        %v1675 = vcombine.low %v1656, %v1672
        %v1676 = vcombine.high %v1656, %v1672
        %1678 = vrot.lane.b32.xlu0 %v1674, 16
        %v1679 = vpop.permute.xlu0 %1678
        %1682 = vrot.lane.b32.xlu0 %v1675, 32
        %v1683 = vpop.permute.xlu0 %1682
        %1686 = vrot.lane.b32.xlu0 %v1676, 48
        %v1687 = vpop.permute.xlu0 %1686
        %v1689 = vsel %vm1118, %v1673, %v1679
        %vm1690 = vcmask 261120
        %v1691 = vsel %vm1690, %v1689, %v1683
        %vm1692 = vcmask 392192
        %v1693 = vsel %vm1692, %v1691, %v1687
        %v1694 = vld [vmem:[%s8] sm:$0xf]
        %v1695 = vld [vmem:[%s8 + $0x4] sm:$0xf]
        %v1696 = vld [vmem:[%s8 + $0x8] sm:$0xf]
        %v1697 = vld [vmem:[%s8 + $0xc] sm:$0xf]
        %v1698 = vld [vmem:[%s8 + $0x10] sm:$0xf]
        %v1699 = vld [vmem:[%s8 + $0x14] sm:$0xf]
        %v1700 = vld [vmem:[%s8 + $0x18] sm:$0xf]
        %v1701 = vld [vmem:[%s8 + $0x1c] sm:$0xf]
        %v1702 = vpack.c.bf16 %v1693, %v1693
        %v1703 = vlaneseq
        %v1704 = vshrl.u32 %v1703, 7
        %v1705 = vsub.s32 1, %v1704
        %v1706 = vrot.slane %v561, %v1705
        %v1715 = vunpack.c.l.b16 %v1694
        %v1716 = vunpack.c.l.b16 %v1695
        %v1717 = vunpack.c.l.b16 %v1696
        %v1718 = vunpack.c.l.b16 %v1697
        %v1719 = vunpack.c.l.b16 %v1698
        %v1720 = vunpack.c.l.b16 %v1699
        %v1721 = vunpack.c.l.b16 %v1700
        %v1722 = vunpack.c.l.b16 %v1701
        %v1723 = vpack.c.b16 %v1716, %v1715
        %v1724 = vpack.c.b16 %v1718, %v1717
        %v1725 = vpack.c.b16 %v1720, %v1719
        %v1726 = vpack.c.b16 %v1722, %v1721
        %v1732 = vsel %vm533, %v1702, 0
        %1734 = vmatprep.subr.bf16.mxu0 0
        %1735 = vmatpush1.bf16.msra.mxu0 0
        %1736 = vmatprep.subr.bf16.mxu0 0
        %1737 = vmatpush1.bf16.msra.mxu0 0
        %1738 = vmatprep.subr.bf16.mxu0 0
        %1739 = vmatpush1.bf16.msra.mxu0 0
        %1740 = vmatprep.subr.bf16.mxu0 0
        %1741 = vmatpush1.bf16.msra.mxu0 0
        %1742 = vmatprep.subr.bf16.mxu0 0
        %1743 = vmatpush1.bf16.msra.mxu0 %v1726
        %1744 = vmatprep.subr.bf16.mxu0 0
        %1745 = vmatpush1.bf16.msra.mxu0 %v1725
        %1746 = vmatprep.subr.bf16.mxu0 0
        %1747 = vmatpush1.bf16.msra.mxu0 %v1724
        %1748 = vmatprep.subr.bf16.mxu0 0
        %1749 = vmatpush1.bf16.msra.mxu0 %v1723
        %1750 = vmatprep.subr.bf16.mxu0 0
        %1751 = vmatpush2.bf16.msra.mxu0 0
        %1752 = vmatprep.subr.bf16.mxu0 0
        %1753 = vmatpush2.bf16.msra.mxu0 0
        %1754 = vmatprep.subr.bf16.mxu0 0
        %1755 = vmatpush2.bf16.msra.mxu0 0
        %1756 = vmatprep.subr.bf16.mxu0 0
        %1757 = vmatpush2.bf16.msra.mxu0 0
        %1758 = vmatprep.subr.bf16.mxu0 0
        %1759 = vmatpush2.bf16.msra.mxu0 0
        %1760 = vmatprep.subr.bf16.mxu0 0
        %1761 = vmatpush2.bf16.msra.mxu0 0
        %1762 = vmatprep.subr.bf16.mxu0 0
        %1763 = vmatpush2.bf16.msra.mxu0 0
        %1764 = vmatprep.subr.bf16.mxu0 0
        %1765 = vmatpush2.bf16.msra.mxu0 0
        %1766 = vmatprep.mubr.bf16.mxu0 0
        %1767 = vmatmul.mubr.bf16.gmra.mxu0 %v1732
        %v1768 = vpop.f32.mrf.mxu0
        %v1769 = vadd.f32 %v1706, %v1768
        %v1770 = vpop.f32.mrf.mxu0
        %v1771 = vpop.f32.mrf.mxu0
        %v1772 = vpop.f32.mrf.mxu0
        %1773 = vdwg.mxu0
        %v1774 = vadd.f32 %v557, %v1769
        %v1775 = vsel %vm533, %v1774, 0.0
        %1776 = vadd.xlane.f32.xlu0 %v1775
        %v1777 = vpop.xlane.xlu0 %1776
        %v1778 = vmul.f32 %v1777, %v537
        %v1779 = vsub.f32 %v1774, %v1778
        %v1780 = vmul.f32 %v1779, %v1779
        %v1781 = vsel %vm533, %v1780, 0.0
        %1782 = vadd.xlane.f32.xlu0 %v1781
        %v1783 = vpop.xlane.xlu0 %1782
        %v1784 = vmul.f32 %v1783, %v537
        %v1785 = vadd.f32 %v1784, 1e-12
        %v1786 = vrsqrt.pop %v1785
        %v1787 = vmul.f32 %v1779, %v1786
        %v1788 = vlaneseq
        %v1789 = vshrl.u32 %v1788, 7
        %v1790 = vsub.s32 2, %v1789
        %v1791 = vrot.slane %v561, %v1790
        %v1792 = vmul.f32 %v1787, %v1791
        %v1793 = vlaneseq
        %v1794 = vshrl.u32 %v1793, 7
        %v1795 = vsub.s32 3, %v1794
        %v1796 = vrot.slane %v561, %v1795
        %v1797 = vadd.f32 %v1792, %v1796
        %v1798 = vld [vmem:[%s9] sm:$0xf]
        %v1799 = vld [vmem:[%s9 + $0x4] sm:$0xf]
        %v1800 = vld [vmem:[%s9 + $0x8] sm:$0xf]
        %v1801 = vld [vmem:[%s9 + $0xc] sm:$0xf]
        %v1802 = vld [vmem:[%s9 + $0x10] sm:$0xf]
        %v1803 = vld [vmem:[%s9 + $0x14] sm:$0xf]
        %v1804 = vld [vmem:[%s9 + $0x18] sm:$0xf]
        %v1805 = vld [vmem:[%s9 + $0x1c] sm:$0xf]
        %v1806 = vpack.c.bf16 %v1797, %v1797
        %v1807 = vlaneseq
        %v1808 = vshrl.u32 %v1807, 7
        %v1809 = vsub.s32 4, %v1808
        %v1810 = vrot.slane %v561, %v1809
        %v1819 = vunpack.c.l.b16 %v1798
        %v1820 = vunpack.c.l.b16 %v1799
        %v1821 = vunpack.c.l.b16 %v1800
        %v1822 = vunpack.c.l.b16 %v1801
        %v1823 = vunpack.c.l.b16 %v1802
        %v1824 = vunpack.c.l.b16 %v1803
        %v1825 = vunpack.c.l.b16 %v1804
        %v1826 = vunpack.c.l.b16 %v1805
        %v1827 = vpack.c.b16 %v1820, %v1819
        %v1828 = vpack.c.b16 %v1822, %v1821
        %v1829 = vpack.c.b16 %v1824, %v1823
        %v1830 = vpack.c.b16 %v1826, %v1825
        %v1836 = vsel %vm533, %v1806, 0
        %1838 = vmatprep.subr.bf16.mxu0 0
        %1839 = vmatpush1.bf16.msra.mxu0 0
        %1840 = vmatprep.subr.bf16.mxu0 0
        %1841 = vmatpush1.bf16.msra.mxu0 0
        %1842 = vmatprep.subr.bf16.mxu0 0
        %1843 = vmatpush1.bf16.msra.mxu0 0
        %1844 = vmatprep.subr.bf16.mxu0 0
        %1845 = vmatpush1.bf16.msra.mxu0 0
        %1846 = vmatprep.subr.bf16.mxu0 0
        %1847 = vmatpush1.bf16.msra.mxu0 %v1830
        %1848 = vmatprep.subr.bf16.mxu0 0
        %1849 = vmatpush1.bf16.msra.mxu0 %v1829
        %1850 = vmatprep.subr.bf16.mxu0 0
        %1851 = vmatpush1.bf16.msra.mxu0 %v1828
        %1852 = vmatprep.subr.bf16.mxu0 0
        %1853 = vmatpush1.bf16.msra.mxu0 %v1827
        %1854 = vmatprep.subr.bf16.mxu0 0
        %1855 = vmatpush2.bf16.msra.mxu0 0
        %1856 = vmatprep.subr.bf16.mxu0 0
        %1857 = vmatpush2.bf16.msra.mxu0 0
        %1858 = vmatprep.subr.bf16.mxu0 0
        %1859 = vmatpush2.bf16.msra.mxu0 0
        %1860 = vmatprep.subr.bf16.mxu0 0
        %1861 = vmatpush2.bf16.msra.mxu0 0
        %1862 = vmatprep.subr.bf16.mxu0 0
        %1863 = vmatpush2.bf16.msra.mxu0 0
        %1864 = vmatprep.subr.bf16.mxu0 0
        %1865 = vmatpush2.bf16.msra.mxu0 0
        %1866 = vmatprep.subr.bf16.mxu0 0
        %1867 = vmatpush2.bf16.msra.mxu0 0
        %1868 = vmatprep.subr.bf16.mxu0 0
        %1869 = vmatpush2.bf16.msra.mxu0 0
        %1870 = vmatprep.mubr.bf16.mxu0 0
        %1871 = vmatmul.mubr.bf16.gmra.mxu0 %v1836
        %v1872 = vpop.f32.mrf.mxu0
        %v1873 = vadd.f32 %v1810, %v1872
        %v1874 = vpop.f32.mrf.mxu0
        %v1875 = vpop.f32.mrf.mxu0
        %v1876 = vpop.f32.mrf.mxu0
        %1877 = vdwg.mxu0
        %v1878 = vmul.f32 %v1873, %v1873
        %v1879 = vmul.f32 %v1873, %v1878
        %v1880 = vmul.f32 %v1879, 0.044715
        %v1881 = vadd.f32 %v1873, %v1880
        %v1882 = vmul.f32 %v1881, 0.7978846
        %v1883 = vtanh.pop %v1882
        %v1884 = vadd.f32 %v1883, 1.0
        %v1885 = vmul.f32 %v1884, 0.5
        %v1886 = vmul.f32 %v1873, %v1885
        %v1887 = vld [vmem:[%s10] sm:$0xf]
        %v1888 = vld [vmem:[%s10 + $0x4] sm:$0xf]
        %v1889 = vld [vmem:[%s10 + $0x8] sm:$0xf]
        %v1890 = vld [vmem:[%s10 + $0xc] sm:$0xf]
        %v1891 = vld [vmem:[%s10 + $0x10] sm:$0xf]
        %v1892 = vld [vmem:[%s10 + $0x14] sm:$0xf]
        %v1893 = vld [vmem:[%s10 + $0x18] sm:$0xf]
        %v1894 = vld [vmem:[%s10 + $0x1c] sm:$0xf]
        %v1895 = vld [vmem:[%s10 + $0x20] sm:$0xf]
        %v1896 = vld [vmem:[%s10 + $0x24] sm:$0xf]
        %v1897 = vld [vmem:[%s10 + $0x28] sm:$0xf]
        %v1898 = vld [vmem:[%s10 + $0x2c] sm:$0xf]
        %v1899 = vld [vmem:[%s10 + $0x30] sm:$0xf]
        %v1900 = vld [vmem:[%s10 + $0x34] sm:$0xf]
        %v1901 = vld [vmem:[%s10 + $0x38] sm:$0xf]
        %v1902 = vld [vmem:[%s10 + $0x3c] sm:$0xf]
        %v1903 = vpack.c.bf16 %v1886, %v1886
        %v1904 = vlaneseq
        %v1905 = vshrl.u32 %v1904, 7
        %v1906 = vsub.s32 5, %v1905
        %v1907 = vrot.slane %v561, %v1906
        %v1924 = vunpack.c.l.b16 %v1887
        %v1925 = vunpack.c.l.b16 %v1888
        %v1926 = vunpack.c.l.b16 %v1889
        %v1927 = vunpack.c.l.b16 %v1890
        %v1928 = vunpack.c.l.b16 %v1891
        %v1929 = vunpack.c.l.b16 %v1892
        %v1930 = vunpack.c.l.b16 %v1893
        %v1931 = vunpack.c.l.b16 %v1894
        %v1932 = vunpack.c.l.b16 %v1895
        %v1933 = vunpack.c.l.b16 %v1896
        %v1934 = vunpack.c.l.b16 %v1897
        %v1935 = vunpack.c.l.b16 %v1898
        %v1936 = vunpack.c.l.b16 %v1899
        %v1937 = vunpack.c.l.b16 %v1900
        %v1938 = vunpack.c.l.b16 %v1901
        %v1939 = vunpack.c.l.b16 %v1902
        %v1940 = vpack.c.b16 %v1925, %v1924
        %v1941 = vpack.c.b16 %v1927, %v1926
        %v1942 = vpack.c.b16 %v1929, %v1928
        %v1943 = vpack.c.b16 %v1931, %v1930
        %v1944 = vpack.c.b16 %v1933, %v1932
        %v1945 = vpack.c.b16 %v1935, %v1934
        %v1946 = vpack.c.b16 %v1937, %v1936
        %v1947 = vpack.c.b16 %v1939, %v1938
        %1956 = vmatprep.subr.bf16.mxu0 0
        %1957 = vmatpush1.bf16.msra.mxu0 %v1947
        %1958 = vmatprep.subr.bf16.mxu0 0
        %1959 = vmatpush1.bf16.msra.mxu0 %v1946
        %1960 = vmatprep.subr.bf16.mxu0 0
        %1961 = vmatpush1.bf16.msra.mxu0 %v1945
        %1962 = vmatprep.subr.bf16.mxu0 0
        %1963 = vmatpush1.bf16.msra.mxu0 %v1944
        %1964 = vmatprep.subr.bf16.mxu0 0
        %1965 = vmatpush1.bf16.msra.mxu0 %v1943
        %1966 = vmatprep.subr.bf16.mxu0 0
        %1967 = vmatpush1.bf16.msra.mxu0 %v1942
        %1968 = vmatprep.subr.bf16.mxu0 0
        %1969 = vmatpush1.bf16.msra.mxu0 %v1941
        %1970 = vmatprep.subr.bf16.mxu0 0
        %1971 = vmatpush1.bf16.msra.mxu0 %v1940
        %1972 = vmatprep.subr.bf16.mxu0 0
        %1973 = vmatpush2.bf16.msra.mxu0 0
        %1974 = vmatprep.subr.bf16.mxu0 0
        %1975 = vmatpush2.bf16.msra.mxu0 0
        %1976 = vmatprep.subr.bf16.mxu0 0
        %1977 = vmatpush2.bf16.msra.mxu0 0
        %1978 = vmatprep.subr.bf16.mxu0 0
        %1979 = vmatpush2.bf16.msra.mxu0 0
        %1980 = vmatprep.subr.bf16.mxu0 0
        %1981 = vmatpush2.bf16.msra.mxu0 0
        %1982 = vmatprep.subr.bf16.mxu0 0
        %1983 = vmatpush2.bf16.msra.mxu0 0
        %1984 = vmatprep.subr.bf16.mxu0 0
        %1985 = vmatpush2.bf16.msra.mxu0 0
        %1986 = vmatprep.subr.bf16.mxu0 0
        %1987 = vmatpush2.bf16.msra.mxu0 0
        %1988 = vmatprep.mubr.bf16.mxu0 0
        %1989 = vmatmul.mubr.bf16.gmra.mxu0 %v1903
        %v1990 = vpop.f32.mrf.mxu0
        %v1991 = vadd.f32 %v1907, %v1990
        %v1992 = vpop.f32.mrf.mxu0
        %v1993 = vpop.f32.mrf.mxu0
        %v1994 = vpop.f32.mrf.mxu0
        %1995 = vdwg.mxu0
        %v1996 = vadd.f32 %v1797, %v1991
        %v1997 = vsel %vm533, %v1996, 0.0
        %1998 = vadd.xlane.f32.xlu0 %v1997
        %v1999 = vpop.xlane.xlu0 %1998
        %v2000 = vmul.f32 %v1999, %v537
        %v2001 = vsub.f32 %v1996, %v2000
        %v2002 = vmul.f32 %v2001, %v2001
        %v2003 = vsel %vm533, %v2002, 0.0
        %2004 = vadd.xlane.f32.xlu0 %v2003
        %v2005 = vpop.xlane.xlu0 %2004
        %v2006 = vmul.f32 %v2005, %v537
        %v2007 = vadd.f32 %v2006, 1e-12
        %v2008 = vrsqrt.pop %v2007
        %v2009 = vmul.f32 %v2001, %v2008
        %v2010 = vlaneseq
        %v2011 = vshrl.u32 %v2010, 7
        %v2012 = vsub.s32 6, %v2011
        %v2013 = vrot.slane %v561, %v2012
        %v2014 = vmul.f32 %v2009, %v2013
        %v2015 = vlaneseq
        %v2016 = vshrl.u32 %v2015, 7
        %v2017 = vsub.s32 7, %v2016
        %v2018 = vrot.slane %v561, %v2017
        %v2019 = vadd.f32 %v2014, %v2018
        %s2020 = scalar_lea.vmem %s11, 16
        %v2021 = vld [vmem:[%s2020] sm:$0xff]
        %v2022 = vld [vmem:[%s2020 + $0x8] sm:$0xff]
        %s2023 = scalar_lea.vmem %s7, 64
        %v2024 = vld [vmem:[%s2023] sm:$0xff]
        %v2025 = vld [vmem:[%s2023 + $0x8] sm:$0xff]
        %v2026 = vld [vmem:[%s2023 + $0x10] sm:$0xff]
        %v2027 = vld [vmem:[%s2023 + $0x18] sm:$0xff]
        %v2028 = vld [vmem:[%s2023 + $0x20] sm:$0xff]
        %v2029 = vld [vmem:[%s2023 + $0x28] sm:$0xff]
        %v2030 = vld [vmem:[%s2023 + $0x30] sm:$0xff]
        %v2031 = vld [vmem:[%s2023 + $0x38] sm:$0xff]
        %v2032 = vpack.c.bf16 %v2019, %v2019
        %v2033 = vlaneseq
        %v2034 = vshrl.u32 %v2033, 7
        %v2035 = vsub.s32 0, %v2034
        %v2036 = vrot.slane %v2021, %v2035
        %v2037 = vlaneseq
        %v2038 = vshrl.u32 %v2037, 7
        %v2039 = vsub.s32 0, %v2038
        %v2040 = vrot.slane %v2022, %v2039
        %v2049 = vunpack.c.l.b16 %v2024
        %v2050 = vunpack.c.h.b16 %v2024
        %v2051 = vunpack.c.l.b16 %v2025
        %v2052 = vunpack.c.h.b16 %v2025
        %v2053 = vunpack.c.l.b16 %v2026
        %v2054 = vunpack.c.h.b16 %v2026
        %v2055 = vunpack.c.l.b16 %v2027
        %v2056 = vunpack.c.h.b16 %v2027
        %v2057 = vunpack.c.l.b16 %v2028
        %v2058 = vunpack.c.h.b16 %v2028
        %v2059 = vunpack.c.l.b16 %v2029
        %v2060 = vunpack.c.h.b16 %v2029
        %v2061 = vunpack.c.l.b16 %v2030
        %v2062 = vunpack.c.h.b16 %v2030
        %v2063 = vunpack.c.l.b16 %v2031
        %v2064 = vunpack.c.h.b16 %v2031
        %v2065 = vpack.c.b16 %v2051, %v2049
        %v2066 = vpack.c.b16 %v2052, %v2050
        %v2067 = vpack.c.b16 %v2055, %v2053
        %v2068 = vpack.c.b16 %v2056, %v2054
        %v2069 = vpack.c.b16 %v2059, %v2057
        %v2070 = vpack.c.b16 %v2060, %v2058
        %v2071 = vpack.c.b16 %v2063, %v2061
        %v2072 = vpack.c.b16 %v2064, %v2062
        %v2082 = vsel %vm533, %v2032, 0
        %2084 = vmatprep.subr.bf16.mxu0 0
        %2085 = vmatpush1.bf16.msra.mxu0 0
        %2086 = vmatprep.subr.bf16.mxu0 0
        %2087 = vmatpush1.bf16.msra.mxu0 0
        %2088 = vmatprep.subr.bf16.mxu0 0
        %2089 = vmatpush1.bf16.msra.mxu0 0
        %2090 = vmatprep.subr.bf16.mxu0 0
        %2091 = vmatpush1.bf16.msra.mxu0 0
        %2092 = vmatprep.subr.bf16.mxu0 %v2072
        %2093 = vmatpush1.bf16.msra.mxu0 %v2071
        %2094 = vmatprep.subr.bf16.mxu0 %v2070
        %2095 = vmatpush1.bf16.msra.mxu0 %v2069
        %2096 = vmatprep.subr.bf16.mxu0 %v2068
        %2097 = vmatpush1.bf16.msra.mxu0 %v2067
        %2098 = vmatprep.subr.bf16.mxu0 %v2066
        %2099 = vmatpush1.bf16.msra.mxu0 %v2065
        %2100 = vmatprep.subr.bf16.mxu0 0
        %2101 = vmatpush2.bf16.msra.mxu0 0
        %2102 = vmatprep.subr.bf16.mxu0 0
        %2103 = vmatpush2.bf16.msra.mxu0 0
        %2104 = vmatprep.subr.bf16.mxu0 0
        %2105 = vmatpush2.bf16.msra.mxu0 0
        %2106 = vmatprep.subr.bf16.mxu0 0
        %2107 = vmatpush2.bf16.msra.mxu0 0
        %2108 = vmatprep.subr.bf16.mxu0 0
        %2109 = vmatpush2.bf16.msra.mxu0 0
        %2110 = vmatprep.subr.bf16.mxu0 0
        %2111 = vmatpush2.bf16.msra.mxu0 0
        %2112 = vmatprep.subr.bf16.mxu0 0
        %2113 = vmatpush2.bf16.msra.mxu0 0
        %2114 = vmatprep.subr.bf16.mxu0 0
        %2115 = vmatpush2.bf16.msra.mxu0 0
        %2116 = vmatprep.mubr.bf16.mxu0 0
        %2117 = vmatmul.mubr.bf16.gmra.mxu0 %v2082
        %v2118 = vpop.f32.mrf.mxu0
        %v2119 = vadd.f32 %v2036, %v2118
        %v2120 = vpop.f32.mrf.mxu0
        %v2121 = vadd.f32 %v2040, %v2120
        %v2122 = vpop.f32.mrf.mxu0
        %v2123 = vpop.f32.mrf.mxu0
        %2124 = vdwg.mxu0
        %2126 = vrot.lane.b32.xlu0 %v2119, 112
        %v2127 = vpop.permute.xlu0 %2126
        %2129 = vrot.lane.b32.xlu0 %v2119, 96
        %v2130 = vpop.permute.xlu0 %2129
        %2132 = vrot.lane.b32.xlu0 %v2119, 80
        %v2133 = vpop.permute.xlu0 %2132
        %v2135 = vcombine.low %v2119, %v2130
        %v2136 = vcombine.high %v2119, %v2130
        %v2138 = vunpack.c.l.s4 1983009808
        %v2139 = vunpack.c.0.s8 %v2138
        %v2140 = vlaneseq
        %v2141 = vshrl.u32 %v2140, 7
        %v2142 = vsub.s32 %v2139, %v2141
        %v2143 = vrot.slane %v2135, %v2142
        %v2145 = vunpack.c.l.s4 1983009808
        %v2146 = vunpack.c.0.s8 %v2145
        %v2147 = vlaneseq
        %v2148 = vshrl.u32 %v2147, 7
        %v2149 = vsub.s32 %v2146, %v2148
        %v2150 = vrot.slane %v2136, %v2149
        %v2151 = vcombine.low %v2127, %v2133
        %v2152 = vcombine.high %v2127, %v2133
        %v2154 = vunpack.c.l.s4 1983009808
        %v2155 = vunpack.c.0.s8 %v2154
        %v2156 = vlaneseq
        %v2157 = vshrl.u32 %v2156, 7
        %v2158 = vsub.s32 %v2155, %v2157
        %v2159 = vrot.slane %v2151, %v2158
        %v2161 = vunpack.c.l.s4 1983009808
        %v2162 = vunpack.c.0.s8 %v2161
        %v2163 = vlaneseq
        %v2164 = vshrl.u32 %v2163, 7
        %v2165 = vsub.s32 %v2162, %v2164
        %v2166 = vrot.slane %v2152, %v2165
        %v2167 = vcombine.low %v2143, %v2159
        %v2168 = vcombine.high %v2143, %v2159
        %v2170 = vunpack.c.l.s4 1934713408
        %v2171 = vunpack.c.0.s8 %v2170
        %v2172 = vlaneseq
        %v2173 = vshrl.u32 %v2172, 7
        %v2174 = vsub.s32 %v2171, %v2173
        %v2175 = vrot.slane %v2167, %v2174
        %v2177 = vunpack.c.l.s4 1934713408
        %v2178 = vunpack.c.0.s8 %v2177
        %v2179 = vlaneseq
        %v2180 = vshrl.u32 %v2179, 7
        %v2181 = vsub.s32 %v2178, %v2180
        %v2182 = vrot.slane %v2168, %v2181
        %v2183 = vcombine.low %v2150, %v2166
        %v2184 = vcombine.high %v2150, %v2166
        %v2186 = vunpack.c.l.s4 1934713408
        %v2187 = vunpack.c.0.s8 %v2186
        %v2188 = vlaneseq
        %v2189 = vshrl.u32 %v2188, 7
        %v2190 = vsub.s32 %v2187, %v2189
        %v2191 = vrot.slane %v2183, %v2190
        %v2193 = vunpack.c.l.s4 1934713408
        %v2194 = vunpack.c.0.s8 %v2193
        %v2195 = vlaneseq
        %v2196 = vshrl.u32 %v2195, 7
        %v2197 = vsub.s32 %v2194, %v2196
        %v2198 = vrot.slane %v2184, %v2197
        %v2199 = vcombine.high %v2175, 0.0
        %v2200 = vcombine.high %v2182, 0.0
        %v2201 = vcombine.high %v2191, 0.0
        %v2202 = vcombine.high %v2198, 0.0
        %v2203 = vcombine.low %v2175, %v2182
        %v2205 = vunpack.c.l.s4 1983009808
        %v2206 = vunpack.c.0.s8 %v2205
        %v2207 = vlaneseq
        %v2208 = vshrl.u32 %v2207, 7
        %v2209 = vsub.s32 %v2206, %v2208
        %v2210 = vrot.slane %v2203, %v2209
        %v2211 = vcombine.low %v2199, %v2200
        %v2213 = vunpack.c.l.s4 1983009808
        %v2214 = vunpack.c.0.s8 %v2213
        %v2215 = vlaneseq
        %v2216 = vshrl.u32 %v2215, 7
        %v2217 = vsub.s32 %v2214, %v2216
        %v2218 = vrot.slane %v2211, %v2217
        %v2219 = vcombine.low %v2191, %v2198
        %v2221 = vunpack.c.l.s4 1983009808
        %v2222 = vunpack.c.0.s8 %v2221
        %v2223 = vlaneseq
        %v2224 = vshrl.u32 %v2223, 7
        %v2225 = vsub.s32 %v2222, %v2224
        %v2226 = vrot.slane %v2219, %v2225
        %v2227 = vcombine.low %v2201, %v2202
        %v2229 = vunpack.c.l.s4 1983009808
        %v2230 = vunpack.c.0.s8 %v2229
        %v2231 = vlaneseq
        %v2232 = vshrl.u32 %v2231, 7
        %v2233 = vsub.s32 %v2230, %v2232
        %v2234 = vrot.slane %v2227, %v2233
        %v2235 = vcombine.low %v2210, %v2218
        %v2236 = vcombine.high %v2210, %v2218
        %v2238 = vunpack.c.l.s4 1934713408
        %v2239 = vunpack.c.0.s8 %v2238
        %v2240 = vlaneseq
        %v2241 = vshrl.u32 %v2240, 7
        %v2242 = vsub.s32 %v2239, %v2241
        %v2243 = vrot.slane %v2235, %v2242
        %v2245 = vunpack.c.l.s4 1934713408
        %v2246 = vunpack.c.0.s8 %v2245
        %v2247 = vlaneseq
        %v2248 = vshrl.u32 %v2247, 7
        %v2249 = vsub.s32 %v2246, %v2248
        %v2250 = vrot.slane %v2236, %v2249
        %v2251 = vcombine.low %v2226, %v2234
        %v2252 = vcombine.high %v2226, %v2234
        %v2254 = vunpack.c.l.s4 1934713408
        %v2255 = vunpack.c.0.s8 %v2254
        %v2256 = vlaneseq
        %v2257 = vshrl.u32 %v2256, 7
        %v2258 = vsub.s32 %v2255, %v2257
        %v2259 = vrot.slane %v2251, %v2258
        %v2261 = vunpack.c.l.s4 1934713408
        %v2262 = vunpack.c.0.s8 %v2261
        %v2263 = vlaneseq
        %v2264 = vshrl.u32 %v2263, 7
        %v2265 = vsub.s32 %v2262, %v2264
        %v2266 = vrot.slane %v2252, %v2265
        %v2267 = vcombine.low %v2243, %v2259
        %v2268 = vcombine.high %v2243, %v2259
        %v2269 = vcombine.low %v2250, %v2266
        %v2270 = vcombine.high %v2250, %v2266
        %2271 = vrot.lane.b32.xlu0 %v2119, 64
        %v2272 = vpop.permute.xlu0 %2271
        %2273 = vrot.lane.b32.xlu0 %v2127, 64
        %v2274 = vpop.permute.xlu0 %2273
        %2275 = vrot.lane.b32.xlu0 %v2130, 64
        %v2276 = vpop.permute.xlu0 %2275
        %2277 = vrot.lane.b32.xlu0 %v2133, 64
        %v2278 = vpop.permute.xlu0 %2277
        %v2283 = vcombine.low %v2272, %v2276
        %v2284 = vcombine.high %v2272, %v2276
        %v2286 = vunpack.c.l.s4 1983009808
        %v2287 = vunpack.c.0.s8 %v2286
        %v2288 = vlaneseq
        %v2289 = vshrl.u32 %v2288, 7
        %v2290 = vsub.s32 %v2287, %v2289
        %v2291 = vrot.slane %v2283, %v2290
        %v2293 = vunpack.c.l.s4 1983009808
        %v2294 = vunpack.c.0.s8 %v2293
        %v2295 = vlaneseq
        %v2296 = vshrl.u32 %v2295, 7
        %v2297 = vsub.s32 %v2294, %v2296
        %v2298 = vrot.slane %v2284, %v2297
        %v2299 = vcombine.low %v2274, %v2278
        %v2300 = vcombine.high %v2274, %v2278
        %v2302 = vunpack.c.l.s4 1983009808
        %v2303 = vunpack.c.0.s8 %v2302
        %v2304 = vlaneseq
        %v2305 = vshrl.u32 %v2304, 7
        %v2306 = vsub.s32 %v2303, %v2305
        %v2307 = vrot.slane %v2299, %v2306
        %v2309 = vunpack.c.l.s4 1983009808
        %v2310 = vunpack.c.0.s8 %v2309
        %v2311 = vlaneseq
        %v2312 = vshrl.u32 %v2311, 7
        %v2313 = vsub.s32 %v2310, %v2312
        %v2314 = vrot.slane %v2300, %v2313
        %v2315 = vcombine.low %v2291, %v2307
        %v2316 = vcombine.high %v2291, %v2307
        %v2318 = vunpack.c.l.s4 1934713408
        %v2319 = vunpack.c.0.s8 %v2318
        %v2320 = vlaneseq
        %v2321 = vshrl.u32 %v2320, 7
        %v2322 = vsub.s32 %v2319, %v2321
        %v2323 = vrot.slane %v2315, %v2322
        %v2325 = vunpack.c.l.s4 1934713408
        %v2326 = vunpack.c.0.s8 %v2325
        %v2327 = vlaneseq
        %v2328 = vshrl.u32 %v2327, 7
        %v2329 = vsub.s32 %v2326, %v2328
        %v2330 = vrot.slane %v2316, %v2329
        %v2331 = vcombine.low %v2298, %v2314
        %v2332 = vcombine.high %v2298, %v2314
        %v2334 = vunpack.c.l.s4 1934713408
        %v2335 = vunpack.c.0.s8 %v2334
        %v2336 = vlaneseq
        %v2337 = vshrl.u32 %v2336, 7
        %v2338 = vsub.s32 %v2335, %v2337
        %v2339 = vrot.slane %v2331, %v2338
        %v2341 = vunpack.c.l.s4 1934713408
        %v2342 = vunpack.c.0.s8 %v2341
        %v2343 = vlaneseq
        %v2344 = vshrl.u32 %v2343, 7
        %v2345 = vsub.s32 %v2342, %v2344
        %v2346 = vrot.slane %v2332, %v2345
        %v2347 = vcombine.high %v2323, 0.0
        %v2348 = vcombine.high %v2330, 0.0
        %v2349 = vcombine.high %v2339, 0.0
        %v2350 = vcombine.high %v2346, 0.0
        %v2351 = vcombine.low %v2323, %v2330
        %v2353 = vunpack.c.l.s4 1983009808
        %v2354 = vunpack.c.0.s8 %v2353
        %v2355 = vlaneseq
        %v2356 = vshrl.u32 %v2355, 7
        %v2357 = vsub.s32 %v2354, %v2356
        %v2358 = vrot.slane %v2351, %v2357
        %v2359 = vcombine.low %v2347, %v2348
        %v2361 = vunpack.c.l.s4 1983009808
        %v2362 = vunpack.c.0.s8 %v2361
        %v2363 = vlaneseq
        %v2364 = vshrl.u32 %v2363, 7
        %v2365 = vsub.s32 %v2362, %v2364
        %v2366 = vrot.slane %v2359, %v2365
        %v2367 = vcombine.low %v2339, %v2346
        %v2369 = vunpack.c.l.s4 1983009808
        %v2370 = vunpack.c.0.s8 %v2369
        %v2371 = vlaneseq
        %v2372 = vshrl.u32 %v2371, 7
        %v2373 = vsub.s32 %v2370, %v2372
        %v2374 = vrot.slane %v2367, %v2373
        %v2375 = vcombine.low %v2349, %v2350
        %v2377 = vunpack.c.l.s4 1983009808
        %v2378 = vunpack.c.0.s8 %v2377
        %v2379 = vlaneseq
        %v2380 = vshrl.u32 %v2379, 7
        %v2381 = vsub.s32 %v2378, %v2380
        %v2382 = vrot.slane %v2375, %v2381
        %v2383 = vcombine.low %v2358, %v2366
        %v2384 = vcombine.high %v2358, %v2366
        %v2386 = vunpack.c.l.s4 1934713408
        %v2387 = vunpack.c.0.s8 %v2386
        %v2388 = vlaneseq
        %v2389 = vshrl.u32 %v2388, 7
        %v2390 = vsub.s32 %v2387, %v2389
        %v2391 = vrot.slane %v2383, %v2390
        %v2393 = vunpack.c.l.s4 1934713408
        %v2394 = vunpack.c.0.s8 %v2393
        %v2395 = vlaneseq
        %v2396 = vshrl.u32 %v2395, 7
        %v2397 = vsub.s32 %v2394, %v2396
        %v2398 = vrot.slane %v2384, %v2397
        %v2399 = vcombine.low %v2374, %v2382
        %v2400 = vcombine.high %v2374, %v2382
        %v2402 = vunpack.c.l.s4 1934713408
        %v2403 = vunpack.c.0.s8 %v2402
        %v2404 = vlaneseq
        %v2405 = vshrl.u32 %v2404, 7
        %v2406 = vsub.s32 %v2403, %v2405
        %v2407 = vrot.slane %v2399, %v2406
        %v2409 = vunpack.c.l.s4 1934713408
        %v2410 = vunpack.c.0.s8 %v2409
        %v2411 = vlaneseq
        %v2412 = vshrl.u32 %v2411, 7
        %v2413 = vsub.s32 %v2410, %v2412
        %v2414 = vrot.slane %v2400, %v2413
        %v2415 = vcombine.low %v2391, %v2407
        %v2416 = vcombine.high %v2391, %v2407
        %v2417 = vcombine.low %v2398, %v2414
        %v2418 = vcombine.high %v2398, %v2414
        %2420 = vrot.lane.b32.xlu0 %v2121, 112
        %v2421 = vpop.permute.xlu0 %2420
        %2423 = vrot.lane.b32.xlu0 %v2121, 96
        %v2424 = vpop.permute.xlu0 %2423
        %2426 = vrot.lane.b32.xlu0 %v2121, 80
        %v2427 = vpop.permute.xlu0 %2426
        %v2429 = vcombine.low %v2121, %v2424
        %v2430 = vcombine.high %v2121, %v2424
        %v2432 = vunpack.c.l.s4 1983009808
        %v2433 = vunpack.c.0.s8 %v2432
        %v2434 = vlaneseq
        %v2435 = vshrl.u32 %v2434, 7
        %v2436 = vsub.s32 %v2433, %v2435
        %v2437 = vrot.slane %v2429, %v2436
        %v2439 = vunpack.c.l.s4 1983009808
        %v2440 = vunpack.c.0.s8 %v2439
        %v2441 = vlaneseq
        %v2442 = vshrl.u32 %v2441, 7
        %v2443 = vsub.s32 %v2440, %v2442
        %v2444 = vrot.slane %v2430, %v2443
        %v2445 = vcombine.low %v2421, %v2427
        %v2446 = vcombine.high %v2421, %v2427
        %v2448 = vunpack.c.l.s4 1983009808
        %v2449 = vunpack.c.0.s8 %v2448
        %v2450 = vlaneseq
        %v2451 = vshrl.u32 %v2450, 7
        %v2452 = vsub.s32 %v2449, %v2451
        %v2453 = vrot.slane %v2445, %v2452
        %v2455 = vunpack.c.l.s4 1983009808
        %v2456 = vunpack.c.0.s8 %v2455
        %v2457 = vlaneseq
        %v2458 = vshrl.u32 %v2457, 7
        %v2459 = vsub.s32 %v2456, %v2458
        %v2460 = vrot.slane %v2446, %v2459
        %v2461 = vcombine.low %v2437, %v2453
        %v2462 = vcombine.high %v2437, %v2453
        %v2464 = vunpack.c.l.s4 1934713408
        %v2465 = vunpack.c.0.s8 %v2464
        %v2466 = vlaneseq
        %v2467 = vshrl.u32 %v2466, 7
        %v2468 = vsub.s32 %v2465, %v2467
        %v2469 = vrot.slane %v2461, %v2468
        %v2471 = vunpack.c.l.s4 1934713408
        %v2472 = vunpack.c.0.s8 %v2471
        %v2473 = vlaneseq
        %v2474 = vshrl.u32 %v2473, 7
        %v2475 = vsub.s32 %v2472, %v2474
        %v2476 = vrot.slane %v2462, %v2475
        %v2477 = vcombine.low %v2444, %v2460
        %v2478 = vcombine.high %v2444, %v2460
        %v2480 = vunpack.c.l.s4 1934713408
        %v2481 = vunpack.c.0.s8 %v2480
        %v2482 = vlaneseq
        %v2483 = vshrl.u32 %v2482, 7
        %v2484 = vsub.s32 %v2481, %v2483
        %v2485 = vrot.slane %v2477, %v2484
        %v2487 = vunpack.c.l.s4 1934713408
        %v2488 = vunpack.c.0.s8 %v2487
        %v2489 = vlaneseq
        %v2490 = vshrl.u32 %v2489, 7
        %v2491 = vsub.s32 %v2488, %v2490
        %v2492 = vrot.slane %v2478, %v2491
        %v2493 = vcombine.high %v2469, 0.0
        %v2494 = vcombine.high %v2476, 0.0
        %v2495 = vcombine.high %v2485, 0.0
        %v2496 = vcombine.high %v2492, 0.0
        %v2497 = vcombine.low %v2469, %v2476
        %v2499 = vunpack.c.l.s4 1983009808
        %v2500 = vunpack.c.0.s8 %v2499
        %v2501 = vlaneseq
        %v2502 = vshrl.u32 %v2501, 7
        %v2503 = vsub.s32 %v2500, %v2502
        %v2504 = vrot.slane %v2497, %v2503
        %v2505 = vcombine.low %v2493, %v2494
        %v2507 = vunpack.c.l.s4 1983009808
        %v2508 = vunpack.c.0.s8 %v2507
        %v2509 = vlaneseq
        %v2510 = vshrl.u32 %v2509, 7
        %v2511 = vsub.s32 %v2508, %v2510
        %v2512 = vrot.slane %v2505, %v2511
        %v2513 = vcombine.low %v2485, %v2492
        %v2515 = vunpack.c.l.s4 1983009808
        %v2516 = vunpack.c.0.s8 %v2515
        %v2517 = vlaneseq
        %v2518 = vshrl.u32 %v2517, 7
        %v2519 = vsub.s32 %v2516, %v2518
        %v2520 = vrot.slane %v2513, %v2519
        %v2521 = vcombine.low %v2495, %v2496
        %v2523 = vunpack.c.l.s4 1983009808
        %v2524 = vunpack.c.0.s8 %v2523
        %v2525 = vlaneseq
        %v2526 = vshrl.u32 %v2525, 7
        %v2527 = vsub.s32 %v2524, %v2526
        %v2528 = vrot.slane %v2521, %v2527
        %v2529 = vcombine.low %v2504, %v2512
        %v2530 = vcombine.high %v2504, %v2512
        %v2532 = vunpack.c.l.s4 1934713408
        %v2533 = vunpack.c.0.s8 %v2532
        %v2534 = vlaneseq
        %v2535 = vshrl.u32 %v2534, 7
        %v2536 = vsub.s32 %v2533, %v2535
        %v2537 = vrot.slane %v2529, %v2536
        %v2539 = vunpack.c.l.s4 1934713408
        %v2540 = vunpack.c.0.s8 %v2539
        %v2541 = vlaneseq
        %v2542 = vshrl.u32 %v2541, 7
        %v2543 = vsub.s32 %v2540, %v2542
        %v2544 = vrot.slane %v2530, %v2543
        %v2545 = vcombine.low %v2520, %v2528
        %v2546 = vcombine.high %v2520, %v2528
        %v2548 = vunpack.c.l.s4 1934713408
        %v2549 = vunpack.c.0.s8 %v2548
        %v2550 = vlaneseq
        %v2551 = vshrl.u32 %v2550, 7
        %v2552 = vsub.s32 %v2549, %v2551
        %v2553 = vrot.slane %v2545, %v2552
        %v2555 = vunpack.c.l.s4 1934713408
        %v2556 = vunpack.c.0.s8 %v2555
        %v2557 = vlaneseq
        %v2558 = vshrl.u32 %v2557, 7
        %v2559 = vsub.s32 %v2556, %v2558
        %v2560 = vrot.slane %v2546, %v2559
        %v2561 = vcombine.low %v2537, %v2553
        %v2562 = vcombine.high %v2537, %v2553
        %v2563 = vcombine.low %v2544, %v2560
        %v2564 = vcombine.high %v2544, %v2560
        %v2565 = vpack.c.bf16 %v2267, %v2267
        %v2566 = vpack.c.bf16 %v2268, %v2268
        %v2567 = vpack.c.bf16 %v2269, %v2269
        %v2568 = vpack.c.bf16 %v2270, %v2270
        %v2569 = vpack.c.bf16 %v2415, %v2415
        %v2570 = vpack.c.bf16 %v2416, %v2416
        %v2571 = vpack.c.bf16 %v2417, %v2417
        %v2572 = vpack.c.bf16 %v2418, %v2418
        %v2574 = vsel %vm1118, %v2565, 0
        %v2577 = vsel %vm1118, %v2569, 0
        %2579 = vmatprep.subr.bf16.mxu0 0
        %2580 = vmatpush1.bf16.xpose.msra.mxu0 0
        %2581 = vmatprep.subr.bf16.mxu0 0
        %2582 = vmatpush1.bf16.xpose.msra.mxu0 0
        %2583 = vmatprep.subr.bf16.mxu0 0
        %2584 = vmatpush1.bf16.xpose.msra.mxu0 0
        %2585 = vmatprep.subr.bf16.mxu0 0
        %2586 = vmatpush1.bf16.xpose.msra.mxu0 0
        %2587 = vmatprep.subr.bf16.mxu0 0
        %2588 = vmatpush1.bf16.xpose.msra.mxu0 0
        %2589 = vmatprep.subr.bf16.mxu0 0
        %2590 = vmatpush1.bf16.xpose.msra.mxu0 0
        %2591 = vmatprep.subr.bf16.mxu0 0
        %2592 = vmatpush1.bf16.xpose.msra.mxu0 0
        %2593 = vmatprep.subr.bf16.mxu0 0
        %2594 = vmatpush1.bf16.xpose.msra.mxu0 %v2577
        %2595 = vmatprep.subr.bf16.mxu0 0
        %2596 = vmatpush2.bf16.xpose.msra.mxu0 0
        %2597 = vmatprep.subr.bf16.mxu0 0
        %2598 = vmatpush2.bf16.xpose.msra.mxu0 0
        %2599 = vmatprep.subr.bf16.mxu0 0
        %2600 = vmatpush2.bf16.xpose.msra.mxu0 0
        %2601 = vmatprep.subr.bf16.mxu0 0
        %2602 = vmatpush2.bf16.xpose.msra.mxu0 0
        %2603 = vmatprep.subr.bf16.mxu0 0
        %2604 = vmatpush2.bf16.xpose.msra.mxu0 0
        %2605 = vmatprep.subr.bf16.mxu0 0
        %2606 = vmatpush2.bf16.xpose.msra.mxu0 0
        %2607 = vmatprep.subr.bf16.mxu0 0
        %2608 = vmatpush2.bf16.xpose.msra.mxu0 0
        %2609 = vmatprep.subr.bf16.mxu0 0
        %2610 = vmatpush2.bf16.xpose.msra.mxu0 0
        %2611 = vmatprep.mubr.bf16.mxu0 0
        %2612 = vmatmul.mubr.bf16.gmra.mxu0 %v2574
        %v2613 = vpop.f32.mrf.mxu0
        %v2614 = vadd.f32 %v1116, %v2613
        %v2615 = vpop.f32.mrf.mxu0
        %v2616 = vpop.f32.mrf.mxu0
        %v2617 = vpop.f32.mrf.mxu0
        %2618 = vdwg.mxu0
        %v2620 = vsel %vm1118, %v2566, 0
        %v2623 = vsel %vm1118, %v2570, 0
        %2625 = vmatprep.subr.bf16.mxu0 0
        %2626 = vmatpush1.bf16.xpose.msra.mxu0 0
        %2627 = vmatprep.subr.bf16.mxu0 0
        %2628 = vmatpush1.bf16.xpose.msra.mxu0 0
        %2629 = vmatprep.subr.bf16.mxu0 0
        %2630 = vmatpush1.bf16.xpose.msra.mxu0 0
        %2631 = vmatprep.subr.bf16.mxu0 0
        %2632 = vmatpush1.bf16.xpose.msra.mxu0 0
        %2633 = vmatprep.subr.bf16.mxu0 0
        %2634 = vmatpush1.bf16.xpose.msra.mxu0 0
        %2635 = vmatprep.subr.bf16.mxu0 0
        %2636 = vmatpush1.bf16.xpose.msra.mxu0 0
        %2637 = vmatprep.subr.bf16.mxu0 0
        %2638 = vmatpush1.bf16.xpose.msra.mxu0 0
        %2639 = vmatprep.subr.bf16.mxu0 0
        %2640 = vmatpush1.bf16.xpose.msra.mxu0 %v2623
        %2641 = vmatprep.subr.bf16.mxu0 0
        %2642 = vmatpush2.bf16.xpose.msra.mxu0 0
        %2643 = vmatprep.subr.bf16.mxu0 0
        %2644 = vmatpush2.bf16.xpose.msra.mxu0 0
        %2645 = vmatprep.subr.bf16.mxu0 0
        %2646 = vmatpush2.bf16.xpose.msra.mxu0 0
        %2647 = vmatprep.subr.bf16.mxu0 0
        %2648 = vmatpush2.bf16.xpose.msra.mxu0 0
        %2649 = vmatprep.subr.bf16.mxu0 0
        %2650 = vmatpush2.bf16.xpose.msra.mxu0 0
        %2651 = vmatprep.subr.bf16.mxu0 0
        %2652 = vmatpush2.bf16.xpose.msra.mxu0 0
        %2653 = vmatprep.subr.bf16.mxu0 0
        %2654 = vmatpush2.bf16.xpose.msra.mxu0 0
        %2655 = vmatprep.subr.bf16.mxu0 0
        %2656 = vmatpush2.bf16.xpose.msra.mxu0 0
        %2657 = vmatprep.mubr.bf16.mxu0 0
        %2658 = vmatmul.mubr.bf16.gmra.mxu0 %v2620
        %v2659 = vpop.f32.mrf.mxu0
        %v2660 = vadd.f32 %v1116, %v2659
        %v2661 = vpop.f32.mrf.mxu0
        %v2662 = vpop.f32.mrf.mxu0
        %v2663 = vpop.f32.mrf.mxu0
        %2664 = vdwg.mxu0
        %v2666 = vsel %vm1118, %v2567, 0
        %v2669 = vsel %vm1118, %v2571, 0
        %2671 = vmatprep.subr.bf16.mxu0 0
        %2672 = vmatpush1.bf16.xpose.msra.mxu0 0
        %2673 = vmatprep.subr.bf16.mxu0 0
        %2674 = vmatpush1.bf16.xpose.msra.mxu0 0
        %2675 = vmatprep.subr.bf16.mxu0 0
        %2676 = vmatpush1.bf16.xpose.msra.mxu0 0
        %2677 = vmatprep.subr.bf16.mxu0 0
        %2678 = vmatpush1.bf16.xpose.msra.mxu0 0
        %2679 = vmatprep.subr.bf16.mxu0 0
        %2680 = vmatpush1.bf16.xpose.msra.mxu0 0
        %2681 = vmatprep.subr.bf16.mxu0 0
        %2682 = vmatpush1.bf16.xpose.msra.mxu0 0
        %2683 = vmatprep.subr.bf16.mxu0 0
        %2684 = vmatpush1.bf16.xpose.msra.mxu0 0
        %2685 = vmatprep.subr.bf16.mxu0 0
        %2686 = vmatpush1.bf16.xpose.msra.mxu0 %v2669
        %2687 = vmatprep.subr.bf16.mxu0 0
        %2688 = vmatpush2.bf16.xpose.msra.mxu0 0
        %2689 = vmatprep.subr.bf16.mxu0 0
        %2690 = vmatpush2.bf16.xpose.msra.mxu0 0
        %2691 = vmatprep.subr.bf16.mxu0 0
        %2692 = vmatpush2.bf16.xpose.msra.mxu0 0
        %2693 = vmatprep.subr.bf16.mxu0 0
        %2694 = vmatpush2.bf16.xpose.msra.mxu0 0
        %2695 = vmatprep.subr.bf16.mxu0 0
        %2696 = vmatpush2.bf16.xpose.msra.mxu0 0
        %2697 = vmatprep.subr.bf16.mxu0 0
        %2698 = vmatpush2.bf16.xpose.msra.mxu0 0
        %2699 = vmatprep.subr.bf16.mxu0 0
        %2700 = vmatpush2.bf16.xpose.msra.mxu0 0
        %2701 = vmatprep.subr.bf16.mxu0 0
        %2702 = vmatpush2.bf16.xpose.msra.mxu0 0
        %2703 = vmatprep.mubr.bf16.mxu0 0
        %2704 = vmatmul.mubr.bf16.gmra.mxu0 %v2666
        %v2705 = vpop.f32.mrf.mxu0
        %v2706 = vadd.f32 %v1116, %v2705
        %v2707 = vpop.f32.mrf.mxu0
        %v2708 = vpop.f32.mrf.mxu0
        %v2709 = vpop.f32.mrf.mxu0
        %2710 = vdwg.mxu0
        %v2712 = vsel %vm1118, %v2568, 0
        %v2715 = vsel %vm1118, %v2572, 0
        %2717 = vmatprep.subr.bf16.mxu0 0
        %2718 = vmatpush1.bf16.xpose.msra.mxu0 0
        %2719 = vmatprep.subr.bf16.mxu0 0
        %2720 = vmatpush1.bf16.xpose.msra.mxu0 0
        %2721 = vmatprep.subr.bf16.mxu0 0
        %2722 = vmatpush1.bf16.xpose.msra.mxu0 0
        %2723 = vmatprep.subr.bf16.mxu0 0
        %2724 = vmatpush1.bf16.xpose.msra.mxu0 0
        %2725 = vmatprep.subr.bf16.mxu0 0
        %2726 = vmatpush1.bf16.xpose.msra.mxu0 0
        %2727 = vmatprep.subr.bf16.mxu0 0
        %2728 = vmatpush1.bf16.xpose.msra.mxu0 0
        %2729 = vmatprep.subr.bf16.mxu0 0
        %2730 = vmatpush1.bf16.xpose.msra.mxu0 0
        %2731 = vmatprep.subr.bf16.mxu0 0
        %2732 = vmatpush1.bf16.xpose.msra.mxu0 %v2715
        %2733 = vmatprep.subr.bf16.mxu0 0
        %2734 = vmatpush2.bf16.xpose.msra.mxu0 0
        %2735 = vmatprep.subr.bf16.mxu0 0
        %2736 = vmatpush2.bf16.xpose.msra.mxu0 0
        %2737 = vmatprep.subr.bf16.mxu0 0
        %2738 = vmatpush2.bf16.xpose.msra.mxu0 0
        %2739 = vmatprep.subr.bf16.mxu0 0
        %2740 = vmatpush2.bf16.xpose.msra.mxu0 0
        %2741 = vmatprep.subr.bf16.mxu0 0
        %2742 = vmatpush2.bf16.xpose.msra.mxu0 0
        %2743 = vmatprep.subr.bf16.mxu0 0
        %2744 = vmatpush2.bf16.xpose.msra.mxu0 0
        %2745 = vmatprep.subr.bf16.mxu0 0
        %2746 = vmatpush2.bf16.xpose.msra.mxu0 0
        %2747 = vmatprep.subr.bf16.mxu0 0
        %2748 = vmatpush2.bf16.xpose.msra.mxu0 0
        %2749 = vmatprep.mubr.bf16.mxu0 0
        %2750 = vmatmul.mubr.bf16.gmra.mxu0 %v2712
        %v2751 = vpop.f32.mrf.mxu0
        %v2752 = vadd.f32 %v1116, %v2751
        %v2753 = vpop.f32.mrf.mxu0
        %v2754 = vpop.f32.mrf.mxu0
        %v2755 = vpop.f32.mrf.mxu0
        %2756 = vdwg.mxu0
        %v2757 = vsel %vm1303, %v2614, -inf
        %2758 = vmax.xlane.f32.xlu0 %v2757
        %v2759 = vpop.xlane.xlu0 %2758
        %v2760 = vsel %vm1303, %v2660, -inf
        %2761 = vmax.xlane.f32.xlu0 %v2760
        %v2762 = vpop.xlane.xlu0 %2761
        %v2763 = vsel %vm1303, %v2706, -inf
        %2764 = vmax.xlane.f32.xlu0 %v2763
        %v2765 = vpop.xlane.xlu0 %2764
        %v2766 = vsel %vm1303, %v2752, -inf
        %2767 = vmax.xlane.f32.xlu0 %v2766
        %v2768 = vpop.xlane.xlu0 %2767
        %v2769 = vsub.f32 %v2614, %v2759
        %v2770 = vsub.f32 %v2660, %v2762
        %v2771 = vsub.f32 %v2706, %v2765
        %v2772 = vsub.f32 %v2752, %v2768
        %v2773 = vmul.f32 %v2769, 1.442695
        %v2774 = vpow.pop %v2773
        %v2775 = vmul.f32 %v2770, 1.442695
        %v2776 = vpow.pop %v2775
        %v2777 = vmul.f32 %v2771, 1.442695
        %v2778 = vpow.pop %v2777
        %v2779 = vmul.f32 %v2772, 1.442695
        %v2780 = vpow.pop %v2779
        %v2781 = vsel %vm1303, %v2774, 0.0
        %2782 = vadd.xlane.f32.xlu0 %v2781
        %v2783 = vpop.xlane.xlu0 %2782
        %v2784 = vsel %vm1303, %v2776, 0.0
        %2785 = vadd.xlane.f32.xlu0 %v2784
        %v2786 = vpop.xlane.xlu0 %2785
        %v2787 = vsel %vm1303, %v2778, 0.0
        %2788 = vadd.xlane.f32.xlu0 %v2787
        %v2789 = vpop.xlane.xlu0 %2788
        %v2790 = vsel %vm1303, %v2780, 0.0
        %2791 = vadd.xlane.f32.xlu0 %v2790
        %v2792 = vpop.xlane.xlu0 %2791
        %v2793 = vrcp.pop %v2783
        %v2794 = vrcp.pop %v2786
        %v2795 = vrcp.pop %v2789
        %v2796 = vrcp.pop %v2792
        %v2797 = vmul.f32 %v2774, %v2793
        %v2798 = vmul.f32 %v2776, %v2794
        %v2799 = vmul.f32 %v2778, %v2795
        %v2800 = vmul.f32 %v2780, %v2796
        %v2801 = vpack.c.bf16 %v2797, %v2797
        %v2802 = vpack.c.bf16 %v2798, %v2798
        %v2803 = vpack.c.bf16 %v2799, %v2799
        %v2804 = vpack.c.bf16 %v2800, %v2800
        %v2805 = vpack.c.bf16 %v2561, %v2561
        %v2806 = vpack.c.bf16 %v2562, %v2562
        %v2807 = vpack.c.bf16 %v2563, %v2563
        %v2808 = vpack.c.bf16 %v2564, %v2564
        %v2810 = vsel %vm1303, %v2801, 0
        %v2813 = vsel %vm1359, %v2805, 0
        %2815 = vmatprep.subr.bf16.mxu0 0
        %2816 = vmatpush1.bf16.msra.mxu0 0
        %2817 = vmatprep.subr.bf16.mxu0 0
        %2818 = vmatpush1.bf16.msra.mxu0 0
        %2819 = vmatprep.subr.bf16.mxu0 0
        %2820 = vmatpush1.bf16.msra.mxu0 0
        %2821 = vmatprep.subr.bf16.mxu0 0
        %2822 = vmatpush1.bf16.msra.mxu0 0
        %2823 = vmatprep.subr.bf16.mxu0 0
        %2824 = vmatpush1.bf16.msra.mxu0 0
        %2825 = vmatprep.subr.bf16.mxu0 0
        %2826 = vmatpush1.bf16.msra.mxu0 0
        %2827 = vmatprep.subr.bf16.mxu0 0
        %2828 = vmatpush1.bf16.msra.mxu0 0
        %2829 = vmatprep.subr.bf16.mxu0 0
        %2830 = vmatpush1.bf16.msra.mxu0 %v2813
        %2831 = vmatprep.subr.bf16.mxu0 0
        %2832 = vmatpush2.bf16.msra.mxu0 0
        %2833 = vmatprep.subr.bf16.mxu0 0
        %2834 = vmatpush2.bf16.msra.mxu0 0
        %2835 = vmatprep.subr.bf16.mxu0 0
        %2836 = vmatpush2.bf16.msra.mxu0 0
        %2837 = vmatprep.subr.bf16.mxu0 0
        %2838 = vmatpush2.bf16.msra.mxu0 0
        %2839 = vmatprep.subr.bf16.mxu0 0
        %2840 = vmatpush2.bf16.msra.mxu0 0
        %2841 = vmatprep.subr.bf16.mxu0 0
        %2842 = vmatpush2.bf16.msra.mxu0 0
        %2843 = vmatprep.subr.bf16.mxu0 0
        %2844 = vmatpush2.bf16.msra.mxu0 0
        %2845 = vmatprep.subr.bf16.mxu0 0
        %2846 = vmatpush2.bf16.msra.mxu0 0
        %2847 = vmatprep.mubr.bf16.mxu0 0
        %2848 = vmatmul.mubr.bf16.gmra.mxu0 %v2810
        %v2849 = vpop.f32.mrf.mxu0
        %v2850 = vadd.f32 0.0, %v2849
        %v2851 = vpop.f32.mrf.mxu0
        %v2852 = vpop.f32.mrf.mxu0
        %v2853 = vpop.f32.mrf.mxu0
        %2854 = vdwg.mxu0
        %v2856 = vsel %vm1303, %v2802, 0
        %v2859 = vsel %vm1359, %v2806, 0
        %2861 = vmatprep.subr.bf16.mxu0 0
        %2862 = vmatpush1.bf16.msra.mxu0 0
        %2863 = vmatprep.subr.bf16.mxu0 0
        %2864 = vmatpush1.bf16.msra.mxu0 0
        %2865 = vmatprep.subr.bf16.mxu0 0
        %2866 = vmatpush1.bf16.msra.mxu0 0
        %2867 = vmatprep.subr.bf16.mxu0 0
        %2868 = vmatpush1.bf16.msra.mxu0 0
        %2869 = vmatprep.subr.bf16.mxu0 0
        %2870 = vmatpush1.bf16.msra.mxu0 0
        %2871 = vmatprep.subr.bf16.mxu0 0
        %2872 = vmatpush1.bf16.msra.mxu0 0
        %2873 = vmatprep.subr.bf16.mxu0 0
        %2874 = vmatpush1.bf16.msra.mxu0 0
        %2875 = vmatprep.subr.bf16.mxu0 0
        %2876 = vmatpush1.bf16.msra.mxu0 %v2859
        %2877 = vmatprep.subr.bf16.mxu0 0
        %2878 = vmatpush2.bf16.msra.mxu0 0
        %2879 = vmatprep.subr.bf16.mxu0 0
        %2880 = vmatpush2.bf16.msra.mxu0 0
        %2881 = vmatprep.subr.bf16.mxu0 0
        %2882 = vmatpush2.bf16.msra.mxu0 0
        %2883 = vmatprep.subr.bf16.mxu0 0
        %2884 = vmatpush2.bf16.msra.mxu0 0
        %2885 = vmatprep.subr.bf16.mxu0 0
        %2886 = vmatpush2.bf16.msra.mxu0 0
        %2887 = vmatprep.subr.bf16.mxu0 0
        %2888 = vmatpush2.bf16.msra.mxu0 0
        %2889 = vmatprep.subr.bf16.mxu0 0
        %2890 = vmatpush2.bf16.msra.mxu0 0
        %2891 = vmatprep.subr.bf16.mxu0 0
        %2892 = vmatpush2.bf16.msra.mxu0 0
        %2893 = vmatprep.mubr.bf16.mxu0 0
        %2894 = vmatmul.mubr.bf16.gmra.mxu0 %v2856
        %v2895 = vpop.f32.mrf.mxu0
        %v2896 = vadd.f32 0.0, %v2895
        %v2897 = vpop.f32.mrf.mxu0
        %v2898 = vpop.f32.mrf.mxu0
        %v2899 = vpop.f32.mrf.mxu0
        %2900 = vdwg.mxu0
        %v2902 = vsel %vm1303, %v2803, 0
        %v2905 = vsel %vm1359, %v2807, 0
        %2907 = vmatprep.subr.bf16.mxu0 0
        %2908 = vmatpush1.bf16.msra.mxu0 0
        %2909 = vmatprep.subr.bf16.mxu0 0
        %2910 = vmatpush1.bf16.msra.mxu0 0
        %2911 = vmatprep.subr.bf16.mxu0 0
        %2912 = vmatpush1.bf16.msra.mxu0 0
        %2913 = vmatprep.subr.bf16.mxu0 0
        %2914 = vmatpush1.bf16.msra.mxu0 0
        %2915 = vmatprep.subr.bf16.mxu0 0
        %2916 = vmatpush1.bf16.msra.mxu0 0
        %2917 = vmatprep.subr.bf16.mxu0 0
        %2918 = vmatpush1.bf16.msra.mxu0 0
        %2919 = vmatprep.subr.bf16.mxu0 0
        %2920 = vmatpush1.bf16.msra.mxu0 0
        %2921 = vmatprep.subr.bf16.mxu0 0
        %2922 = vmatpush1.bf16.msra.mxu0 %v2905
        %2923 = vmatprep.subr.bf16.mxu0 0
        %2924 = vmatpush2.bf16.msra.mxu0 0
        %2925 = vmatprep.subr.bf16.mxu0 0
        %2926 = vmatpush2.bf16.msra.mxu0 0
        %2927 = vmatprep.subr.bf16.mxu0 0
        %2928 = vmatpush2.bf16.msra.mxu0 0
        %2929 = vmatprep.subr.bf16.mxu0 0
        %2930 = vmatpush2.bf16.msra.mxu0 0
        %2931 = vmatprep.subr.bf16.mxu0 0
        %2932 = vmatpush2.bf16.msra.mxu0 0
        %2933 = vmatprep.subr.bf16.mxu0 0
        %2934 = vmatpush2.bf16.msra.mxu0 0
        %2935 = vmatprep.subr.bf16.mxu0 0
        %2936 = vmatpush2.bf16.msra.mxu0 0
        %2937 = vmatprep.subr.bf16.mxu0 0
        %2938 = vmatpush2.bf16.msra.mxu0 0
        %2939 = vmatprep.mubr.bf16.mxu0 0
        %2940 = vmatmul.mubr.bf16.gmra.mxu0 %v2902
        %v2941 = vpop.f32.mrf.mxu0
        %v2942 = vadd.f32 0.0, %v2941
        %v2943 = vpop.f32.mrf.mxu0
        %v2944 = vpop.f32.mrf.mxu0
        %v2945 = vpop.f32.mrf.mxu0
        %2946 = vdwg.mxu0
        %v2948 = vsel %vm1303, %v2804, 0
        %v2951 = vsel %vm1359, %v2808, 0
        %2953 = vmatprep.subr.bf16.mxu0 0
        %2954 = vmatpush1.bf16.msra.mxu0 0
        %2955 = vmatprep.subr.bf16.mxu0 0
        %2956 = vmatpush1.bf16.msra.mxu0 0
        %2957 = vmatprep.subr.bf16.mxu0 0
        %2958 = vmatpush1.bf16.msra.mxu0 0
        %2959 = vmatprep.subr.bf16.mxu0 0
        %2960 = vmatpush1.bf16.msra.mxu0 0
        %2961 = vmatprep.subr.bf16.mxu0 0
        %2962 = vmatpush1.bf16.msra.mxu0 0
        %2963 = vmatprep.subr.bf16.mxu0 0
        %2964 = vmatpush1.bf16.msra.mxu0 0
        %2965 = vmatprep.subr.bf16.mxu0 0
        %2966 = vmatpush1.bf16.msra.mxu0 0
        %2967 = vmatprep.subr.bf16.mxu0 0
        %2968 = vmatpush1.bf16.msra.mxu0 %v2951
        %2969 = vmatprep.subr.bf16.mxu0 0
        %2970 = vmatpush2.bf16.msra.mxu0 0
        %2971 = vmatprep.subr.bf16.mxu0 0
        %2972 = vmatpush2.bf16.msra.mxu0 0
        %2973 = vmatprep.subr.bf16.mxu0 0
        %2974 = vmatpush2.bf16.msra.mxu0 0
        %2975 = vmatprep.subr.bf16.mxu0 0
        %2976 = vmatpush2.bf16.msra.mxu0 0
        %2977 = vmatprep.subr.bf16.mxu0 0
        %2978 = vmatpush2.bf16.msra.mxu0 0
        %2979 = vmatprep.subr.bf16.mxu0 0
        %2980 = vmatpush2.bf16.msra.mxu0 0
        %2981 = vmatprep.subr.bf16.mxu0 0
        %2982 = vmatpush2.bf16.msra.mxu0 0
        %2983 = vmatprep.subr.bf16.mxu0 0
        %2984 = vmatpush2.bf16.msra.mxu0 0
        %2985 = vmatprep.mubr.bf16.mxu0 0
        %2986 = vmatmul.mubr.bf16.gmra.mxu0 %v2948
        %v2987 = vpop.f32.mrf.mxu0
        %v2988 = vadd.f32 0.0, %v2987
        %v2989 = vpop.f32.mrf.mxu0
        %v2990 = vpop.f32.mrf.mxu0
        %v2991 = vpop.f32.mrf.mxu0
        %2992 = vdwg.mxu0
        %v2993 = vcombine.low %v2850, %v2942
        %v2994 = vcombine.high %v2850, %v2942
        %v2996 = vunpack.c.l.s4 1983009808
        %v2997 = vunpack.c.0.s8 %v2996
        %v2998 = vlaneseq
        %v2999 = vshrl.u32 %v2998, 7
        %v3000 = vsub.s32 %v2997, %v2999
        %v3001 = vrot.slane %v2993, %v3000
        %v3003 = vunpack.c.l.s4 1983009808
        %v3004 = vunpack.c.0.s8 %v3003
        %v3005 = vlaneseq
        %v3006 = vshrl.u32 %v3005, 7
        %v3007 = vsub.s32 %v3004, %v3006
        %v3008 = vrot.slane %v2994, %v3007
        %v3009 = vcombine.low %v2896, %v2988
        %v3010 = vcombine.high %v2896, %v2988
        %v3012 = vunpack.c.l.s4 1983009808
        %v3013 = vunpack.c.0.s8 %v3012
        %v3014 = vlaneseq
        %v3015 = vshrl.u32 %v3014, 7
        %v3016 = vsub.s32 %v3013, %v3015
        %v3017 = vrot.slane %v3009, %v3016
        %v3019 = vunpack.c.l.s4 1983009808
        %v3020 = vunpack.c.0.s8 %v3019
        %v3021 = vlaneseq
        %v3022 = vshrl.u32 %v3021, 7
        %v3023 = vsub.s32 %v3020, %v3022
        %v3024 = vrot.slane %v3010, %v3023
        %v3025 = vcombine.low %v3001, %v3017
        %v3026 = vcombine.high %v3001, %v3017
        %v3028 = vunpack.c.l.s4 1934713408
        %v3029 = vunpack.c.0.s8 %v3028
        %v3030 = vlaneseq
        %v3031 = vshrl.u32 %v3030, 7
        %v3032 = vsub.s32 %v3029, %v3031
        %v3033 = vrot.slane %v3025, %v3032
        %v3035 = vunpack.c.l.s4 1934713408
        %v3036 = vunpack.c.0.s8 %v3035
        %v3037 = vlaneseq
        %v3038 = vshrl.u32 %v3037, 7
        %v3039 = vsub.s32 %v3036, %v3038
        %v3040 = vrot.slane %v3026, %v3039
        %v3041 = vcombine.low %v3008, %v3024
        %v3042 = vcombine.high %v3008, %v3024
        %v3044 = vunpack.c.l.s4 1934713408
        %v3045 = vunpack.c.0.s8 %v3044
        %v3046 = vlaneseq
        %v3047 = vshrl.u32 %v3046, 7
        %v3048 = vsub.s32 %v3045, %v3047
        %v3049 = vrot.slane %v3041, %v3048
        %v3051 = vunpack.c.l.s4 1934713408
        %v3052 = vunpack.c.0.s8 %v3051
        %v3053 = vlaneseq
        %v3054 = vshrl.u32 %v3053, 7
        %v3055 = vsub.s32 %v3052, %v3054
        %v3056 = vrot.slane %v3042, %v3055
        %v3057 = vcombine.high %v3033, 0.0
        %v3058 = vcombine.high %v3040, 0.0
        %v3059 = vcombine.high %v3049, 0.0
        %v3060 = vcombine.high %v3056, 0.0
        %v3061 = vcombine.low %v3033, %v3040
        %v3063 = vunpack.c.l.s4 1983009808
        %v3064 = vunpack.c.0.s8 %v3063
        %v3065 = vlaneseq
        %v3066 = vshrl.u32 %v3065, 7
        %v3067 = vsub.s32 %v3064, %v3066
        %v3068 = vrot.slane %v3061, %v3067
        %v3069 = vcombine.low %v3057, %v3058
        %v3071 = vunpack.c.l.s4 1983009808
        %v3072 = vunpack.c.0.s8 %v3071
        %v3073 = vlaneseq
        %v3074 = vshrl.u32 %v3073, 7
        %v3075 = vsub.s32 %v3072, %v3074
        %v3076 = vrot.slane %v3069, %v3075
        %v3077 = vcombine.low %v3049, %v3056
        %v3079 = vunpack.c.l.s4 1983009808
        %v3080 = vunpack.c.0.s8 %v3079
        %v3081 = vlaneseq
        %v3082 = vshrl.u32 %v3081, 7
        %v3083 = vsub.s32 %v3080, %v3082
        %v3084 = vrot.slane %v3077, %v3083
        %v3085 = vcombine.low %v3059, %v3060
        %v3087 = vunpack.c.l.s4 1983009808
        %v3088 = vunpack.c.0.s8 %v3087
        %v3089 = vlaneseq
        %v3090 = vshrl.u32 %v3089, 7
        %v3091 = vsub.s32 %v3088, %v3090
        %v3092 = vrot.slane %v3085, %v3091
        %v3093 = vcombine.low %v3068, %v3076
        %v3094 = vcombine.high %v3068, %v3076
        %v3096 = vunpack.c.l.s4 1934713408
        %v3097 = vunpack.c.0.s8 %v3096
        %v3098 = vlaneseq
        %v3099 = vshrl.u32 %v3098, 7
        %v3100 = vsub.s32 %v3097, %v3099
        %v3101 = vrot.slane %v3093, %v3100
        %v3103 = vunpack.c.l.s4 1934713408
        %v3104 = vunpack.c.0.s8 %v3103
        %v3105 = vlaneseq
        %v3106 = vshrl.u32 %v3105, 7
        %v3107 = vsub.s32 %v3104, %v3106
        %v3108 = vrot.slane %v3094, %v3107
        %v3109 = vcombine.low %v3084, %v3092
        %v3110 = vcombine.high %v3084, %v3092
        %v3112 = vunpack.c.l.s4 1934713408
        %v3113 = vunpack.c.0.s8 %v3112
        %v3114 = vlaneseq
        %v3115 = vshrl.u32 %v3114, 7
        %v3116 = vsub.s32 %v3113, %v3115
        %v3117 = vrot.slane %v3109, %v3116
        %v3119 = vunpack.c.l.s4 1934713408
        %v3120 = vunpack.c.0.s8 %v3119
        %v3121 = vlaneseq
        %v3122 = vshrl.u32 %v3121, 7
        %v3123 = vsub.s32 %v3120, %v3122
        %v3124 = vrot.slane %v3110, %v3123
        %v3125 = vcombine.low %v3101, %v3117
        %v3126 = vcombine.high %v3101, %v3117
        %v3127 = vcombine.low %v3108, %v3124
        %v3128 = vcombine.high %v3108, %v3124
        %3130 = vrot.lane.b32.xlu0 %v3126, 16
        %v3131 = vpop.permute.xlu0 %3130
        %3134 = vrot.lane.b32.xlu0 %v3127, 32
        %v3135 = vpop.permute.xlu0 %3134
        %3138 = vrot.lane.b32.xlu0 %v3128, 48
        %v3139 = vpop.permute.xlu0 %3138
        %v3141 = vsel %vm1118, %v3125, %v3131
        %v3142 = vsel %vm1690, %v3141, %v3135
        %v3143 = vsel %vm1692, %v3142, %v3139
        %s3144 = scalar_lea.vmem %s8, 32
        %v3145 = vld [vmem:[%s3144] sm:$0xf]
        %v3146 = vld [vmem:[%s3144 + $0x4] sm:$0xf]
        %v3147 = vld [vmem:[%s3144 + $0x8] sm:$0xf]
        %v3148 = vld [vmem:[%s3144 + $0xc] sm:$0xf]
        %v3149 = vld [vmem:[%s3144 + $0x10] sm:$0xf]
        %v3150 = vld [vmem:[%s3144 + $0x14] sm:$0xf]
        %v3151 = vld [vmem:[%s3144 + $0x18] sm:$0xf]
        %v3152 = vld [vmem:[%s3144 + $0x1c] sm:$0xf]
        %v3153 = vpack.c.bf16 %v3143, %v3143
        %v3154 = vlaneseq
        %v3155 = vshrl.u32 %v3154, 7
        %v3156 = vsub.s32 1, %v3155
        %v3157 = vrot.slane %v2021, %v3156
        %v3166 = vunpack.c.l.b16 %v3145
        %v3167 = vunpack.c.l.b16 %v3146
        %v3168 = vunpack.c.l.b16 %v3147
        %v3169 = vunpack.c.l.b16 %v3148
        %v3170 = vunpack.c.l.b16 %v3149
        %v3171 = vunpack.c.l.b16 %v3150
        %v3172 = vunpack.c.l.b16 %v3151
        %v3173 = vunpack.c.l.b16 %v3152
        %v3174 = vpack.c.b16 %v3167, %v3166
        %v3175 = vpack.c.b16 %v3169, %v3168
        %v3176 = vpack.c.b16 %v3171, %v3170
        %v3177 = vpack.c.b16 %v3173, %v3172
        %v3183 = vsel %vm533, %v3153, 0
        %3185 = vmatprep.subr.bf16.mxu0 0
        %3186 = vmatpush1.bf16.msra.mxu0 0
        %3187 = vmatprep.subr.bf16.mxu0 0
        %3188 = vmatpush1.bf16.msra.mxu0 0
        %3189 = vmatprep.subr.bf16.mxu0 0
        %3190 = vmatpush1.bf16.msra.mxu0 0
        %3191 = vmatprep.subr.bf16.mxu0 0
        %3192 = vmatpush1.bf16.msra.mxu0 0
        %3193 = vmatprep.subr.bf16.mxu0 0
        %3194 = vmatpush1.bf16.msra.mxu0 %v3177
        %3195 = vmatprep.subr.bf16.mxu0 0
        %3196 = vmatpush1.bf16.msra.mxu0 %v3176
        %3197 = vmatprep.subr.bf16.mxu0 0
        %3198 = vmatpush1.bf16.msra.mxu0 %v3175
        %3199 = vmatprep.subr.bf16.mxu0 0
        %3200 = vmatpush1.bf16.msra.mxu0 %v3174
        %3201 = vmatprep.subr.bf16.mxu0 0
        %3202 = vmatpush2.bf16.msra.mxu0 0
        %3203 = vmatprep.subr.bf16.mxu0 0
        %3204 = vmatpush2.bf16.msra.mxu0 0
        %3205 = vmatprep.subr.bf16.mxu0 0
        %3206 = vmatpush2.bf16.msra.mxu0 0
        %3207 = vmatprep.subr.bf16.mxu0 0
        %3208 = vmatpush2.bf16.msra.mxu0 0
        %3209 = vmatprep.subr.bf16.mxu0 0
        %3210 = vmatpush2.bf16.msra.mxu0 0
        %3211 = vmatprep.subr.bf16.mxu0 0
        %3212 = vmatpush2.bf16.msra.mxu0 0
        %3213 = vmatprep.subr.bf16.mxu0 0
        %3214 = vmatpush2.bf16.msra.mxu0 0
        %3215 = vmatprep.subr.bf16.mxu0 0
        %3216 = vmatpush2.bf16.msra.mxu0 0
        %3217 = vmatprep.mubr.bf16.mxu0 0
        %3218 = vmatmul.mubr.bf16.gmra.mxu0 %v3183
        %v3219 = vpop.f32.mrf.mxu0
        %v3220 = vadd.f32 %v3157, %v3219
        %v3221 = vpop.f32.mrf.mxu0
        %v3222 = vpop.f32.mrf.mxu0
        %v3223 = vpop.f32.mrf.mxu0
        %3224 = vdwg.mxu0
        %v3225 = vadd.f32 %v2019, %v3220
        %v3226 = vsel %vm533, %v3225, 0.0
        %3227 = vadd.xlane.f32.xlu0 %v3226
        %v3228 = vpop.xlane.xlu0 %3227
        %v3229 = vmul.f32 %v3228, %v537
        %v3230 = vsub.f32 %v3225, %v3229
        %v3231 = vmul.f32 %v3230, %v3230
        %v3232 = vsel %vm533, %v3231, 0.0
        %3233 = vadd.xlane.f32.xlu0 %v3232
        %v3234 = vpop.xlane.xlu0 %3233
        %v3235 = vmul.f32 %v3234, %v537
        %v3236 = vadd.f32 %v3235, 1e-12
        %v3237 = vrsqrt.pop %v3236
        %v3238 = vmul.f32 %v3230, %v3237
        %v3239 = vlaneseq
        %v3240 = vshrl.u32 %v3239, 7
        %v3241 = vsub.s32 2, %v3240
        %v3242 = vrot.slane %v2021, %v3241
        %v3243 = vmul.f32 %v3238, %v3242
        %v3244 = vlaneseq
        %v3245 = vshrl.u32 %v3244, 7
        %v3246 = vsub.s32 3, %v3245
        %v3247 = vrot.slane %v2021, %v3246
        %v3248 = vadd.f32 %v3243, %v3247
        %s3249 = scalar_lea.vmem %s9, 32
        %v3250 = vld [vmem:[%s3249] sm:$0xf]
        %v3251 = vld [vmem:[%s3249 + $0x4] sm:$0xf]
        %v3252 = vld [vmem:[%s3249 + $0x8] sm:$0xf]
        %v3253 = vld [vmem:[%s3249 + $0xc] sm:$0xf]
        %v3254 = vld [vmem:[%s3249 + $0x10] sm:$0xf]
        %v3255 = vld [vmem:[%s3249 + $0x14] sm:$0xf]
        %v3256 = vld [vmem:[%s3249 + $0x18] sm:$0xf]
        %v3257 = vld [vmem:[%s3249 + $0x1c] sm:$0xf]
        %v3258 = vpack.c.bf16 %v3248, %v3248
        %v3259 = vlaneseq
        %v3260 = vshrl.u32 %v3259, 7
        %v3261 = vsub.s32 4, %v3260
        %v3262 = vrot.slane %v2021, %v3261
        %v3271 = vunpack.c.l.b16 %v3250
        %v3272 = vunpack.c.l.b16 %v3251
        %v3273 = vunpack.c.l.b16 %v3252
        %v3274 = vunpack.c.l.b16 %v3253
        %v3275 = vunpack.c.l.b16 %v3254
        %v3276 = vunpack.c.l.b16 %v3255
        %v3277 = vunpack.c.l.b16 %v3256
        %v3278 = vunpack.c.l.b16 %v3257
        %v3279 = vpack.c.b16 %v3272, %v3271
        %v3280 = vpack.c.b16 %v3274, %v3273
        %v3281 = vpack.c.b16 %v3276, %v3275
        %v3282 = vpack.c.b16 %v3278, %v3277
        %v3288 = vsel %vm533, %v3258, 0
        %3290 = vmatprep.subr.bf16.mxu0 0
        %3291 = vmatpush1.bf16.msra.mxu0 0
        %3292 = vmatprep.subr.bf16.mxu0 0
        %3293 = vmatpush1.bf16.msra.mxu0 0
        %3294 = vmatprep.subr.bf16.mxu0 0
        %3295 = vmatpush1.bf16.msra.mxu0 0
        %3296 = vmatprep.subr.bf16.mxu0 0
        %3297 = vmatpush1.bf16.msra.mxu0 0
        %3298 = vmatprep.subr.bf16.mxu0 0
        %3299 = vmatpush1.bf16.msra.mxu0 %v3282
        %3300 = vmatprep.subr.bf16.mxu0 0
        %3301 = vmatpush1.bf16.msra.mxu0 %v3281
        %3302 = vmatprep.subr.bf16.mxu0 0
        %3303 = vmatpush1.bf16.msra.mxu0 %v3280
        %3304 = vmatprep.subr.bf16.mxu0 0
        %3305 = vmatpush1.bf16.msra.mxu0 %v3279
        %3306 = vmatprep.subr.bf16.mxu0 0
        %3307 = vmatpush2.bf16.msra.mxu0 0
        %3308 = vmatprep.subr.bf16.mxu0 0
        %3309 = vmatpush2.bf16.msra.mxu0 0
        %3310 = vmatprep.subr.bf16.mxu0 0
        %3311 = vmatpush2.bf16.msra.mxu0 0
        %3312 = vmatprep.subr.bf16.mxu0 0
        %3313 = vmatpush2.bf16.msra.mxu0 0
        %3314 = vmatprep.subr.bf16.mxu0 0
        %3315 = vmatpush2.bf16.msra.mxu0 0
        %3316 = vmatprep.subr.bf16.mxu0 0
        %3317 = vmatpush2.bf16.msra.mxu0 0
        %3318 = vmatprep.subr.bf16.mxu0 0
        %3319 = vmatpush2.bf16.msra.mxu0 0
        %3320 = vmatprep.subr.bf16.mxu0 0
        %3321 = vmatpush2.bf16.msra.mxu0 0
        %3322 = vmatprep.mubr.bf16.mxu0 0
        %3323 = vmatmul.mubr.bf16.gmra.mxu0 %v3288
        %v3324 = vpop.f32.mrf.mxu0
        %v3325 = vadd.f32 %v3262, %v3324
        %v3326 = vpop.f32.mrf.mxu0
        %v3327 = vpop.f32.mrf.mxu0
        %v3328 = vpop.f32.mrf.mxu0
        %3329 = vdwg.mxu0
        %v3330 = vmul.f32 %v3325, %v3325
        %v3331 = vmul.f32 %v3325, %v3330
        %v3332 = vmul.f32 %v3331, 0.044715
        %v3333 = vadd.f32 %v3325, %v3332
        %v3334 = vmul.f32 %v3333, 0.7978846
        %v3335 = vtanh.pop %v3334
        %v3336 = vadd.f32 %v3335, 1.0
        %v3337 = vmul.f32 %v3336, 0.5
        %v3338 = vmul.f32 %v3325, %v3337
        %s3339 = scalar_lea.vmem %s10, 64
        %v3340 = vld [vmem:[%s3339] sm:$0xf]
        %v3341 = vld [vmem:[%s3339 + $0x4] sm:$0xf]
        %v3342 = vld [vmem:[%s3339 + $0x8] sm:$0xf]
        %v3343 = vld [vmem:[%s3339 + $0xc] sm:$0xf]
        %v3344 = vld [vmem:[%s3339 + $0x10] sm:$0xf]
        %v3345 = vld [vmem:[%s3339 + $0x14] sm:$0xf]
        %v3346 = vld [vmem:[%s3339 + $0x18] sm:$0xf]
        %v3347 = vld [vmem:[%s3339 + $0x1c] sm:$0xf]
        %v3348 = vld [vmem:[%s3339 + $0x20] sm:$0xf]
        %v3349 = vld [vmem:[%s3339 + $0x24] sm:$0xf]
        %v3350 = vld [vmem:[%s3339 + $0x28] sm:$0xf]
        %v3351 = vld [vmem:[%s3339 + $0x2c] sm:$0xf]
        %v3352 = vld [vmem:[%s3339 + $0x30] sm:$0xf]
        %v3353 = vld [vmem:[%s3339 + $0x34] sm:$0xf]
        %v3354 = vld [vmem:[%s3339 + $0x38] sm:$0xf]
        %v3355 = vld [vmem:[%s3339 + $0x3c] sm:$0xf]
        %v3356 = vpack.c.bf16 %v3338, %v3338
        %v3357 = vlaneseq
        %v3358 = vshrl.u32 %v3357, 7
        %v3359 = vsub.s32 5, %v3358
        %v3360 = vrot.slane %v2021, %v3359
        %v3377 = vunpack.c.l.b16 %v3340
        %v3378 = vunpack.c.l.b16 %v3341
        %v3379 = vunpack.c.l.b16 %v3342
        %v3380 = vunpack.c.l.b16 %v3343
        %v3381 = vunpack.c.l.b16 %v3344
        %v3382 = vunpack.c.l.b16 %v3345
        %v3383 = vunpack.c.l.b16 %v3346
        %v3384 = vunpack.c.l.b16 %v3347
        %v3385 = vunpack.c.l.b16 %v3348
        %v3386 = vunpack.c.l.b16 %v3349
        %v3387 = vunpack.c.l.b16 %v3350
        %v3388 = vunpack.c.l.b16 %v3351
        %v3389 = vunpack.c.l.b16 %v3352
        %v3390 = vunpack.c.l.b16 %v3353
        %v3391 = vunpack.c.l.b16 %v3354
        %v3392 = vunpack.c.l.b16 %v3355
        %v3393 = vpack.c.b16 %v3378, %v3377
        %v3394 = vpack.c.b16 %v3380, %v3379
        %v3395 = vpack.c.b16 %v3382, %v3381
        %v3396 = vpack.c.b16 %v3384, %v3383
        %v3397 = vpack.c.b16 %v3386, %v3385
        %v3398 = vpack.c.b16 %v3388, %v3387
        %v3399 = vpack.c.b16 %v3390, %v3389
        %v3400 = vpack.c.b16 %v3392, %v3391
        %3409 = vmatprep.subr.bf16.mxu0 0
        %3410 = vmatpush1.bf16.msra.mxu0 %v3400
        %3411 = vmatprep.subr.bf16.mxu0 0
        %3412 = vmatpush1.bf16.msra.mxu0 %v3399
        %3413 = vmatprep.subr.bf16.mxu0 0
        %3414 = vmatpush1.bf16.msra.mxu0 %v3398
        %3415 = vmatprep.subr.bf16.mxu0 0
        %3416 = vmatpush1.bf16.msra.mxu0 %v3397
        %3417 = vmatprep.subr.bf16.mxu0 0
        %3418 = vmatpush1.bf16.msra.mxu0 %v3396
        %3419 = vmatprep.subr.bf16.mxu0 0
        %3420 = vmatpush1.bf16.msra.mxu0 %v3395
        %3421 = vmatprep.subr.bf16.mxu0 0
        %3422 = vmatpush1.bf16.msra.mxu0 %v3394
        %3423 = vmatprep.subr.bf16.mxu0 0
        %3424 = vmatpush1.bf16.msra.mxu0 %v3393
        %3425 = vmatprep.subr.bf16.mxu0 0
        %3426 = vmatpush2.bf16.msra.mxu0 0
        %3427 = vmatprep.subr.bf16.mxu0 0
        %3428 = vmatpush2.bf16.msra.mxu0 0
        %3429 = vmatprep.subr.bf16.mxu0 0
        %3430 = vmatpush2.bf16.msra.mxu0 0
        %3431 = vmatprep.subr.bf16.mxu0 0
        %3432 = vmatpush2.bf16.msra.mxu0 0
        %3433 = vmatprep.subr.bf16.mxu0 0
        %3434 = vmatpush2.bf16.msra.mxu0 0
        %3435 = vmatprep.subr.bf16.mxu0 0
        %3436 = vmatpush2.bf16.msra.mxu0 0
        %3437 = vmatprep.subr.bf16.mxu0 0
        %3438 = vmatpush2.bf16.msra.mxu0 0
        %3439 = vmatprep.subr.bf16.mxu0 0
        %3440 = vmatpush2.bf16.msra.mxu0 0
        %3441 = vmatprep.mubr.bf16.mxu0 0
        %3442 = vmatmul.mubr.bf16.gmra.mxu0 %v3356
        %v3443 = vpop.f32.mrf.mxu0
        %v3444 = vadd.f32 %v3360, %v3443
        %v3445 = vpop.f32.mrf.mxu0
        %v3446 = vpop.f32.mrf.mxu0
        %v3447 = vpop.f32.mrf.mxu0
        %3448 = vdwg.mxu0
        %v3449 = vadd.f32 %v3248, %v3444
        %v3450 = vsel %vm533, %v3449, 0.0
        %3451 = vadd.xlane.f32.xlu0 %v3450
        %v3452 = vpop.xlane.xlu0 %3451
        %v3453 = vmul.f32 %v3452, %v537
        %v3454 = vsub.f32 %v3449, %v3453
        %v3455 = vmul.f32 %v3454, %v3454
        %v3456 = vsel %vm533, %v3455, 0.0
        %3457 = vadd.xlane.f32.xlu0 %v3456
        %v3458 = vpop.xlane.xlu0 %3457
        %v3459 = vmul.f32 %v3458, %v537
        %v3460 = vadd.f32 %v3459, 1e-12
        %v3461 = vrsqrt.pop %v3460
        %v3462 = vmul.f32 %v3454, %v3461
        %v3463 = vlaneseq
        %v3464 = vshrl.u32 %v3463, 7
        %v3465 = vsub.s32 6, %v3464
        %v3466 = vrot.slane %v2021, %v3465
        %v3467 = vmul.f32 %v3462, %v3466
        %v3468 = vlaneseq
        %v3469 = vshrl.u32 %v3468, 7
        %v3470 = vsub.s32 7, %v3469
        %v3471 = vrot.slane %v2021, %v3470
        %v3472 = vadd.f32 %v3467, %v3471
        %v3473 = vld [vmem:[%s5] sm:$0xf]
        %v3474 = vld [vmem:[%s5 + $0x4] sm:$0xf]
        %v3475 = vld [vmem:[%s5 + $0x8] sm:$0xf]
        %v3476 = vld [vmem:[%s5 + $0xc] sm:$0xf]
        %v3477 = vld [vmem:[%s5 + $0x10] sm:$0xf]
        %v3478 = vld [vmem:[%s5 + $0x14] sm:$0xf]
        %v3479 = vld [vmem:[%s5 + $0x18] sm:$0xf]
        %v3480 = vld [vmem:[%s5 + $0x1c] sm:$0xf]
        %v3481 = vpack.c.bf16 %v3472, %v3472
        %v3490 = vunpack.c.l.b16 %v3473
        %v3491 = vunpack.c.l.b16 %v3474
        %v3492 = vunpack.c.l.b16 %v3475
        %v3493 = vunpack.c.l.b16 %v3476
        %v3494 = vunpack.c.l.b16 %v3477
        %v3495 = vunpack.c.l.b16 %v3478
        %v3496 = vunpack.c.l.b16 %v3479
        %v3497 = vunpack.c.l.b16 %v3480
        %v3498 = vpack.c.b16 %v3491, %v3490
        %v3499 = vpack.c.b16 %v3493, %v3492
        %v3500 = vpack.c.b16 %v3495, %v3494
        %v3501 = vpack.c.b16 %v3497, %v3496
        %v3507 = vrot.slane %v532, 2
        %v3510 = vsel %vm533, %v3481, 0
        %3512 = vmatprep.subr.bf16.mxu0 0
        %3513 = vmatpush1.bf16.msra.mxu0 0
        %3514 = vmatprep.subr.bf16.mxu0 0
        %3515 = vmatpush1.bf16.msra.mxu0 0
        %3516 = vmatprep.subr.bf16.mxu0 0
        %3517 = vmatpush1.bf16.msra.mxu0 0
        %3518 = vmatprep.subr.bf16.mxu0 0
        %3519 = vmatpush1.bf16.msra.mxu0 0
        %3520 = vmatprep.subr.bf16.mxu0 0
        %3521 = vmatpush1.bf16.msra.mxu0 %v3501
        %3522 = vmatprep.subr.bf16.mxu0 0
        %3523 = vmatpush1.bf16.msra.mxu0 %v3500
        %3524 = vmatprep.subr.bf16.mxu0 0
        %3525 = vmatpush1.bf16.msra.mxu0 %v3499
        %3526 = vmatprep.subr.bf16.mxu0 0
        %3527 = vmatpush1.bf16.msra.mxu0 %v3498
        %3528 = vmatprep.subr.bf16.mxu0 0
        %3529 = vmatpush2.bf16.msra.mxu0 0
        %3530 = vmatprep.subr.bf16.mxu0 0
        %3531 = vmatpush2.bf16.msra.mxu0 0
        %3532 = vmatprep.subr.bf16.mxu0 0
        %3533 = vmatpush2.bf16.msra.mxu0 0
        %3534 = vmatprep.subr.bf16.mxu0 0
        %3535 = vmatpush2.bf16.msra.mxu0 0
        %3536 = vmatprep.subr.bf16.mxu0 0
        %3537 = vmatpush2.bf16.msra.mxu0 0
        %3538 = vmatprep.subr.bf16.mxu0 0
        %3539 = vmatpush2.bf16.msra.mxu0 0
        %3540 = vmatprep.subr.bf16.mxu0 0
        %3541 = vmatpush2.bf16.msra.mxu0 0
        %3542 = vmatprep.subr.bf16.mxu0 0
        %3543 = vmatpush2.bf16.msra.mxu0 0
        %3544 = vmatprep.mubr.bf16.mxu0 0
        %3545 = vmatmul.mubr.bf16.gmra.mxu0 %v3510
        %v3546 = vpop.f32.mrf.mxu0
        %v3547 = vadd.f32 %v3507, %v3546
        %v3548 = vpop.f32.mrf.mxu0
        %v3549 = vpop.f32.mrf.mxu0
        %v3550 = vpop.f32.mrf.mxu0
        %3551 = vdwg.mxu0
        %v3552 = vmax.f32 %v3547, 0.0
        %v3553 = vld [vmem:[%s6] sm:$0xf]
        %v3554 = vld [vmem:[%s6 + $0x4] sm:$0xf]
        %v3555 = vld [vmem:[%s6 + $0x8] sm:$0xf]
        %v3556 = vld [vmem:[%s6 + $0xc] sm:$0xf]
        %v3557 = vld [vmem:[%s6 + $0x10] sm:$0xf]
        %v3558 = vld [vmem:[%s6 + $0x14] sm:$0xf]
        %v3559 = vld [vmem:[%s6 + $0x18] sm:$0xf]
        %v3560 = vld [vmem:[%s6 + $0x1c] sm:$0xf]
        %v3561 = vpack.c.bf16 %v3552, %v3552
        %v3570 = vunpack.c.l.b16 %v3553
        %v3571 = vunpack.c.l.b16 %v3554
        %v3572 = vunpack.c.l.b16 %v3555
        %v3573 = vunpack.c.l.b16 %v3556
        %v3574 = vunpack.c.l.b16 %v3557
        %v3575 = vunpack.c.l.b16 %v3558
        %v3576 = vunpack.c.l.b16 %v3559
        %v3577 = vunpack.c.l.b16 %v3560
        %v3578 = vpack.c.b16 %v3571, %v3570
        %v3579 = vpack.c.b16 %v3573, %v3572
        %v3580 = vpack.c.b16 %v3575, %v3574
        %v3581 = vpack.c.b16 %v3577, %v3576
        %v3586 = vrot.slane %v532, 3
        %v3589 = vsel %vm533, %v3561, 0
        %3591 = vmatprep.subr.bf16.mxu0 0
        %3592 = vmatpush1.bf16.msra.mxu0 0
        %3593 = vmatprep.subr.bf16.mxu0 0
        %3594 = vmatpush1.bf16.msra.mxu0 0
        %3595 = vmatprep.subr.bf16.mxu0 0
        %3596 = vmatpush1.bf16.msra.mxu0 0
        %3597 = vmatprep.subr.bf16.mxu0 0
        %3598 = vmatpush1.bf16.msra.mxu0 0
        %3599 = vmatprep.subr.bf16.mxu0 0
        %3600 = vmatpush1.bf16.msra.mxu0 %v3581
        %3601 = vmatprep.subr.bf16.mxu0 0
        %3602 = vmatpush1.bf16.msra.mxu0 %v3580
        %3603 = vmatprep.subr.bf16.mxu0 0
        %3604 = vmatpush1.bf16.msra.mxu0 %v3579
        %3605 = vmatprep.subr.bf16.mxu0 0
        %3606 = vmatpush1.bf16.msra.mxu0 %v3578
        %3607 = vmatprep.subr.bf16.mxu0 0
        %3608 = vmatpush2.bf16.msra.mxu0 0
        %3609 = vmatprep.subr.bf16.mxu0 0
        %3610 = vmatpush2.bf16.msra.mxu0 0
        %3611 = vmatprep.subr.bf16.mxu0 0
        %3612 = vmatpush2.bf16.msra.mxu0 0
        %3613 = vmatprep.subr.bf16.mxu0 0
        %3614 = vmatpush2.bf16.msra.mxu0 0
        %3615 = vmatprep.subr.bf16.mxu0 0
        %3616 = vmatpush2.bf16.msra.mxu0 0
        %3617 = vmatprep.subr.bf16.mxu0 0
        %3618 = vmatpush2.bf16.msra.mxu0 0
        %3619 = vmatprep.subr.bf16.mxu0 0
        %3620 = vmatpush2.bf16.msra.mxu0 0
        %3621 = vmatprep.subr.bf16.mxu0 0
        %3622 = vmatpush2.bf16.msra.mxu0 0
        %3623 = vmatprep.mubr.bf16.mxu0 0
        %3624 = vmatmul.mubr.bf16.gmra.mxu0 %v3589
        %v3625 = vpop.f32.mrf.mxu0
        %v3626 = vadd.f32 %v3586, %v3625
        %v3627 = vpop.f32.mrf.mxu0
        %v3628 = vpop.f32.mrf.mxu0
        %v3629 = vpop.f32.mrf.mxu0
        %3630 = vdwg.mxu0
        %vm3631 = vcmask 16384
        %3632 = vst.msk [vmem:[%s427] sm:$0x1] %vm3631, %v3626
        %s3633 = sand.u32 %s297, 1
        %s3634 = scalar_lea.sflag [#allocation4], %s3633
        %s3635 = sand.u32 %s297, 1
        %s3636 = scalar_lea.vmem [#allocation5], %s3635
        // Predicated region
        $region73: #{distilbert_class_forward.1} parent=67 // pred_check
          %p3637 = pneg %p307
        $region74: #{distilbert_class_forward.1} parent=67 // pred_check_branch
          %3639 = sbr.rel (%p3637) target = $region76
        $region75: #{distilbert_class_forward.1} parent=67 // pred_region
          %s3641 = ssub.s32 16, 16
          %3642 = vsyncadd %s3634, %s3641
          %s3643 = smul.addr %s27, 16
          %s3644 = scalar_lea.hbm %s12, %s3643
          %s3646 = sshll.u32 %s3636, 4
          %s3647 = int_to_ptr.vmem [resolvable:$true] %s3646
          %3649 = dma.vmem_to_hbm [thread:$0]  %s3647, 16, %s3644, %s3634
        $region76: #{distilbert_class_forward.1} parent=67 // pred_fallthru
          _
      $region68: #{distilbert_class_forward.1} parent=5 // pred_fallthru
        _
      %p3650 = scmp.le.s32.totalorder 2, %s22
      // Predicated region
      $region77: #{distilbert_class_forward.1} parent=5 // pred_check
        %p3651 = pneg %p3650
      $region78: #{distilbert_class_forward.1} parent=5 // pred_check_branch
        %3653 = sbr.rel (%p3651) target = $region80
      $region79: #{distilbert_class_forward.1} parent=5 // pred_region
        %s3654 = ssub.s32 %s22, 2
        // Predicated region
        $region81: #{distilbert_class_forward.1} parent=79 // pred_check
          %p3655 = pneg %p313
        $region82: #{distilbert_class_forward.1} parent=79 // pred_check_branch
          %3657 = sbr.rel (%p3655) target = $region84
        $region83: #{distilbert_class_forward.1} parent=79 // pred_region
          %s3658 = sand.u32 %s298, 1
          %s3659 = scalar_lea.sflag [#allocation4], %s3658
          %s3660 = sand.u32 %s298, 1
          %s3661 = scalar_lea.vmem [#allocation5], %s3660
          %3662 = dma.done %s3659, 16
        $region84: #{distilbert_class_forward.1} parent=79 // pred_fallthru
          _
      $region80: #{distilbert_class_forward.1} parent=5 // pred_fallthru
        _
    $region6: #{distilbert_class_forward.1} parent=1 // loop_footer
      %s26 = sadd.s32 1, %s22
    $region7: #{distilbert_class_forward.1} parent=1 // loop_footer_branch
      %21 = sbr.rel target = $region3
    $region8: #{distilbert_class_forward.1} parent=1 // loop_exit
      _
    %3663 = vsyncpa [#allocation3], 1
    %s3664 = scalar_lea.sflag [#allocation3], 1
    %3665 = vsyncpa %s3664, 1
    %3666 = vsyncpa [#allocation4], 1
    %s3667 = scalar_lea.sflag [#allocation4], 1
    %3668 = vsyncpa %s3667, 1

</llo_original>
